<compile_context>
chip_gen: v6e
topology: v6e:2x2x1
jax: 0.10.0
libtpu: 0.0.40
codegen_flags: <defaults>
</compile_context>

<pallas_src>
import jax
import jax.numpy as jnp
from jax.experimental import pallas as pl
from jax.experimental.pallas import tpu as pltpu


# ----------------------------------------------------------------------------
# Pallas kernels: lane-dense (Cout, K) @ (K, M) matmuls, bf16 in, f32 acc,
# bf16 (or f32 for the final stage) stores.
# ----------------------------------------------------------------------------
def _mm_kernel(a_ref, b_ref, o_ref):
    acc = jnp.dot(a_ref[...], b_ref[...], preferred_element_type=jnp.float32)
    o_ref[...] = acc.astype(o_ref.dtype)


def _mm_bias_kernel(a_ref, b_ref, bias_ref, o_ref):
    acc = (jnp.dot(a_ref[...], b_ref[...], preferred_element_type=jnp.float32)
           + bias_ref[...])
    o_ref[...] = acc.astype(o_ref.dtype)


def _mm2_kernel(a1_ref, b1_ref, a2_ref, b2_ref, o_ref):
    # fused "concat + 1x1 conv":  W1 @ cur + W2 @ skip  (no HBM concat)
    acc = (jnp.dot(a1_ref[...], b1_ref[...], preferred_element_type=jnp.float32)
           + jnp.dot(a2_ref[...], b2_ref[...], preferred_element_type=jnp.float32))
    o_ref[...] = acc.astype(o_ref.dtype)


def _proj_hamilton_kernel(a_ref, b_ref, bias_ref, o_ref):
    # proj conv matmul (8, K) @ (K, tm) + bias, then the hamilton product of
    # rows 0:4 (Q1) with rows 4:8 (Q2).  Only the 3 vector components are
    # needed downstream (PyTorch: out_quat[:, 1:]); store them directly
    # (no concat of per-row slabs).
    r = (jnp.dot(a_ref[...], b_ref[...], preferred_element_type=jnp.float32)
         + bias_ref[...])
    w1, x1, y1, z1 = r[0:1, :], r[1:2, :], r[2:3, :], r[3:4, :]
    w2, x2, y2, z2 = r[4:5, :], r[5:6, :], r[6:7, :], r[7:8, :]
    o_ref[0:1, :] = w1 * x2 + x1 * w2 + y1 * z2 - z1 * y2
    o_ref[1:2, :] = w1 * y2 - x1 * z2 + y1 * w2 + z1 * x2
    o_ref[2:3, :] = w1 * z2 + x1 * y2 - y1 * x2 + z1 * w2


# ----------------------------------------------------------------------------
# Tiling
# ----------------------------------------------------------------------------
_VMEM_BUDGET = 20 * 1024 * 1024          # double-buffered working set cap
_VMEM_LIMIT = 32 * 1024 * 1024           # safe on v5e/v6e (128 MiB) and v7x (64 MiB)
_TILE_CANDIDATES = (16384, 8192, 4096, 2048, 1024, 512, 256, 128)


def _pick_tile(M, K, cout, out_bytes=2):
    """Largest lane-dense spatial tile whose double-buffered tiles fit a
    conservative VMEM budget (v7x-safe), preferring >= 2 grid steps so the
    second TensorCore on v7x is not idle."""
    if M <= 128:
        return M
    for tm in _TILE_CANDIDATES:
        if tm >= M:
            continue  # keep >= 2 grid steps
        need = 2 * tm * (K * 2 + cout * out_bytes) + K * cout * 2
        if need <= _VMEM_BUDGET:
            return tm
    return 128


def _compiler_params():
    return pltpu.CompilerParams(dimension_semantics=("parallel",),
                                vmem_limit_bytes=_VMEM_LIMIT)


# ----------------------------------------------------------------------------
# Matmul wrappers (operands are expected to already be bf16; no wrapper casts
# over the large (K, M) arrays).
# ----------------------------------------------------------------------------
def pallas_matmul(a, b, bias=None, out_dtype=jnp.bfloat16):
    """a: (Cm, K) bf16, b: (K, M) bf16, bias: (Cm,) f32 or None -> (Cm, M)."""
    Cm, K = a.shape
    K2, M = b.shape
    assert K == K2, (K, K2)
    tm = _pick_tile(M, K, Cm, jnp.dtype(out_dtype).itemsize)
    grid = (pl.cdiv(M, tm),)
    if bias is None:
        return pl.pallas_call(
            _mm_kernel,
            out_shape=jax.ShapeDtypeStruct((Cm, M), out_dtype),
            grid=grid,
            in_specs=[pl.BlockSpec((Cm, K), lambda i: (0, 0)),
                      pl.BlockSpec((K, tm), lambda i: (0, i))],
            out_specs=pl.BlockSpec((Cm, tm), lambda i: (0, i)),
            compiler_params=_compiler_params(),
        )(a, b)
    bias2d = bias.reshape(Cm, 1).astype(jnp.float32)
    return pl.pallas_call(
        _mm_bias_kernel,
        out_shape=jax.ShapeDtypeStruct((Cm, M), out_dtype),
        grid=grid,
        in_specs=[pl.BlockSpec((Cm, K), lambda i: (0, 0)),
                  pl.BlockSpec((K, tm), lambda i: (0, i)),
                  pl.BlockSpec((Cm, 1), lambda i: (0, 0))],
        out_specs=pl.BlockSpec((Cm, tm), lambda i: (0, i)),
        compiler_params=_compiler_params(),
    )(a, b, bias2d)


def pallas_matmul2(a1, b1, a2, b2, out_dtype=jnp.bfloat16):
    """Accumulate two matmuls (a1 @ b1 + a2 @ b2) in one kernel (no concat)."""
    Cm, K1 = a1.shape
    _, M = b1.shape
    Cm2, K2 = a2.shape
    assert Cm == Cm2 and b2.shape == (K2, M)
    tm = _pick_tile(M, K1 + K2, Cm, jnp.dtype(out_dtype).itemsize)
    grid = (pl.cdiv(M, tm),)
    return pl.pallas_call(
        _mm2_kernel,
        out_shape=jax.ShapeDtypeStruct((Cm, M), out_dtype),
        grid=grid,
        in_specs=[pl.BlockSpec((Cm, K1), lambda i: (0, 0)),
                  pl.BlockSpec((K1, tm), lambda i: (0, i)),
                  pl.BlockSpec((Cm, K2), lambda i: (0, 0)),
                  pl.BlockSpec((K2, tm), lambda i: (0, i))],
        out_specs=pl.BlockSpec((Cm, tm), lambda i: (0, i)),
        compiler_params=_compiler_params(),
    )(a1, b1, a2, b2)


def pallas_proj_hamilton(a, b, bias):
    """Fused proj conv + hamilton product: (8,K)@(K,M)+bias -> (3, M) f32."""
    Cm, K = a.shape
    assert Cm == 8
    _, M = b.shape
    tm = _pick_tile(M, K, 8 + 3, out_bytes=4)
    grid = (pl.cdiv(M, tm),)
    bias2d = bias.reshape(8, 1).astype(jnp.float32)
    return pl.pallas_call(
        _proj_hamilton_kernel,
        out_shape=jax.ShapeDtypeStruct((3, M), jnp.float32),
        grid=grid,
        in_specs=[pl.BlockSpec((8, K), lambda i: (0, 0)),
                  pl.BlockSpec((K, tm), lambda i: (0, i)),
                  pl.BlockSpec((8, 1), lambda i: (0, 0))],
        out_specs=pl.BlockSpec((3, tm), lambda i: (0, i)),
        compiler_params=_compiler_params(),
    )(a, b, bias2d)


# ----------------------------------------------------------------------------
# Conv helpers (CNHW layout glue; matmul hot path in Pallas)
# ----------------------------------------------------------------------------
def _im2col_cnhw(x_c, kh, kw, stride, pad):
    """x_c: (C, N, H, W) bf16 -> ((C*kh*kw, N*Ho*Wo) bf16, Ho, Wo).
    Built directly in bf16 so pad/stack/reshape fuse into one producer.
    TODO(synk): full in-kernel im2col would avoid the kh*kw column expansion."""
    C, N, H, W = x_c.shape
    xp = jnp.pad(x_c, ((0, 0), (0, 0), (pad, pad), (pad, pad)))
    Ho = (H + 2 * pad - kh) // stride + 1
    Wo = (W + 2 * pad - kw) // stride + 1
    taps = [xp[:, :, i:i + stride * Ho:stride, j:j + stride * Wo:stride]
            for i in range(kh) for j in range(kw)]
    # ordering (cin outer, (i, j) inner) matches w.reshape(Cout, Cin*kh*kw)
    col = jnp.stack(taps, axis=1).reshape(C * kh * kw, N * Ho * Wo)
    return col, Ho, Wo


def conv2d_cnhw(x_c, w, b=None, stride=1, pad=0):
    """x_c: (Cin,N,H,W) bf16, w: (Cout,Cin,kh,kw) f32, b: (Cout,)|None -> bf16."""
    Cin, N, H, W = x_c.shape
    Cout, Cin2, kh, kw = w.shape
    assert Cin == Cin2
    col, Ho, Wo = _im2col_cnhw(x_c, kh, kw, stride, pad)
    K = Cin * kh * kw
    Kp = -(-K // 8) * 8                      # pad K to a sublane multiple
    w2d = w.reshape(Cout, K)
    if Kp != K:
        w2d = jnp.pad(w2d, ((0, 0), (0, Kp - K)))
        col = jnp.pad(col, ((0, Kp - K), (0, 0)))
    out = pallas_matmul(w2d.astype(jnp.bfloat16), col, b)
    return out.reshape(Cout, N, Ho, Wo)


def conv_transpose2d_2x2_s2_cnhw(x_c, w, b=None):
    """nn.ConvTranspose2d(Cin, Cout, kernel=2, stride=2).
    x_c: (Cin, N, H, W) bf16, w: (Cin, Cout, 2, 2) -> (Cout, N, 2H, 2W) bf16."""
    Cin, N, H, W = x_c.shape
    Cin2, Cout, kh, kw = w.shape
    assert Cin == Cin2 and kh == 2 and kw == 2
    # rows ordered (cout, i, j); bias fused into the kernel, repeated per tap
    # (valid because the k=2/s=2 taps never overlap).
    a = w.transpose(1, 2, 3, 0).reshape(Cout * 4, Cin).astype(jnp.bfloat16)
    bias_rows = None if b is None else jnp.repeat(b, 4)
    out = pallas_matmul(a, x_c.reshape(Cin, N * H * W), bias_rows)
    # tap/spatial interleave now runs on bf16 data (half the shuffle traffic).
    # TODO(synk): fuse the 2x interleave into the kernel (bf16-pair bitcast
    # W interleave + alternating-row H stores) to remove this HBM shuffle.
    out = out.reshape(Cout, 2, 2, N, H, W).transpose(0, 3, 4, 1, 5, 2)
    return out.reshape(Cout, N, H * 2, W * 2)


def fuse_conv_cnhw(cur_c, skip_c, w):
    """1x1 fuse conv on concat([cur, skip]) without materializing the concat."""
    Cout, C2 = w.shape[0], w.shape[1]
    C = C2 // 2
    Cc, N, H, W = cur_c.shape
    assert Cc == C
    w1 = w[:, :C, 0, 0].astype(jnp.bfloat16)
    w2 = w[:, C:, 0, 0].astype(jnp.bfloat16)
    out = pallas_matmul2(w1, cur_c.reshape(C, N * H * W),
                         w2, skip_c.reshape(C, N * H * W))
    return out.reshape(Cout, N, H, W)


# ----------------------------------------------------------------------------
# Model: parameters + forward
# ----------------------------------------------------------------------------
N_FEAT = 16
NUM_BLOCKS = [2, 2, 2]
NUM_LEVELS = len(NUM_BLOCKS)
IN_CH_UNET = 8 + 3          # Q1(4) + Q2(4) + conditioning(3)
OUT_CH_UNET = 8


def init_params(key):
    p = {}
    ks = iter(jax.random.split(key, 64))

    def nrm(shape, fan):
        return jax.random.normal(next(ks), shape, jnp.float32) * (2.0 / fan) ** 0.5

    # TODO(synk): real Decomp is a pretrained external module (checkpoint load);
    # replaced by deterministic 1x1-conv projections producing Q1/Q2 (4ch each).
    p["decomp_wq1"] = nrm((4, 3, 1, 1), 3)
    p["decomp_wq2"] = nrm((4, 3, 1, 1), 3)

    # first_conv: Conv2d(11, n_feat, 3, 1, 1, bias=True), kaiming fan_out
    p["first_conv_w"] = nrm((N_FEAT, IN_CH_UNET, 3, 3), N_FEAT * 9)
    p["first_conv_b"] = jnp.zeros((N_FEAT,), jnp.float32)

    curr = N_FEAT
    for i in range(NUM_LEVELS - 1):
        # conv_down: Conv2d(c, 2c, 4, 2, 1, bias=False)
        p[f"down{i}_w"] = nrm((2 * curr, curr, 4, 4), curr * 16)
        curr *= 2

    for i in range(NUM_LEVELS - 1):
        # deconv_up: ConvTranspose2d(curr, curr//2, k=2, s=2)  (bias=True)
        p[f"up{i}_w"] = nrm((curr, curr // 2, 2, 2), curr * 4)
        p[f"up{i}_b"] = jnp.zeros((curr // 2,), jnp.float32)
        # fuse: Conv2d(curr, curr//2, 1, 1, bias=False)
        p[f"fuse{i}_w"] = nrm((curr // 2, curr, 1, 1), curr)
        curr //= 2

    # proj: Conv2d(n_feat, 8, 3, 1, 1, bias=True), bias zero-init
    p["proj_w"] = nrm((OUT_CH_UNET, N_FEAT, 3, 3), N_FEAT * 9)
    p["proj_b"] = jnp.zeros((OUT_CH_UNET,), jnp.float32)
    return p


def forward(params, x):
    """x: (N, 6, H, W) f32 -> [x, final_out (N, 3, H, W) f32]."""
    N, _, H, W = x.shape
    # one cheap transpose+cast to bf16 CNHW; everything downstream stays bf16
    x_c = x.transpose(1, 0, 2, 3).astype(jnp.bfloat16)       # (6, N, H, W)

    # decomp stand-in (1x1) folded into first_conv by weight composition:
    #   first_conv(cat([Q1, Q2, cond])) == conv3x3(x, w_eff) + b, with
    #   w_eff[:, :3] = first_conv_w[:, :8] . wq  and  w_eff[:, 3:] = first_conv_w[:, 8:]
    # TODO(synk): self.decomp(img) uses unavailable pretrained weights; this is
    # a deterministic 1x1-projection stand-in producing [Q1; Q2].
    wq = jnp.concatenate([params["decomp_wq1"],
                          params["decomp_wq2"]], axis=0)[:, :, 0, 0]   # (8, 3)
    w_fc = params["first_conv_w"]                                      # (16, 11, 3, 3)
    w_img = jnp.einsum("okhw,kc->ochw", w_fc[:, :8], wq)               # (16, 3, 3, 3)
    w_eff = jnp.concatenate([w_img, w_fc[:, 8:]], axis=1)              # (16, 6, 3, 3)
    fea = conv2d_cnhw(x_c, w_eff, params["first_conv_b"], stride=1, pad=1)

    skips = []
    cur = fea
    for i in range(NUM_LEVELS - 1):
        # TODO(synk): encoders[i] = Sequential(VSSBlock x num_blocks[i]);
        # VSSBlock source not provided -> identity.
        skips.append(cur)
        cur = conv2d_cnhw(cur, params[f"down{i}_w"], None, stride=2, pad=1)

    # TODO(synk): bottleneck VSSBlocks (source not provided) -> identity.

    for i in range(NUM_LEVELS - 1):
        skip = skips[NUM_LEVELS - 2 - i]
        cur = conv_transpose2d_2x2_s2_cnhw(cur, params[f"up{i}_w"],
                                           params[f"up{i}_b"])
        cur = fuse_conv_cnhw(cur, skip, params[f"fuse{i}_w"])
        # TODO(synk): decoder 'block' VSSBlocks (source not provided) -> identity.

    # proj (3x3, bias) + last_act (Identity) + hamilton_product, fused.
    # The kernel emits only the 3 vector components (== PyTorch out_quat[:, 1:]).
    Cc = cur.shape[0]
    col, Ho, Wo = _im2col_cnhw(cur, 3, 3, 1, 1)
    xyz = pallas_proj_hamilton(
        params["proj_w"].reshape(OUT_CH_UNET, Cc * 9).astype(jnp.bfloat16),
        col, params["proj_b"])                                # (3, N*H*W) f32
    final_out = xyz.reshape(3, N, Ho, Wo).transpose(1, 0, 2, 3)  # (N, 3, H, W)
    return [x, final_out]


# ----------------------------------------------------------------------------
if __name__ == "__main__":
    key = jax.random.PRNGKey(0)
    kx, kp = jax.random.split(key)

    B, C, H, W = 2, 6, 16, 16
    x = jax.random.normal(kx, (B, C, H, W), jnp.float32)
    params = init_params(kp)

    fwd = jax.jit(forward)
    x_out, final_out = fwd(params, x)
    jax.block_until_ready(final_out)

    assert x_out.shape == (B, C, H, W)
    assert final_out.shape == (B, 3, H, W)
    assert final_out.dtype == jnp.float32
    assert bool(jnp.all(jnp.isfinite(final_out)))
    print("KERNEL_OK")
</pallas_src>

<mosaic_0001>
module attributes {stable_mosaic.version = 11 : i64} {
  func.func @_mm_bias_kernel(%arg0: i32, %arg1: memref<16x56xbf16, #tpu.memory_space<vmem>>, %arg2: memref<56x256xbf16, #tpu.memory_space<vmem>>, %arg3: memref<16x1xf32, #tpu.memory_space<vmem>>, %arg4: memref<16x256xbf16, #tpu.memory_space<vmem>>) attributes {dimension_semantics = [#tpu.dimension_semantics<parallel>], iteration_bounds = array<i64: 2>, scalar_prefetch = 0 : i64, scratch_operands = 0 : i64, tpu.core_type = #tpu.core_type<tc>, window_params = [{pipeline_mode = #tpu.pipeline_mode<synchronous>, transform_indices = @transform_0, window_bounds = array<i64: 16, 56>}, {transform_indices = @transform_1, window_bounds = array<i64: 56, 256>}, {pipeline_mode = #tpu.pipeline_mode<synchronous>, transform_indices = @transform_2, window_bounds = array<i64: 16, 1>}, {transform_indices = @transform_3, window_bounds = array<i64: 16, 256>}]} {
    %c0 = arith.constant 0 : index
    %c0_0 = arith.constant 0 : index
    %0 = vector.load %arg1[%c0, %c0_0] : memref<16x56xbf16, #tpu.memory_space<vmem>>, vector<16x56xbf16>
    %c0_1 = arith.constant 0 : index
    %c0_2 = arith.constant 0 : index
    %1 = vector.load %arg2[%c0_1, %c0_2] : memref<56x256xbf16, #tpu.memory_space<vmem>>, vector<56x256xbf16>
    %cst = arith.constant dense<0.000000e+00> : vector<16x256xf32>
    %2 = tpu.matmul %0, %1, %cst {dimension_numbers = #tpu.dot_dimension_numbers<[1], [0], [0], [1], [0, 0, 1, 1], [], []>} : vector<16x56xbf16>, vector<56x256xbf16>, vector<16x256xf32> -> vector<16x256xf32>
    %c0_3 = arith.constant 0 : index
    %c0_4 = arith.constant 0 : index
    %3 = vector.load %arg3[%c0_3, %c0_4] : memref<16x1xf32, #tpu.memory_space<vmem>>, vector<16x1xf32>
    %4 = vector.broadcast %3 : vector<16x1xf32> to vector<16x256xf32>
    %5 = arith.addf %2, %4 : vector<16x256xf32>
    %6 = arith.truncf %5 : vector<16x256xf32> to vector<16x256xbf16>
    %c0_5 = arith.constant 0 : index
    %c0_6 = arith.constant 0 : index
    %7 = vector.load %arg4[%c0_5, %c0_6] : memref<16x256xbf16, #tpu.memory_space<vmem>>, vector<16x256xbf16>
    tpu.vector_store %arg4[%c0_5, %c0_6], %6 {strides = array<i32>} : memref<16x256xbf16, #tpu.memory_space<vmem>>, vector<16x256xbf16>,
    return
  }
  func.func @transform_0(%arg0: i32) -> (i32, i32) {
    %c0_i32 = arith.constant 0 : i32
    %c0_i32_0 = arith.constant 0 : i32
    %c0_i32_1 = arith.constant 0 : i32
    return %c0_i32, %c0_i32_0 : i32, i32
  }
  func.func @transform_1(%arg0: i32) -> (i32, i32) {
    %c0_i32 = arith.constant 0 : i32
    %c0_i32_0 = arith.constant 0 : i32
    return %c0_i32, %arg0 : i32, i32
  }
  func.func @transform_2(%arg0: i32) -> (i32, i32) {
    %c0_i32 = arith.constant 0 : i32
    %c0_i32_0 = arith.constant 0 : i32
    %c0_i32_1 = arith.constant 0 : i32
    return %c0_i32, %c0_i32_0 : i32, i32
  }
  func.func @transform_3(%arg0: i32) -> (i32, i32) {
    %c0_i32 = arith.constant 0 : i32
    %c0_i32_0 = arith.constant 0 : i32
    return %c0_i32, %arg0 : i32, i32
  }
}

module attributes {stable_mosaic.version = 11 : i64} {
  func.func @_mm_kernel(%arg0: i32, %arg1: memref<32x256xbf16, #tpu.memory_space<vmem>>, %arg2: memref<256x128xbf16, #tpu.memory_space<vmem>>, %arg3: memref<32x128xbf16, #tpu.memory_space<vmem>>) attributes {dimension_semantics = [#tpu.dimension_semantics<parallel>], iteration_bounds = array<i64: 1>, scalar_prefetch = 0 : i64, scratch_operands = 0 : i64, tpu.core_type = #tpu.core_type<tc>, window_params = [{pipeline_mode = #tpu.pipeline_mode<synchronous>, transform_indices = @transform_0, window_bounds = array<i64: 32, 256>}, {transform_indices = @transform_1, window_bounds = array<i64: 256, 128>}, {transform_indices = @transform_2, window_bounds = array<i64: 32, 128>}]} {
    %c0 = arith.constant 0 : index
    %c0_0 = arith.constant 0 : index
    %0 = vector.load %arg1[%c0, %c0_0] : memref<32x256xbf16, #tpu.memory_space<vmem>>, vector<32x256xbf16>
    %c0_1 = arith.constant 0 : index
    %c0_2 = arith.constant 0 : index
    %1 = vector.load %arg2[%c0_1, %c0_2] : memref<256x128xbf16, #tpu.memory_space<vmem>>, vector<256x128xbf16>
    %cst = arith.constant dense<0.000000e+00> : vector<32x128xf32>
    %2 = tpu.matmul %0, %1, %cst {dimension_numbers = #tpu.dot_dimension_numbers<[1], [0], [0], [1], [0, 0, 1, 1], [], []>} : vector<32x256xbf16>, vector<256x128xbf16>, vector<32x128xf32> -> vector<32x128xf32>
    %3 = arith.truncf %2 : vector<32x128xf32> to vector<32x128xbf16>
    %c0_3 = arith.constant 0 : index
    %c0_4 = arith.constant 0 : index
    %4 = vector.load %arg3[%c0_3, %c0_4] : memref<32x128xbf16, #tpu.memory_space<vmem>>, vector<32x128xbf16>
    tpu.vector_store %arg3[%c0_3, %c0_4], %3 {strides = array<i32>} : memref<32x128xbf16, #tpu.memory_space<vmem>>, vector<32x128xbf16>,
    return
  }
  func.func @transform_0(%arg0: i32) -> (i32, i32) {
    %c0_i32 = arith.constant 0 : i32
    %c0_i32_0 = arith.constant 0 : i32
    %c0_i32_1 = arith.constant 0 : i32
    return %c0_i32, %c0_i32_0 : i32, i32
  }
  func.func @transform_1(%arg0: i32) -> (i32, i32) {
    %c0_i32 = arith.constant 0 : i32
    %c0_i32_0 = arith.constant 0 : i32
    return %c0_i32, %arg0 : i32, i32
  }
  func.func @transform_2(%arg0: i32) -> (i32, i32) {
    %c0_i32 = arith.constant 0 : i32
    %c0_i32_0 = arith.constant 0 : i32
    return %c0_i32, %arg0 : i32, i32
  }
}

module attributes {stable_mosaic.version = 11 : i64} {
  func.func @_mm_kernel(%arg0: i32, %arg1: memref<64x512xbf16, #tpu.memory_space<vmem>>, %arg2: memref<512x32xbf16, #tpu.memory_space<vmem>>, %arg3: memref<64x32xbf16, #tpu.memory_space<vmem>>) attributes {dimension_semantics = [#tpu.dimension_semantics<parallel>], iteration_bounds = array<i64: 1>, scalar_prefetch = 0 : i64, scratch_operands = 0 : i64, tpu.core_type = #tpu.core_type<tc>, window_params = [{pipeline_mode = #tpu.pipeline_mode<synchronous>, transform_indices = @transform_0, window_bounds = array<i64: 64, 512>}, {transform_indices = @transform_1, window_bounds = array<i64: 512, 32>}, {transform_indices = @transform_2, window_bounds = array<i64: 64, 32>}]} {
    %c0 = arith.constant 0 : index
    %c0_0 = arith.constant 0 : index
    %0 = vector.load %arg1[%c0, %c0_0] : memref<64x512xbf16, #tpu.memory_space<vmem>>, vector<64x512xbf16>
    %c0_1 = arith.constant 0 : index
    %c0_2 = arith.constant 0 : index
    %1 = vector.load %arg2[%c0_1, %c0_2] : memref<512x32xbf16, #tpu.memory_space<vmem>>, vector<512x32xbf16>
    %cst = arith.constant dense<0.000000e+00> : vector<64x32xf32>
    %2 = tpu.matmul %0, %1, %cst {dimension_numbers = #tpu.dot_dimension_numbers<[1], [0], [0], [1], [0, 0, 1, 1], [], []>} : vector<64x512xbf16>, vector<512x32xbf16>, vector<64x32xf32> -> vector<64x32xf32>
    %3 = arith.truncf %2 : vector<64x32xf32> to vector<64x32xbf16>
    %c0_3 = arith.constant 0 : index
    %c0_4 = arith.constant 0 : index
    %4 = vector.load %arg3[%c0_3, %c0_4] : memref<64x32xbf16, #tpu.memory_space<vmem>>, vector<64x32xbf16>
    tpu.vector_store %arg3[%c0_3, %c0_4], %3 {strides = array<i32>} : memref<64x32xbf16, #tpu.memory_space<vmem>>, vector<64x32xbf16>,
    return
  }
  func.func @transform_0(%arg0: i32) -> (i32, i32) {
    %c0_i32 = arith.constant 0 : i32
    %c0_i32_0 = arith.constant 0 : i32
    %c0_i32_1 = arith.constant 0 : i32
    return %c0_i32, %c0_i32_0 : i32, i32
  }
  func.func @transform_1(%arg0: i32) -> (i32, i32) {
    %c0_i32 = arith.constant 0 : i32
    %c0_i32_0 = arith.constant 0 : i32
    return %c0_i32, %arg0 : i32, i32
  }
  func.func @transform_2(%arg0: i32) -> (i32, i32) {
    %c0_i32 = arith.constant 0 : i32
    %c0_i32_0 = arith.constant 0 : i32
    return %c0_i32, %arg0 : i32, i32
  }
}

module attributes {stable_mosaic.version = 11 : i64} {
  func.func @_mm_bias_kernel(%arg0: i32, %arg1: memref<128x64xbf16, #tpu.memory_space<vmem>>, %arg2: memref<64x32xbf16, #tpu.memory_space<vmem>>, %arg3: memref<128x1xf32, #tpu.memory_space<vmem>>, %arg4: memref<128x32xbf16, #tpu.memory_space<vmem>>) attributes {dimension_semantics = [#tpu.dimension_semantics<parallel>], iteration_bounds = array<i64: 1>, scalar_prefetch = 0 : i64, scratch_operands = 0 : i64, tpu.core_type = #tpu.core_type<tc>, window_params = [{pipeline_mode = #tpu.pipeline_mode<synchronous>, transform_indices = @transform_0, window_bounds = array<i64: 128, 64>}, {transform_indices = @transform_1, window_bounds = array<i64: 64, 32>}, {pipeline_mode = #tpu.pipeline_mode<synchronous>, transform_indices = @transform_2, window_bounds = array<i64: 128, 1>}, {transform_indices = @transform_3, window_bounds = array<i64: 128, 32>}]} {
    %c0 = arith.constant 0 : index
    %c0_0 = arith.constant 0 : index
    %0 = vector.load %arg1[%c0, %c0_0] : memref<128x64xbf16, #tpu.memory_space<vmem>>, vector<128x64xbf16>
    %c0_1 = arith.constant 0 : index
    %c0_2 = arith.constant 0 : index
    %1 = vector.load %arg2[%c0_1, %c0_2] : memref<64x32xbf16, #tpu.memory_space<vmem>>, vector<64x32xbf16>
    %cst = arith.constant dense<0.000000e+00> : vector<128x32xf32>
    %2 = tpu.matmul %0, %1, %cst {dimension_numbers = #tpu.dot_dimension_numbers<[1], [0], [0], [1], [0, 0, 1, 1], [], []>} : vector<128x64xbf16>, vector<64x32xbf16>, vector<128x32xf32> -> vector<128x32xf32>
    %c0_3 = arith.constant 0 : index
    %c0_4 = arith.constant 0 : index
    %3 = vector.load %arg3[%c0_3, %c0_4] : memref<128x1xf32, #tpu.memory_space<vmem>>, vector<128x1xf32>
    %4 = vector.broadcast %3 : vector<128x1xf32> to vector<128x32xf32>
    %5 = arith.addf %2, %4 : vector<128x32xf32>
    %6 = arith.truncf %5 : vector<128x32xf32> to vector<128x32xbf16>
    %c0_5 = arith.constant 0 : index
    %c0_6 = arith.constant 0 : index
    %7 = vector.load %arg4[%c0_5, %c0_6] : memref<128x32xbf16, #tpu.memory_space<vmem>>, vector<128x32xbf16>
    tpu.vector_store %arg4[%c0_5, %c0_6], %6 {strides = array<i32>} : memref<128x32xbf16, #tpu.memory_space<vmem>>, vector<128x32xbf16>,
    return
  }
  func.func @transform_0(%arg0: i32) -> (i32, i32) {
    %c0_i32 = arith.constant 0 : i32
    %c0_i32_0 = arith.constant 0 : i32
    %c0_i32_1 = arith.constant 0 : i32
    return %c0_i32, %c0_i32_0 : i32, i32
  }
  func.func @transform_1(%arg0: i32) -> (i32, i32) {
    %c0_i32 = arith.constant 0 : i32
    %c0_i32_0 = arith.constant 0 : i32
    return %c0_i32, %arg0 : i32, i32
  }
  func.func @transform_2(%arg0: i32) -> (i32, i32) {
    %c0_i32 = arith.constant 0 : i32
    %c0_i32_0 = arith.constant 0 : i32
    %c0_i32_1 = arith.constant 0 : i32
    return %c0_i32, %c0_i32_0 : i32, i32
  }
  func.func @transform_3(%arg0: i32) -> (i32, i32) {
    %c0_i32 = arith.constant 0 : i32
    %c0_i32_0 = arith.constant 0 : i32
    return %c0_i32, %arg0 : i32, i32
  }
}

module attributes {stable_mosaic.version = 11 : i64} {
  func.func @_mm2_kernel(%arg0: i32, %arg1: memref<32x32xbf16, #tpu.memory_space<vmem>>, %arg2: memref<32x128xbf16, #tpu.memory_space<vmem>>, %arg3: memref<32x32xbf16, #tpu.memory_space<vmem>>, %arg4: memref<32x128xbf16, #tpu.memory_space<vmem>>, %arg5: memref<32x128xbf16, #tpu.memory_space<vmem>>) attributes {dimension_semantics = [#tpu.dimension_semantics<parallel>], iteration_bounds = array<i64: 1>, scalar_prefetch = 0 : i64, scratch_operands = 0 : i64, tpu.core_type = #tpu.core_type<tc>, window_params = [{pipeline_mode = #tpu.pipeline_mode<synchronous>, transform_indices = @transform_0, window_bounds = array<i64: 32, 32>}, {transform_indices = @transform_1, window_bounds = array<i64: 32, 128>}, {pipeline_mode = #tpu.pipeline_mode<synchronous>, transform_indices = @transform_2, window_bounds = array<i64: 32, 32>}, {transform_indices = @transform_3, window_bounds = array<i64: 32, 128>}, {transform_indices = @transform_4, window_bounds = array<i64: 32, 128>}]} {
    %c0 = arith.constant 0 : index
    %c0_0 = arith.constant 0 : index
    %0 = vector.load %arg1[%c0, %c0_0] : memref<32x32xbf16, #tpu.memory_space<vmem>>, vector<32x32xbf16>
    %c0_1 = arith.constant 0 : index
    %c0_2 = arith.constant 0 : index
    %1 = vector.load %arg2[%c0_1, %c0_2] : memref<32x128xbf16, #tpu.memory_space<vmem>>, vector<32x128xbf16>
    %cst = arith.constant dense<0.000000e+00> : vector<32x128xf32>
    %2 = tpu.matmul %0, %1, %cst {dimension_numbers = #tpu.dot_dimension_numbers<[1], [0], [0], [1], [0, 0, 1, 1], [], []>} : vector<32x32xbf16>, vector<32x128xbf16>, vector<32x128xf32> -> vector<32x128xf32>
    %c0_3 = arith.constant 0 : index
    %c0_4 = arith.constant 0 : index
    %3 = vector.load %arg3[%c0_3, %c0_4] : memref<32x32xbf16, #tpu.memory_space<vmem>>, vector<32x32xbf16>
    %c0_5 = arith.constant 0 : index
    %c0_6 = arith.constant 0 : index
    %4 = vector.load %arg4[%c0_5, %c0_6] : memref<32x128xbf16, #tpu.memory_space<vmem>>, vector<32x128xbf16>
    %cst_7 = arith.constant dense<0.000000e+00> : vector<32x128xf32>
    %5 = tpu.matmul %3, %4, %cst_7 {dimension_numbers = #tpu.dot_dimension_numbers<[1], [0], [0], [1], [0, 0, 1, 1], [], []>} : vector<32x32xbf16>, vector<32x128xbf16>, vector<32x128xf32> -> vector<32x128xf32>
    %6 = arith.addf %2, %5 : vector<32x128xf32>
    %7 = arith.truncf %6 : vector<32x128xf32> to vector<32x128xbf16>
    %c0_8 = arith.constant 0 : index
    %c0_9 = arith.constant 0 : index
    %8 = vector.load %arg5[%c0_8, %c0_9] : memref<32x128xbf16, #tpu.memory_space<vmem>>, vector<32x128xbf16>
    tpu.vector_store %arg5[%c0_8, %c0_9], %7 {strides = array<i32>} : memref<32x128xbf16, #tpu.memory_space<vmem>>, vector<32x128xbf16>,
    return
  }
  func.func @transform_0(%arg0: i32) -> (i32, i32) {
    %c0_i32 = arith.constant 0 : i32
    %c0_i32_0 = arith.constant 0 : i32
    %c0_i32_1 = arith.constant 0 : i32
    return %c0_i32, %c0_i32_0 : i32, i32
  }
  func.func @transform_1(%arg0: i32) -> (i32, i32) {
    %c0_i32 = arith.constant 0 : i32
    %c0_i32_0 = arith.constant 0 : i32
    return %c0_i32, %arg0 : i32, i32
  }
  func.func @transform_2(%arg0: i32) -> (i32, i32) {
    %c0_i32 = arith.constant 0 : i32
    %c0_i32_0 = arith.constant 0 : i32
    %c0_i32_1 = arith.constant 0 : i32
    return %c0_i32, %c0_i32_0 : i32, i32
  }
  func.func @transform_3(%arg0: i32) -> (i32, i32) {
    %c0_i32 = arith.constant 0 : i32
    %c0_i32_0 = arith.constant 0 : i32
    return %c0_i32, %arg0 : i32, i32
  }
  func.func @transform_4(%arg0: i32) -> (i32, i32) {
    %c0_i32 = arith.constant 0 : i32
    %c0_i32_0 = arith.constant 0 : i32
    return %c0_i32, %arg0 : i32, i32
  }
}

module attributes {stable_mosaic.version = 11 : i64} {
  func.func @_mm_bias_kernel(%arg0: i32, %arg1: memref<64x32xbf16, #tpu.memory_space<vmem>>, %arg2: memref<32x128xbf16, #tpu.memory_space<vmem>>, %arg3: memref<64x1xf32, #tpu.memory_space<vmem>>, %arg4: memref<64x128xbf16, #tpu.memory_space<vmem>>) attributes {dimension_semantics = [#tpu.dimension_semantics<parallel>], iteration_bounds = array<i64: 1>, scalar_prefetch = 0 : i64, scratch_operands = 0 : i64, tpu.core_type = #tpu.core_type<tc>, window_params = [{pipeline_mode = #tpu.pipeline_mode<synchronous>, transform_indices = @transform_0, window_bounds = array<i64: 64, 32>}, {transform_indices = @transform_1, window_bounds = array<i64: 32, 128>}, {pipeline_mode = #tpu.pipeline_mode<synchronous>, transform_indices = @transform_2, window_bounds = array<i64: 64, 1>}, {transform_indices = @transform_3, window_bounds = array<i64: 64, 128>}]} {
    %c0 = arith.constant 0 : index
    %c0_0 = arith.constant 0 : index
    %0 = vector.load %arg1[%c0, %c0_0] : memref<64x32xbf16, #tpu.memory_space<vmem>>, vector<64x32xbf16>
    %c0_1 = arith.constant 0 : index
    %c0_2 = arith.constant 0 : index
    %1 = vector.load %arg2[%c0_1, %c0_2] : memref<32x128xbf16, #tpu.memory_space<vmem>>, vector<32x128xbf16>
    %cst = arith.constant dense<0.000000e+00> : vector<64x128xf32>
    %2 = tpu.matmul %0, %1, %cst {dimension_numbers = #tpu.dot_dimension_numbers<[1], [0], [0], [1], [0, 0, 1, 1], [], []>} : vector<64x32xbf16>, vector<32x128xbf16>, vector<64x128xf32> -> vector<64x128xf32>
    %c0_3 = arith.constant 0 : index
    %c0_4 = arith.constant 0 : index
    %3 = vector.load %arg3[%c0_3, %c0_4] : memref<64x1xf32, #tpu.memory_space<vmem>>, vector<64x1xf32>
    %4 = vector.broadcast %3 : vector<64x1xf32> to vector<64x128xf32>
    %5 = arith.addf %2, %4 : vector<64x128xf32>
    %6 = arith.truncf %5 : vector<64x128xf32> to vector<64x128xbf16>
    %c0_5 = arith.constant 0 : index
    %c0_6 = arith.constant 0 : index
    %7 = vector.load %arg4[%c0_5, %c0_6] : memref<64x128xbf16, #tpu.memory_space<vmem>>, vector<64x128xbf16>
    tpu.vector_store %arg4[%c0_5, %c0_6], %6 {strides = array<i32>} : memref<64x128xbf16, #tpu.memory_space<vmem>>, vector<64x128xbf16>,
    return
  }
  func.func @transform_0(%arg0: i32) -> (i32, i32) {
    %c0_i32 = arith.constant 0 : i32
    %c0_i32_0 = arith.constant 0 : i32
    %c0_i32_1 = arith.constant 0 : i32
    return %c0_i32, %c0_i32_0 : i32, i32
  }
  func.func @transform_1(%arg0: i32) -> (i32, i32) {
    %c0_i32 = arith.constant 0 : i32
    %c0_i32_0 = arith.constant 0 : i32
    return %c0_i32, %arg0 : i32, i32
  }
  func.func @transform_2(%arg0: i32) -> (i32, i32) {
    %c0_i32 = arith.constant 0 : i32
    %c0_i32_0 = arith.constant 0 : i32
    %c0_i32_1 = arith.constant 0 : i32
    return %c0_i32, %c0_i32_0 : i32, i32
  }
  func.func @transform_3(%arg0: i32) -> (i32, i32) {
    %c0_i32 = arith.constant 0 : i32
    %c0_i32_0 = arith.constant 0 : i32
    return %c0_i32, %arg0 : i32, i32
  }
}

module attributes {stable_mosaic.version = 11 : i64} {
  func.func @_mm2_kernel(%arg0: i32, %arg1: memref<16x16xbf16, #tpu.memory_space<vmem>>, %arg2: memref<16x256xbf16, #tpu.memory_space<vmem>>, %arg3: memref<16x16xbf16, #tpu.memory_space<vmem>>, %arg4: memref<16x256xbf16, #tpu.memory_space<vmem>>, %arg5: memref<16x256xbf16, #tpu.memory_space<vmem>>) attributes {dimension_semantics = [#tpu.dimension_semantics<parallel>], iteration_bounds = array<i64: 2>, scalar_prefetch = 0 : i64, scratch_operands = 0 : i64, tpu.core_type = #tpu.core_type<tc>, window_params = [{pipeline_mode = #tpu.pipeline_mode<synchronous>, transform_indices = @transform_0, window_bounds = array<i64: 16, 16>}, {transform_indices = @transform_1, window_bounds = array<i64: 16, 256>}, {pipeline_mode = #tpu.pipeline_mode<synchronous>, transform_indices = @transform_2, window_bounds = array<i64: 16, 16>}, {transform_indices = @transform_3, window_bounds = array<i64: 16, 256>}, {transform_indices = @transform_4, window_bounds = array<i64: 16, 256>}]} {
    %c0 = arith.constant 0 : index
    %c0_0 = arith.constant 0 : index
    %0 = vector.load %arg1[%c0, %c0_0] : memref<16x16xbf16, #tpu.memory_space<vmem>>, vector<16x16xbf16>
    %c0_1 = arith.constant 0 : index
    %c0_2 = arith.constant 0 : index
    %1 = vector.load %arg2[%c0_1, %c0_2] : memref<16x256xbf16, #tpu.memory_space<vmem>>, vector<16x256xbf16>
    %cst = arith.constant dense<0.000000e+00> : vector<16x256xf32>
    %2 = tpu.matmul %0, %1, %cst {dimension_numbers = #tpu.dot_dimension_numbers<[1], [0], [0], [1], [0, 0, 1, 1], [], []>} : vector<16x16xbf16>, vector<16x256xbf16>, vector<16x256xf32> -> vector<16x256xf32>
    %c0_3 = arith.constant 0 : index
    %c0_4 = arith.constant 0 : index
    %3 = vector.load %arg3[%c0_3, %c0_4] : memref<16x16xbf16, #tpu.memory_space<vmem>>, vector<16x16xbf16>
    %c0_5 = arith.constant 0 : index
    %c0_6 = arith.constant 0 : index
    %4 = vector.load %arg4[%c0_5, %c0_6] : memref<16x256xbf16, #tpu.memory_space<vmem>>, vector<16x256xbf16>
    %cst_7 = arith.constant dense<0.000000e+00> : vector<16x256xf32>
    %5 = tpu.matmul %3, %4, %cst_7 {dimension_numbers = #tpu.dot_dimension_numbers<[1], [0], [0], [1], [0, 0, 1, 1], [], []>} : vector<16x16xbf16>, vector<16x256xbf16>, vector<16x256xf32> -> vector<16x256xf32>
    %6 = arith.addf %2, %5 : vector<16x256xf32>
    %7 = arith.truncf %6 : vector<16x256xf32> to vector<16x256xbf16>
    %c0_8 = arith.constant 0 : index
    %c0_9 = arith.constant 0 : index
    %8 = vector.load %arg5[%c0_8, %c0_9] : memref<16x256xbf16, #tpu.memory_space<vmem>>, vector<16x256xbf16>
    tpu.vector_store %arg5[%c0_8, %c0_9], %7 {strides = array<i32>} : memref<16x256xbf16, #tpu.memory_space<vmem>>, vector<16x256xbf16>,
    return
  }
  func.func @transform_0(%arg0: i32) -> (i32, i32) {
    %c0_i32 = arith.constant 0 : i32
    %c0_i32_0 = arith.constant 0 : i32
    %c0_i32_1 = arith.constant 0 : i32
    return %c0_i32, %c0_i32_0 : i32, i32
  }
  func.func @transform_1(%arg0: i32) -> (i32, i32) {
    %c0_i32 = arith.constant 0 : i32
    %c0_i32_0 = arith.constant 0 : i32
    return %c0_i32, %arg0 : i32, i32
  }
  func.func @transform_2(%arg0: i32) -> (i32, i32) {
    %c0_i32 = arith.constant 0 : i32
    %c0_i32_0 = arith.constant 0 : i32
    %c0_i32_1 = arith.constant 0 : i32
    return %c0_i32, %c0_i32_0 : i32, i32
  }
  func.func @transform_3(%arg0: i32) -> (i32, i32) {
    %c0_i32 = arith.constant 0 : i32
    %c0_i32_0 = arith.constant 0 : i32
    return %c0_i32, %arg0 : i32, i32
  }
  func.func @transform_4(%arg0: i32) -> (i32, i32) {
    %c0_i32 = arith.constant 0 : i32
    %c0_i32_0 = arith.constant 0 : i32
    return %c0_i32, %arg0 : i32, i32
  }
}

module attributes {stable_mosaic.version = 11 : i64} {
  func.func @_proj_hamilton_kernel(%arg0: i32, %arg1: memref<8x144xbf16, #tpu.memory_space<vmem>>, %arg2: memref<144x256xbf16, #tpu.memory_space<vmem>>, %arg3: memref<8x1xf32, #tpu.memory_space<vmem>>, %arg4: memref<3x256xf32, #tpu.memory_space<vmem>>) attributes {dimension_semantics = [#tpu.dimension_semantics<parallel>], iteration_bounds = array<i64: 2>, scalar_prefetch = 0 : i64, scratch_operands = 0 : i64, tpu.core_type = #tpu.core_type<tc>, window_params = [{pipeline_mode = #tpu.pipeline_mode<synchronous>, transform_indices = @transform_0, window_bounds = array<i64: 8, 144>}, {transform_indices = @transform_1, window_bounds = array<i64: 144, 256>}, {pipeline_mode = #tpu.pipeline_mode<synchronous>, transform_indices = @transform_2, window_bounds = array<i64: 8, 1>}, {transform_indices = @transform_3, window_bounds = array<i64: 3, 256>}]} {
    %c0 = arith.constant 0 : index
    %c0_0 = arith.constant 0 : index
    %0 = vector.load %arg1[%c0, %c0_0] : memref<8x144xbf16, #tpu.memory_space<vmem>>, vector<8x144xbf16>
    %c0_1 = arith.constant 0 : index
    %c0_2 = arith.constant 0 : index
    %1 = vector.load %arg2[%c0_1, %c0_2] : memref<144x256xbf16, #tpu.memory_space<vmem>>, vector<144x256xbf16>
    %cst = arith.constant dense<0.000000e+00> : vector<8x256xf32>
    %2 = tpu.matmul %0, %1, %cst {dimension_numbers = #tpu.dot_dimension_numbers<[1], [0], [0], [1], [0, 0, 1, 1], [], []>} : vector<8x144xbf16>, vector<144x256xbf16>, vector<8x256xf32> -> vector<8x256xf32>
    %c0_3 = arith.constant 0 : index
    %c0_4 = arith.constant 0 : index
    %3 = vector.load %arg3[%c0_3, %c0_4] : memref<8x1xf32, #tpu.memory_space<vmem>>, vector<8x1xf32>
    %4 = vector.broadcast %3 : vector<8x1xf32> to vector<8x256xf32>
    %5 = arith.addf %2, %4 : vector<8x256xf32>
    %6 = vector.extract_strided_slice %5 {offsets = [0, 0], sizes = [1, 256], strides = [1, 1]} : vector<8x256xf32> to vector<1x256xf32>
    %7 = vector.extract_strided_slice %5 {offsets = [1, 0], sizes = [1, 256], strides = [1, 1]} : vector<8x256xf32> to vector<1x256xf32>
    %8 = vector.extract_strided_slice %5 {offsets = [2, 0], sizes = [1, 256], strides = [1, 1]} : vector<8x256xf32> to vector<1x256xf32>
    %9 = vector.extract_strided_slice %5 {offsets = [3, 0], sizes = [1, 256], strides = [1, 1]} : vector<8x256xf32> to vector<1x256xf32>
    %10 = vector.extract_strided_slice %5 {offsets = [4, 0], sizes = [1, 256], strides = [1, 1]} : vector<8x256xf32> to vector<1x256xf32>
    %11 = vector.extract_strided_slice %5 {offsets = [5, 0], sizes = [1, 256], strides = [1, 1]} : vector<8x256xf32> to vector<1x256xf32>
    %12 = vector.extract_strided_slice %5 {offsets = [6, 0], sizes = [1, 256], strides = [1, 1]} : vector<8x256xf32> to vector<1x256xf32>
    %13 = vector.extract_strided_slice %5 {offsets = [7, 0], sizes = [1, 256], strides = [1, 1]} : vector<8x256xf32> to vector<1x256xf32>
    %14 = arith.mulf %6, %11 : vector<1x256xf32>
    %15 = arith.mulf %7, %10 : vector<1x256xf32>
    %16 = arith.addf %14, %15 : vector<1x256xf32>
    %17 = arith.mulf %8, %13 : vector<1x256xf32>
    %18 = arith.addf %16, %17 : vector<1x256xf32>
    %19 = arith.mulf %9, %12 : vector<1x256xf32>
    %20 = arith.subf %18, %19 : vector<1x256xf32>
    %c0_5 = arith.constant 0 : index
    %c0_6 = arith.constant 0 : index
    %21 = vector.load %arg4[%c0_5, %c0_6] : memref<3x256xf32, #tpu.memory_space<vmem>>, vector<1x256xf32>
    tpu.vector_store %arg4[%c0_5, %c0_6], %20 {strides = array<i32>} : memref<3x256xf32, #tpu.memory_space<vmem>>, vector<1x256xf32>,
    %22 = arith.mulf %6, %12 : vector<1x256xf32>
    %23 = arith.mulf %7, %13 : vector<1x256xf32>
    %24 = arith.subf %22, %23 : vector<1x256xf32>
    %25 = arith.mulf %8, %10 : vector<1x256xf32>
    %26 = arith.addf %24, %25 : vector<1x256xf32>
    %27 = arith.mulf %9, %11 : vector<1x256xf32>
    %28 = arith.addf %26, %27 : vector<1x256xf32>
    %c1 = arith.constant 1 : index
    %c0_7 = arith.constant 0 : index
    %29 = vector.load %arg4[%c1, %c0_7] : memref<3x256xf32, #tpu.memory_space<vmem>>, vector<1x256xf32>
    tpu.vector_store %arg4[%c1, %c0_7], %28 {strides = array<i32>} : memref<3x256xf32, #tpu.memory_space<vmem>>, vector<1x256xf32>,
    %30 = arith.mulf %6, %13 : vector<1x256xf32>
    %31 = arith.mulf %7, %12 : vector<1x256xf32>
    %32 = arith.addf %30, %31 : vector<1x256xf32>
    %33 = arith.mulf %8, %11 : vector<1x256xf32>
    %34 = arith.subf %32, %33 : vector<1x256xf32>
    %35 = arith.mulf %9, %10 : vector<1x256xf32>
    %36 = arith.addf %34, %35 : vector<1x256xf32>
    %c2 = arith.constant 2 : index
    %c0_8 = arith.constant 0 : index
    %37 = vector.load %arg4[%c2, %c0_8] : memref<3x256xf32, #tpu.memory_space<vmem>>, vector<1x256xf32>
    tpu.vector_store %arg4[%c2, %c0_8], %36 {strides = array<i32>} : memref<3x256xf32, #tpu.memory_space<vmem>>, vector<1x256xf32>,
    return
  }
  func.func @transform_0(%arg0: i32) -> (i32, i32) {
    %c0_i32 = arith.constant 0 : i32
    %c0_i32_0 = arith.constant 0 : i32
    %c0_i32_1 = arith.constant 0 : i32
    return %c0_i32, %c0_i32_0 : i32, i32
  }
  func.func @transform_1(%arg0: i32) -> (i32, i32) {
    %c0_i32 = arith.constant 0 : i32
    %c0_i32_0 = arith.constant 0 : i32
    return %c0_i32, %arg0 : i32, i32
  }
  func.func @transform_2(%arg0: i32) -> (i32, i32) {
    %c0_i32 = arith.constant 0 : i32
    %c0_i32_0 = arith.constant 0 : i32
    %c0_i32_1 = arith.constant 0 : i32
    return %c0_i32, %c0_i32_0 : i32, i32
  }
  func.func @transform_3(%arg0: i32) -> (i32, i32) {
    %c0_i32 = arith.constant 0 : i32
    %c0_i32_0 = arith.constant 0 : i32
    return %c0_i32, %arg0 : i32, i32
  }
}

</mosaic_0001>

<llo_original>
// kernel: forward.8
$region0: #{forward.8}
  #allocation0 [shape = 'u32[]', space=smem, size = 0x4, offset = 0x4, fixed_abs, tag = 'smem constant byte address 0x4 - core index']
  #allocation1 [shape = 'u32[144,128]{1,0:T(1,128)}', space=vmem, size = 0x12000, scoped, tag = 'internal scratch']
  %s0 = inlined_call_operand.vmem [shape: bf16[16,56], index: 0, kind: input, shape index: {}]
  %s1 = inlined_call_operand.vmem [shape: bf16[56,512], index: 1, kind: input, shape index: {}]
  %s2 = inlined_call_operand.vmem [shape: f32[16,1], index: 2, kind: input, shape index: {}]
  %s3 = inlined_call_operand.vmem [shape: bf16[16,512], index: 3, kind: output, shape index: {}]
  %s4 = sld [smem:[#allocation0]]
  $region117: #{forward.8} parent=0
    _
  %s6 = ssub.s32 1, %s4
  %s7 = scalar_select 0, %s6, %s4
  $region1: #{forward.8} parent=0
    #allocation2 [shape = 'u8[57344]{0}', space=vmem, size = 0xe000, scoped, tag = 'input window, operand 1']
    #allocation3 [shape = 'u8[16384]{0}', space=vmem, size = 0x4000, scoped, tag = 'output window, operand 0']
    loop: start=0, step=1, limit=4
    $region2: #{forward.8} parent=1 // loop_pre_header
      _
    $region3: #{forward.8} parent=1 // loop_header
      %s9 = sphi 0, %s13
      %p10 = scmp.ge.s32.totalorder %s9, 4
      %s17 = sphi 0, %s17
      %s19 = sphi 0, %s17
      %s20 = sphi 0, %s19
      %s34 = sphi 0, %s20
      %s40 = sphi 0, %s42
      %s43 = sphi 0, %s40
      %s44 = sphi 0, %s43
      %s60 = sphi 0, %s44
      %s64 = sphi 0, %s64
      %s66 = sphi 0, %s64
      %s67 = sphi 0, %s66
      %s81 = sphi 0, %s67
      %s87 = sphi 0, %s89
      %s90 = sphi 0, %s87
      %s91 = sphi 0, %s90
      %s107 = sphi 0, %s91
    $region4: #{forward.8} parent=1 // loop_header_branch
      %12 = sbr.rel (%p10) target = $region8
    $region5: #{forward.8} parent=1 // loop_body
      %s14 = ssub.s32 %s9, 1
      %s15 = ssub.s32 %s9, 2
      %s16 = sadd.s32 %s9, 1
      %s18 = sadd.s32 %s17, 1
      %p21 = scmp.eq.s32.totalorder %s9, 1
      %p22 = scmp.ne.s32.totalorder %s17, %s19
      %p23 = scmp.eq.s32.totalorder %s9, 0
      %p24 = por %p22, %p23
      %p25 = scmp.ne.s32.totalorder %s17, %s19
      %p26 = scmp.eq.s32.totalorder %s14, 1
      %p27 = por %p25, %p26
      %p28 = scmp.ne.s32.totalorder %s19, %s20
      %p29 = scmp.eq.s32.totalorder %s14, 0
      %p30 = por %p28, %p29
      %p31 = scmp.ne.s32.totalorder %s19, %s20
      %p32 = scmp.eq.s32.totalorder %s15, 1
      %p33 = por %p31, %p32
      %p35 = scmp.ne.s32.totalorder %s20, %s34
      %p36 = scmp.eq.s32.totalorder %s15, 0
      %p37 = por %p35, %p36
      %s38 = ssub.s32 %s9, %s16
      %p39 = scmp.eq.s32.totalorder %s38, 0
      %s41 = sadd.s32 %s40, 1
      %s42 = scalar_select %p39, %s40, %s41
      %p45 = pneg %p39
      %p46 = scmp.eq.s32.totalorder %s9, 1
      %p47 = por %p45, %p46
      %p48 = scmp.ne.s32.totalorder %s40, %s43
      %p49 = scmp.eq.s32.totalorder %s9, 0
      %p50 = por %p48, %p49
      %p51 = scmp.ne.s32.totalorder %s40, %s43
      %p52 = scmp.eq.s32.totalorder %s14, 1
      %p53 = por %p51, %p52
      %p54 = scmp.ne.s32.totalorder %s43, %s44
      %p55 = scmp.eq.s32.totalorder %s14, 0
      %p56 = por %p54, %p55
      %p57 = scmp.ne.s32.totalorder %s43, %s44
      %p58 = scmp.eq.s32.totalorder %s15, 1
      %p59 = por %p57, %p58
      %p61 = scmp.ne.s32.totalorder %s44, %s60
      %p62 = scmp.eq.s32.totalorder %s15, 0
      %p63 = por %p61, %p62
      %s65 = sadd.s32 %s64, 1
      %p68 = scmp.eq.s32.totalorder %s9, 1
      %p69 = scmp.ne.s32.totalorder %s64, %s66
      %p70 = scmp.eq.s32.totalorder %s9, 0
      %p71 = por %p69, %p70
      %p72 = scmp.ne.s32.totalorder %s64, %s66
      %p73 = scmp.eq.s32.totalorder %s14, 1
      %p74 = por %p72, %p73
      %p75 = scmp.ne.s32.totalorder %s66, %s67
      %p76 = scmp.eq.s32.totalorder %s14, 0
      %p77 = por %p75, %p76
      %p78 = scmp.ne.s32.totalorder %s66, %s67
      %p79 = scmp.eq.s32.totalorder %s15, 1
      %p80 = por %p78, %p79
      %p82 = scmp.ne.s32.totalorder %s67, %s81
      %p83 = scmp.eq.s32.totalorder %s15, 0
      %p84 = por %p82, %p83
      %s85 = ssub.s32 %s9, %s16
      %p86 = scmp.eq.s32.totalorder %s85, 0
      %s88 = sadd.s32 %s87, 1
      %s89 = scalar_select %p86, %s87, %s88
      %p92 = pneg %p86
      %p93 = scmp.eq.s32.totalorder %s9, 1
      %p94 = por %p92, %p93
      %p95 = scmp.ne.s32.totalorder %s87, %s90
      %p96 = scmp.eq.s32.totalorder %s9, 0
      %p97 = por %p95, %p96
      %p98 = scmp.ne.s32.totalorder %s87, %s90
      %p99 = scmp.eq.s32.totalorder %s14, 1
      %p100 = por %p98, %p99
      %p101 = scmp.ne.s32.totalorder %s90, %s91
      %p102 = scmp.eq.s32.totalorder %s14, 0
      %p103 = por %p101, %p102
      %p104 = scmp.ne.s32.totalorder %s90, %s91
      %p105 = scmp.eq.s32.totalorder %s15, 1
      %p106 = por %p104, %p105
      %p108 = scmp.ne.s32.totalorder %s91, %s107
      %p109 = scmp.eq.s32.totalorder %s15, 0
      %p110 = por %p108, %p109
      %p111 = scmp.le.s32.totalorder 1, %s9
      %p112 = scmp.lt.s32.totalorder %s9, 3
      %p113 = pnand %p111, %p112
      %p114 = pneg %p113
      // Predicated region
      $region9: #{forward.8} parent=5 // pred_check
        _
      $region10: #{forward.8} parent=5 // pred_check_branch
        %116 = sbr.rel (%p113) target = $region12
      $region11: #{forward.8} parent=5 // pred_region
        %s117 = ssub.s32 %s9, 1
        // Predicated region
        $region13: #{forward.8} parent=11 // pred_check
          %p118 = pneg %p30
        $region14: #{forward.8} parent=11 // pred_check_branch
          %120 = sbr.rel (%p118) target = $region16
        $region15: #{forward.8} parent=11 // pred_region
          _
        $region16: #{forward.8} parent=11 // pred_fallthru
          _
        // Predicated region
        $region17: #{forward.8} parent=11 // pred_check
          %p121 = pneg %p77
        $region18: #{forward.8} parent=11 // pred_check_branch
          %123 = sbr.rel (%p121) target = $region20
        $region19: #{forward.8} parent=11 // pred_region
          _
        $region20: #{forward.8} parent=11 // pred_fallthru
          _
      $region12: #{forward.8} parent=5 // pred_fallthru
        _
      %p124 = scmp.lt.s32.totalorder %s9, 2
      // Predicated region
      $region21: #{forward.8} parent=5 // pred_check
        %p125 = pneg %p124
      $region22: #{forward.8} parent=5 // pred_check_branch
        %127 = sbr.rel (%p125) target = $region24
      $region23: #{forward.8} parent=5 // pred_region
        // Predicated region
        $region25: #{forward.8} parent=23 // pred_check
          %p128 = pneg %p50
        $region26: #{forward.8} parent=23 // pred_check_branch
          %130 = sbr.rel (%p128) target = $region28
        $region27: #{forward.8} parent=23 // pred_region
          %s131 = sand.u32 %s40, 1
          %s132 = sand.u32 %s40, 1
          %s133 = smul.addr %s132, 56
          %s134 = scalar_lea.vmem [#allocation2], %s133
          %s135 = smul.u32 2, %s9
          %s136 = smul.addr %s135, 4
          %s137 = scalar_lea.vmem %s1, %s136
          // Predicated region
          $region29: #{forward.8} parent=27 // pred_check
            _
          $region30: #{forward.8} parent=27 // pred_check_branch
            %139 = sbr.rel (0) target = $region32
          $region31: #{forward.8} parent=27 // pred_region
            // Predicated region
            $region33: #{forward.8} parent=31 // pred_check
              _
            $region34: #{forward.8} parent=31 // pred_check_branch
              %141 = sbr.rel (0) target = $region36
            $region35: #{forward.8} parent=31 // pred_region
              // Predicated region
              $region48: #{forward.8} parent=35 // pred_check
                _
              $region49: #{forward.8} parent=35 // pred_check_branch
                %169 = sbr.rel (0) target = $region51
              $region50: #{forward.8} parent=35 // pred_region
                loop: start=0, step=1, limit=1
                $region52: #{forward.8} parent=50 // loop_pre_header
                  _
                $region53: #{forward.8} parent=50 // loop_header
                  %s171 = sphi 0, %s175
                  %p172 = scmp.ge.s32.totalorder %s171, 1
                  %s176 = sphi %s137, %s137
                  %s177 = sphi %s134, %s134
                $region54: #{forward.8} parent=50 // loop_header_branch
                  %174 = sbr.rel (%p172) target = $region58
                $region55: #{forward.8} parent=50 // loop_body
                  %v178 = vld [vmem:[%s176] sm:$0xff]
                  %179 = vst [vmem:[%s177] sm:$0xff] %v178
                  %v180 = vld [vmem:[%s176 + $0x10] sm:$0xff]
                  %181 = vst [vmem:[%s177 + $0x8] sm:$0xff] %v180
                  %v182 = vld [vmem:[%s176 + $0x20] sm:$0xff]
                  %183 = vst [vmem:[%s177 + $0x10] sm:$0xff] %v182
                  %v184 = vld [vmem:[%s176 + $0x30] sm:$0xff]
                  %185 = vst [vmem:[%s177 + $0x18] sm:$0xff] %v184
                  %v186 = vld [vmem:[%s176 + $0x40] sm:$0xff]
                  %187 = vst [vmem:[%s177 + $0x20] sm:$0xff] %v186
                  %v188 = vld [vmem:[%s176 + $0x50] sm:$0xff]
                  %189 = vst [vmem:[%s177 + $0x28] sm:$0xff] %v188
                  %v190 = vld [vmem:[%s176 + $0x60] sm:$0xff]
                  %191 = vst [vmem:[%s177 + $0x30] sm:$0xff] %v190
                $region56: #{forward.8} parent=50 // loop_footer
                  %s175 = sadd.s32 1, %s171
                $region57: #{forward.8} parent=50 // loop_footer_branch
                  %170 = sbr.rel target = $region53
                $region58: #{forward.8} parent=50 // loop_exit
                  _
              $region51: #{forward.8} parent=35 // pred_fallthru
                _
              // Predicated region
              $region59: #{forward.8} parent=35 // pred_check
                _
              $region60: #{forward.8} parent=35 // pred_check_branch
                %193 = sbr.rel target = $region62
              $region61: #{forward.8} parent=35 // pred_region
                _
              $region62: #{forward.8} parent=35 // pred_fallthru
                _
            $region36: #{forward.8} parent=31 // pred_fallthru
              _
            // Predicated region
            $region37: #{forward.8} parent=31 // pred_check
              _
            $region38: #{forward.8} parent=31 // pred_check_branch
              %143 = sbr.rel target = $region40
            $region39: #{forward.8} parent=31 // pred_region
              %s145 = ssub.s32 256, 1
              loop: start=0, step=1, limit=1
              $region41: #{forward.8} parent=39 // loop_pre_header
                _
              $region42: #{forward.8} parent=39 // loop_header
                %s147 = sphi 0, %s151
                %p148 = scmp.ge.s32.totalorder %s147, 1
                %s152 = sphi %s137, %s137
                %s153 = sphi %s134, %s134
              $region43: #{forward.8} parent=39 // loop_header_branch
                %150 = sbr.rel (%p148) target = $region47
              $region44: #{forward.8} parent=39 // loop_body
                %v154 = vld [vmem:[%s152] sm:%s145]
                %155 = vst [vmem:[%s153] sm:%s145] %v154
                %v156 = vld [vmem:[%s152 + $0x10] sm:%s145]
                %157 = vst [vmem:[%s153 + $0x8] sm:%s145] %v156
                %v158 = vld [vmem:[%s152 + $0x20] sm:%s145]
                %159 = vst [vmem:[%s153 + $0x10] sm:%s145] %v158
                %v160 = vld [vmem:[%s152 + $0x30] sm:%s145]
                %161 = vst [vmem:[%s153 + $0x18] sm:%s145] %v160
                %v162 = vld [vmem:[%s152 + $0x40] sm:%s145]
                %163 = vst [vmem:[%s153 + $0x20] sm:%s145] %v162
                %v164 = vld [vmem:[%s152 + $0x50] sm:%s145]
                %165 = vst [vmem:[%s153 + $0x28] sm:%s145] %v164
                %v166 = vld [vmem:[%s152 + $0x60] sm:%s145]
                %167 = vst [vmem:[%s153 + $0x30] sm:%s145] %v166
              $region45: #{forward.8} parent=39 // loop_footer
                %s151 = sadd.s32 1, %s147
              $region46: #{forward.8} parent=39 // loop_footer_branch
                %146 = sbr.rel target = $region42
              $region47: #{forward.8} parent=39 // loop_exit
                _
            $region40: #{forward.8} parent=31 // pred_fallthru
              _
          $region32: #{forward.8} parent=27 // pred_fallthru
            _
          %194 = vnop
        $region28: #{forward.8} parent=23 // pred_fallthru
          _
      $region24: #{forward.8} parent=5 // pred_fallthru
        _
      %p195 = scmp.le.s32.totalorder 1, %s9
      %p196 = scmp.lt.s32.totalorder %s9, 3
      %p197 = pnand %p195, %p196
      %p198 = pneg %p197
      // Predicated region
      $region63: #{forward.8} parent=5 // pred_check
        _
      $region64: #{forward.8} parent=5 // pred_check_branch
        %200 = sbr.rel (%p197) target = $region66
      $region65: #{forward.8} parent=5 // pred_region
        %s201 = ssub.s32 %s9, 1
        %s202 = sand.u32 %s43, 1
        %s203 = sand.u32 %s43, 1
        %s204 = smul.addr %s203, 56
        %s205 = scalar_lea.vmem [#allocation2], %s204
        // Predicated region
        $region67: #{forward.8} parent=65 // pred_check
          %p206 = pneg %p56
        $region68: #{forward.8} parent=65 // pred_check_branch
          %208 = sbr.rel (%p206) target = $region70
        $region69: #{forward.8} parent=65 // pred_region
          _
        $region70: #{forward.8} parent=65 // pred_fallthru
          _
        %p209 = pneg %p30
        %p210 = pneg %p27
        %s211 = sand.u32 %s43, 1
        %s212 = sand.u32 %s43, 1
        %s213 = smul.addr %s212, 56
        %s214 = scalar_lea.vmem [#allocation2], %s213
        %p215 = pneg %p56
        %p216 = pneg %p53
        %p217 = pneg %p77
        %p218 = pneg %p74
        %p219 = pneg %p103
        %p220 = pneg %p100
        %s221 = sand.u32 %s90, 1
        %s222 = sand.u32 %s90, 1
        %s223 = smul.addr %s222, 16
        %s224 = scalar_lea.vmem [#allocation3], %s223
        %s225 = smul.u32 2, %s14
        %s226 = smul.u32 2, %s14
        %v228 = vld [vmem:[%s0] sm:$0xf]
        %v229 = vld [vmem:[%s0 + $0x4] sm:$0xf]
        %v230 = vld [vmem:[%s205] sm:$0xff]
        %v231 = vld [vmem:[%s205 + $0x8] sm:$0xff]
        %v232 = vld [vmem:[%s205 + $0x10] sm:$0xff]
        %v233 = vld [vmem:[%s205 + $0x18] sm:$0xff]
        %v234 = vld [vmem:[%s205 + $0x20] sm:$0xff]
        %v235 = vld [vmem:[%s205 + $0x28] sm:$0xff]
        %v236 = vld [vmem:[%s205 + $0x30] sm:$0xff]
        %v237 = vld [vmem:[%s2] sm:$0xff]
        %v238 = vld [vmem:[%s2 + $0x8] sm:$0xff]
        %240 = vset.pattern.permute.xlu0 0
        %241 = vperm.xlu0 %240, %v237
        %v242 = vpop.permute.xlu0 %241
        %245 = vset.pattern.permute.xlu0 0
        %246 = vperm.xlu0 %245, %v238
        %v247 = vpop.permute.xlu0 %246
        %v251 = vunpack.c.l.b16 %v228
        %v252 = vunpack.c.l.b16 %v229
        %v253 = vpack.c.b16 %v252, %v251
        %v261 = vunpack.c.l.b16 %v230
        %v262 = vunpack.c.h.b16 %v230
        %v263 = vunpack.c.l.b16 %v231
        %v264 = vunpack.c.h.b16 %v231
        %v265 = vunpack.c.l.b16 %v232
        %v266 = vunpack.c.h.b16 %v232
        %v267 = vunpack.c.l.b16 %v233
        %v268 = vunpack.c.h.b16 %v233
        %v269 = vunpack.c.l.b16 %v234
        %v270 = vunpack.c.h.b16 %v234
        %v271 = vunpack.c.l.b16 %v235
        %v272 = vunpack.c.h.b16 %v235
        %v273 = vunpack.c.l.b16 %v236
        %v274 = vunpack.c.h.b16 %v236
        %v275 = vpack.c.b16 %v263, %v261
        %v276 = vpack.c.b16 %v264, %v262
        %v277 = vpack.c.b16 %v267, %v265
        %v278 = vpack.c.b16 %v268, %v266
        %v279 = vpack.c.b16 %v271, %v269
        %v280 = vpack.c.b16 %v272, %v270
        %v281 = vpack.c.b16 %v273, %v273
        %v282 = vpack.c.b16 %v274, %v274
        %vm289 = vcmask 457728
        %v291 = vsel %vm289, %v253, 0
        %vm293 = vcmask 1043456
        %v295 = vsel %vm293, %v281, 0
        %v298 = vsel %vm293, %v282, 0
        %300 = vmatprep.subr.bf16.mxu0 0
        %301 = vmatpush1.bf16.msra.mxu0 0
        %302 = vmatprep.subr.bf16.mxu0 0
        %303 = vmatpush1.bf16.msra.mxu0 0
        %304 = vmatprep.subr.bf16.mxu0 0
        %305 = vmatpush1.bf16.msra.mxu0 0
        %306 = vmatprep.subr.bf16.mxu0 0
        %307 = vmatpush1.bf16.msra.mxu0 0
        %308 = vmatprep.subr.bf16.mxu0 %v298
        %309 = vmatpush1.bf16.msra.mxu0 %v295
        %310 = vmatprep.subr.bf16.mxu0 %v280
        %311 = vmatpush1.bf16.msra.mxu0 %v279
        %312 = vmatprep.subr.bf16.mxu0 %v278
        %313 = vmatpush1.bf16.msra.mxu0 %v277
        %314 = vmatprep.subr.bf16.mxu0 %v276
        %315 = vmatpush1.bf16.msra.mxu0 %v275
        %316 = vmatprep.subr.bf16.mxu0 0
        %317 = vmatpush2.bf16.msra.mxu0 0
        %318 = vmatprep.subr.bf16.mxu0 0
        %319 = vmatpush2.bf16.msra.mxu0 0
        %320 = vmatprep.subr.bf16.mxu0 0
        %321 = vmatpush2.bf16.msra.mxu0 0
        %322 = vmatprep.subr.bf16.mxu0 0
        %323 = vmatpush2.bf16.msra.mxu0 0
        %324 = vmatprep.subr.bf16.mxu0 0
        %325 = vmatpush2.bf16.msra.mxu0 0
        %326 = vmatprep.subr.bf16.mxu0 0
        %327 = vmatpush2.bf16.msra.mxu0 0
        %328 = vmatprep.subr.bf16.mxu0 0
        %329 = vmatpush2.bf16.msra.mxu0 0
        %330 = vmatprep.subr.bf16.mxu0 0
        %331 = vmatpush2.bf16.msra.mxu0 0
        %332 = vmatprep.mubr.bf16.mxu0 0
        %333 = vmatmul.mubr.bf16.gmra.mxu0 %v291
        %v334 = vpop.f32.mrf.mxu0
        %v335 = vadd.f32 %v242, %v334
        %v336 = vpop.f32.mrf.mxu0
        %v337 = vadd.f32 %v242, %v336
        %v338 = vpop.f32.mrf.mxu0
        %v339 = vadd.f32 %v247, %v338
        %v340 = vpop.f32.mrf.mxu0
        %v341 = vadd.f32 %v247, %v340
        %342 = vdwg.mxu0
        %v343 = vpack.c.bf16 %v339, %v335
        %v344 = vpack.c.bf16 %v341, %v337
        %v347 = vunpack.c.l.b16 %v343
        %v348 = vunpack.c.l.b16 %v344
        %v349 = vunpack.c.h.b16 %v343
        %v350 = vunpack.c.h.b16 %v344
        %v351 = vpack.c.b16 %v348, %v347
        %v352 = vpack.c.b16 %v350, %v349
        %355 = vst [vmem:[%s224] sm:$0xff] %v351
        %356 = vst [vmem:[%s224 + $0x8] sm:$0xff] %v352
        %s357 = sand.u32 %s90, 1
        %s358 = sand.u32 %s90, 1
        %s359 = smul.addr %s358, 16
        %s360 = scalar_lea.vmem [#allocation3], %s359
        // Predicated region
        $region71: #{forward.8} parent=65 // pred_check
          %p361 = pneg %p100
        $region72: #{forward.8} parent=65 // pred_check_branch
          %363 = sbr.rel (%p361) target = $region74
        $region73: #{forward.8} parent=65 // pred_region
          %s364 = smul.u32 2, %s14
          %s365 = smul.addr %s364, 4
          %s366 = scalar_lea.vmem %s3, %s365
          // Predicated region
          $region75: #{forward.8} parent=73 // pred_check
            _
          $region76: #{forward.8} parent=73 // pred_check_branch
            %368 = sbr.rel (0) target = $region78
          $region77: #{forward.8} parent=73 // pred_region
            // Predicated region
            $region79: #{forward.8} parent=77 // pred_check
              _
            $region80: #{forward.8} parent=77 // pred_check_branch
              %370 = sbr.rel (0) target = $region82
            $region81: #{forward.8} parent=77 // pred_region
              // Predicated region
              $region94: #{forward.8} parent=81 // pred_check
                _
              $region95: #{forward.8} parent=81 // pred_check_branch
                %388 = sbr.rel (0) target = $region97
              $region96: #{forward.8} parent=81 // pred_region
                loop: start=0, step=1, limit=1
                $region98: #{forward.8} parent=96 // loop_pre_header
                  _
                $region99: #{forward.8} parent=96 // loop_header
                  %s390 = sphi 0, %s394
                  %p391 = scmp.ge.s32.totalorder %s390, 1
                  %s395 = sphi %s360, %s360
                  %s396 = sphi %s366, %s366
                $region100: #{forward.8} parent=96 // loop_header_branch
                  %393 = sbr.rel (%p391) target = $region104
                $region101: #{forward.8} parent=96 // loop_body
                  %v397 = vld [vmem:[%s395] sm:$0xff]
                  %398 = vst [vmem:[%s396] sm:$0xff] %v397
                  %v399 = vld [vmem:[%s395 + $0x8] sm:$0xff]
                  %400 = vst [vmem:[%s396 + $0x10] sm:$0xff] %v399
                $region102: #{forward.8} parent=96 // loop_footer
                  %s394 = sadd.s32 1, %s390
                $region103: #{forward.8} parent=96 // loop_footer_branch
                  %389 = sbr.rel target = $region99
                $region104: #{forward.8} parent=96 // loop_exit
                  _
              $region97: #{forward.8} parent=81 // pred_fallthru
                _
              // Predicated region
              $region105: #{forward.8} parent=81 // pred_check
                _
              $region106: #{forward.8} parent=81 // pred_check_branch
                %402 = sbr.rel target = $region108
              $region107: #{forward.8} parent=81 // pred_region
                _
              $region108: #{forward.8} parent=81 // pred_fallthru
                _
            $region82: #{forward.8} parent=77 // pred_fallthru
              _
            // Predicated region
            $region83: #{forward.8} parent=77 // pred_check
              _
            $region84: #{forward.8} parent=77 // pred_check_branch
              %372 = sbr.rel target = $region86
            $region85: #{forward.8} parent=77 // pred_region
              %s374 = ssub.s32 256, 1
              loop: start=0, step=1, limit=1
              $region87: #{forward.8} parent=85 // loop_pre_header
                _
              $region88: #{forward.8} parent=85 // loop_header
                %s376 = sphi 0, %s380
                %p377 = scmp.ge.s32.totalorder %s376, 1
                %s381 = sphi %s360, %s360
                %s382 = sphi %s366, %s366
              $region89: #{forward.8} parent=85 // loop_header_branch
                %379 = sbr.rel (%p377) target = $region93
              $region90: #{forward.8} parent=85 // loop_body
                %v383 = vld [vmem:[%s381] sm:%s374]
                %384 = vst [vmem:[%s382] sm:%s374] %v383
                %v385 = vld [vmem:[%s381 + $0x8] sm:%s374]
                %386 = vst [vmem:[%s382 + $0x10] sm:%s374] %v385
              $region91: #{forward.8} parent=85 // loop_footer
                %s380 = sadd.s32 1, %s376
              $region92: #{forward.8} parent=85 // loop_footer_branch
                %375 = sbr.rel target = $region88
              $region93: #{forward.8} parent=85 // loop_exit
                _
            $region86: #{forward.8} parent=77 // pred_fallthru
              _
          $region78: #{forward.8} parent=73 // pred_fallthru
            _
          %403 = vnop
        $region74: #{forward.8} parent=65 // pred_fallthru
          _
      $region66: #{forward.8} parent=5 // pred_fallthru
        _
      %p404 = scmp.le.s32.totalorder 2, %s9
      // Predicated region
      $region109: #{forward.8} parent=5 // pred_check
        %p405 = pneg %p404
      $region110: #{forward.8} parent=5 // pred_check_branch
        %407 = sbr.rel (%p405) target = $region112
      $region111: #{forward.8} parent=5 // pred_region
        %s408 = ssub.s32 %s9, 2
        // Predicated region
        $region113: #{forward.8} parent=111 // pred_check
          %p409 = pneg %p106
        $region114: #{forward.8} parent=111 // pred_check_branch
          %411 = sbr.rel (%p409) target = $region116
        $region115: #{forward.8} parent=111 // pred_region
          %s412 = sand.u32 %s91, 1
          %s413 = sand.u32 %s91, 1
          %s414 = smul.addr %s413, 16
          %s415 = scalar_lea.vmem [#allocation3], %s414
        $region116: #{forward.8} parent=111 // pred_fallthru
          _
      $region112: #{forward.8} parent=5 // pred_fallthru
        _
    $region6: #{forward.8} parent=1 // loop_footer
      %s13 = sadd.s32 1, %s9
    $region7: #{forward.8} parent=1 // loop_footer_branch
      %8 = sbr.rel target = $region3
    $region8: #{forward.8} parent=1 // loop_exit
      _

// kernel: forward.9
$region0: #{forward.9}
  #allocation0 [shape = 'u32[]', space=smem, size = 0x4, offset = 0x4, fixed_abs, tag = 'smem constant byte address 0x4 - core index']
  #allocation1 [shape = 'u32[144,128]{1,0:T(1,128)}', space=vmem, size = 0x12000, scoped, tag = 'internal scratch']
  %s0 = inlined_call_operand.vmem [shape: bf16[32,256], index: 0, kind: input, shape index: {}]
  %s1 = inlined_call_operand.vmem [shape: bf16[256,128], index: 1, kind: input, shape index: {}]
  %s2 = inlined_call_operand.vmem [shape: bf16[32,128], index: 2, kind: output, shape index: {}]
  %s3 = sld [smem:[#allocation0]]
  $region18: #{forward.9} parent=0
    _
  %s5 = ssub.s32 1, %s3
  %s6 = scalar_select 0, %s5, %s3
  // Predicated region
  $region2: #{forward.9} parent=0 // pred_check
    _
  $region3: #{forward.9} parent=0 // pred_check_branch
    %8 = sbr.rel (0) target = $region5
  $region4: #{forward.9} parent=0 // pred_region
    _
  $region5: #{forward.9} parent=0 // pred_fallthru
    _
  // Predicated region
  $region6: #{forward.9} parent=0 // pred_check
    _
  $region7: #{forward.9} parent=0 // pred_check_branch
    %10 = sbr.rel (0) target = $region9
  $region8: #{forward.9} parent=0 // pred_region
    _
  $region9: #{forward.9} parent=0 // pred_fallthru
    _
  %v12 = vld [vmem:[%s0] sm:$0xff]
  %v13 = vld [vmem:[%s0 + $0x8] sm:$0xff]
  %v14 = vld [vmem:[%s0 + $0x10] sm:$0xff]
  %v15 = vld [vmem:[%s0 + $0x18] sm:$0xff]
  %v16 = vld [vmem:[%s1] sm:$0xf]
  %v17 = vld [vmem:[%s1 + $0x4] sm:$0xf]
  %v18 = vld [vmem:[%s1 + $0x8] sm:$0xf]
  %v19 = vld [vmem:[%s1 + $0xc] sm:$0xf]
  %v20 = vld [vmem:[%s1 + $0x10] sm:$0xf]
  %v21 = vld [vmem:[%s1 + $0x14] sm:$0xf]
  %v22 = vld [vmem:[%s1 + $0x18] sm:$0xf]
  %v23 = vld [vmem:[%s1 + $0x1c] sm:$0xf]
  %v24 = vld [vmem:[%s1 + $0x20] sm:$0xf]
  %v25 = vld [vmem:[%s1 + $0x24] sm:$0xf]
  %v26 = vld [vmem:[%s1 + $0x28] sm:$0xf]
  %v27 = vld [vmem:[%s1 + $0x2c] sm:$0xf]
  %v28 = vld [vmem:[%s1 + $0x30] sm:$0xf]
  %v29 = vld [vmem:[%s1 + $0x34] sm:$0xf]
  %v30 = vld [vmem:[%s1 + $0x38] sm:$0xf]
  %v31 = vld [vmem:[%s1 + $0x3c] sm:$0xf]
  %v32 = vld [vmem:[%s1 + $0x40] sm:$0xf]
  %v33 = vld [vmem:[%s1 + $0x44] sm:$0xf]
  %v34 = vld [vmem:[%s1 + $0x48] sm:$0xf]
  %v35 = vld [vmem:[%s1 + $0x4c] sm:$0xf]
  %v36 = vld [vmem:[%s1 + $0x50] sm:$0xf]
  %v37 = vld [vmem:[%s1 + $0x54] sm:$0xf]
  %v38 = vld [vmem:[%s1 + $0x58] sm:$0xf]
  %v39 = vld [vmem:[%s1 + $0x5c] sm:$0xf]
  %v40 = vld [vmem:[%s1 + $0x60] sm:$0xf]
  %v41 = vld [vmem:[%s1 + $0x64] sm:$0xf]
  %v42 = vld [vmem:[%s1 + $0x68] sm:$0xf]
  %v43 = vld [vmem:[%s1 + $0x6c] sm:$0xf]
  %v44 = vld [vmem:[%s1 + $0x70] sm:$0xf]
  %v45 = vld [vmem:[%s1 + $0x74] sm:$0xf]
  %v46 = vld [vmem:[%s1 + $0x78] sm:$0xf]
  %v47 = vld [vmem:[%s1 + $0x7c] sm:$0xf]
  %v52 = vunpack.c.l.b16 %v12
  %v53 = vunpack.c.h.b16 %v12
  %v54 = vunpack.c.l.b16 %v13
  %v55 = vunpack.c.h.b16 %v13
  %v56 = vunpack.c.l.b16 %v14
  %v57 = vunpack.c.h.b16 %v14
  %v58 = vunpack.c.l.b16 %v15
  %v59 = vunpack.c.h.b16 %v15
  %v60 = vpack.c.b16 %v54, %v52
  %v61 = vpack.c.b16 %v55, %v53
  %v62 = vpack.c.b16 %v58, %v56
  %v63 = vpack.c.b16 %v59, %v57
  %v100 = vunpack.c.l.b16 %v16
  %v101 = vunpack.c.l.b16 %v17
  %v102 = vunpack.c.l.b16 %v18
  %v103 = vunpack.c.l.b16 %v19
  %v104 = vunpack.c.l.b16 %v20
  %v105 = vunpack.c.l.b16 %v21
  %v106 = vunpack.c.l.b16 %v22
  %v107 = vunpack.c.l.b16 %v23
  %v108 = vunpack.c.l.b16 %v24
  %v109 = vunpack.c.l.b16 %v25
  %v110 = vunpack.c.l.b16 %v26
  %v111 = vunpack.c.l.b16 %v27
  %v112 = vunpack.c.l.b16 %v28
  %v113 = vunpack.c.l.b16 %v29
  %v114 = vunpack.c.l.b16 %v30
  %v115 = vunpack.c.l.b16 %v31
  %v116 = vunpack.c.l.b16 %v32
  %v117 = vunpack.c.l.b16 %v33
  %v118 = vunpack.c.l.b16 %v34
  %v119 = vunpack.c.l.b16 %v35
  %v120 = vunpack.c.l.b16 %v36
  %v121 = vunpack.c.l.b16 %v37
  %v122 = vunpack.c.l.b16 %v38
  %v123 = vunpack.c.l.b16 %v39
  %v124 = vunpack.c.l.b16 %v40
  %v125 = vunpack.c.l.b16 %v41
  %v126 = vunpack.c.l.b16 %v42
  %v127 = vunpack.c.l.b16 %v43
  %v128 = vunpack.c.l.b16 %v44
  %v129 = vunpack.c.l.b16 %v45
  %v130 = vunpack.c.l.b16 %v46
  %v131 = vunpack.c.l.b16 %v47
  %v132 = vpack.c.b16 %v101, %v100
  %v133 = vpack.c.b16 %v103, %v102
  %v134 = vpack.c.b16 %v105, %v104
  %v135 = vpack.c.b16 %v107, %v106
  %v136 = vpack.c.b16 %v109, %v108
  %v137 = vpack.c.b16 %v111, %v110
  %v138 = vpack.c.b16 %v113, %v112
  %v139 = vpack.c.b16 %v115, %v114
  %v140 = vpack.c.b16 %v117, %v116
  %v141 = vpack.c.b16 %v119, %v118
  %v142 = vpack.c.b16 %v121, %v120
  %v143 = vpack.c.b16 %v123, %v122
  %v144 = vpack.c.b16 %v125, %v124
  %v145 = vpack.c.b16 %v127, %v126
  %v146 = vpack.c.b16 %v129, %v128
  %v147 = vpack.c.b16 %v131, %v130
  %164 = vmatprep.subr.bf16.mxu0 0
  %165 = vmatpush1.bf16.msra.mxu0 %v139
  %166 = vmatprep.subr.bf16.mxu0 0
  %167 = vmatpush1.bf16.msra.mxu0 %v138
  %168 = vmatprep.subr.bf16.mxu0 0
  %169 = vmatpush1.bf16.msra.mxu0 %v137
  %170 = vmatprep.subr.bf16.mxu0 0
  %171 = vmatpush1.bf16.msra.mxu0 %v136
  %172 = vmatprep.subr.bf16.mxu0 0
  %173 = vmatpush1.bf16.msra.mxu0 %v135
  %174 = vmatprep.subr.bf16.mxu0 0
  %175 = vmatpush1.bf16.msra.mxu0 %v134
  %176 = vmatprep.subr.bf16.mxu0 0
  %177 = vmatpush1.bf16.msra.mxu0 %v133
  %178 = vmatprep.subr.bf16.mxu0 0
  %179 = vmatpush1.bf16.msra.mxu0 %v132
  %180 = vmatprep.subr.bf16.mxu0 0
  %181 = vmatpush2.bf16.msra.mxu0 %v147
  %182 = vmatprep.subr.bf16.mxu0 0
  %183 = vmatpush2.bf16.msra.mxu0 %v146
  %184 = vmatprep.subr.bf16.mxu0 0
  %185 = vmatpush2.bf16.msra.mxu0 %v145
  %186 = vmatprep.subr.bf16.mxu0 0
  %187 = vmatpush2.bf16.msra.mxu0 %v144
  %188 = vmatprep.subr.bf16.mxu0 0
  %189 = vmatpush2.bf16.msra.mxu0 %v143
  %190 = vmatprep.subr.bf16.mxu0 0
  %191 = vmatpush2.bf16.msra.mxu0 %v142
  %192 = vmatprep.subr.bf16.mxu0 0
  %193 = vmatpush2.bf16.msra.mxu0 %v141
  %194 = vmatprep.subr.bf16.mxu0 0
  %195 = vmatpush2.bf16.msra.mxu0 %v140
  %196 = vmatprep.mubr.bf16.mxu0 %v61
  %197 = vmatmul.mubr.bf16.gmra.mxu0 %v60
  %v198 = vpop.f32.mrf.mxu0
  %v199 = vadd.f32 0.0, %v198
  %v200 = vpop.f32.mrf.mxu0
  %v201 = vpop.f32.mrf.mxu0
  %v202 = vadd.f32 0.0, %v201
  %v203 = vpop.f32.mrf.mxu0
  %204 = vmatprep.mubr.bf16.mxu0 %v63
  %205 = vmatmul.mubr.bf16.gmra.mxu0 %v62
  %v206 = vpop.f32.mrf.mxu0
  %v207 = vadd.f32 0.0, %v206
  %v208 = vpop.f32.mrf.mxu0
  %v209 = vpop.f32.mrf.mxu0
  %v210 = vadd.f32 0.0, %v209
  %v211 = vpop.f32.mrf.mxu0
  %212 = vdwg.mxu0
  %v213 = vpack.c.bf16 %v202, %v199
  %v214 = vpack.c.bf16 %v210, %v207
  %v217 = vunpack.c.l.b16 %v213
  %v218 = vunpack.c.h.b16 %v213
  %v219 = vunpack.c.l.b16 %v214
  %v220 = vunpack.c.h.b16 %v214
  %v221 = vpack.c.b16 %v217, %v217
  %v222 = vpack.c.b16 %v218, %v218
  %v223 = vpack.c.b16 %v219, %v219
  %v224 = vpack.c.b16 %v220, %v220
  %229 = vst [vmem:[%s2] sm:$0xf] %v221
  %230 = vst [vmem:[%s2 + $0x4] sm:$0xf] %v222
  %231 = vst [vmem:[%s2 + $0x8] sm:$0xf] %v223
  %232 = vst [vmem:[%s2 + $0xc] sm:$0xf] %v224
  // Predicated region
  $region10: #{forward.9} parent=0 // pred_check
    _
  $region11: #{forward.9} parent=0 // pred_check_branch
    %234 = sbr.rel (0) target = $region13
  $region12: #{forward.9} parent=0 // pred_region
    _
  $region13: #{forward.9} parent=0 // pred_fallthru
    _
  // Predicated region
  $region14: #{forward.9} parent=0 // pred_check
    _
  $region15: #{forward.9} parent=0 // pred_check_branch
    %236 = sbr.rel (0) target = $region17
  $region16: #{forward.9} parent=0 // pred_region
    _
  $region17: #{forward.9} parent=0 // pred_fallthru
    _

// kernel: forward.10
$region0: #{forward.10}
  #allocation0 [shape = 'u32[]', space=smem, size = 0x4, offset = 0x4, fixed_abs, tag = 'smem constant byte address 0x4 - core index']
  #allocation1 [shape = 'u32[144,128]{1,0:T(1,128)}', space=vmem, size = 0x12000, scoped, tag = 'internal scratch']
  %s0 = inlined_call_operand.vmem [shape: bf16[64,512], index: 0, kind: input, shape index: {}]
  %s1 = inlined_call_operand.vmem [shape: bf16[512,32], index: 1, kind: input, shape index: {}]
  %s2 = inlined_call_operand.vmem [shape: bf16[64,32], index: 2, kind: output, shape index: {}]
  %s3 = sld [smem:[#allocation0]]
  $region18: #{forward.10} parent=0
    _
  %s5 = ssub.s32 1, %s3
  %s6 = scalar_select 0, %s5, %s3
  // Predicated region
  $region2: #{forward.10} parent=0 // pred_check
    _
  $region3: #{forward.10} parent=0 // pred_check_branch
    %8 = sbr.rel (0) target = $region5
  $region4: #{forward.10} parent=0 // pred_region
    _
  $region5: #{forward.10} parent=0 // pred_fallthru
    _
  // Predicated region
  $region6: #{forward.10} parent=0 // pred_check
    _
  $region7: #{forward.10} parent=0 // pred_check_branch
    %10 = sbr.rel (0) target = $region9
  $region8: #{forward.10} parent=0 // pred_region
    _
  $region9: #{forward.10} parent=0 // pred_fallthru
    _
  %v12 = vld [vmem:[%s0] sm:$0xff]
  %v13 = vld [vmem:[%s0 + $0x8] sm:$0xff]
  %v14 = vld [vmem:[%s0 + $0x10] sm:$0xff]
  %v15 = vld [vmem:[%s0 + $0x18] sm:$0xff]
  %v16 = vld [vmem:[%s0 + $0x20] sm:$0xff]
  %v17 = vld [vmem:[%s0 + $0x28] sm:$0xff]
  %v18 = vld [vmem:[%s0 + $0x30] sm:$0xff]
  %v19 = vld [vmem:[%s0 + $0x38] sm:$0xff]
  %v20 = vld [vmem:[%s0 + $0x40] sm:$0xff]
  %v21 = vld [vmem:[%s0 + $0x48] sm:$0xff]
  %v22 = vld [vmem:[%s0 + $0x50] sm:$0xff]
  %v23 = vld [vmem:[%s0 + $0x58] sm:$0xff]
  %v24 = vld [vmem:[%s0 + $0x60] sm:$0xff]
  %v25 = vld [vmem:[%s0 + $0x68] sm:$0xff]
  %v26 = vld [vmem:[%s0 + $0x70] sm:$0xff]
  %v27 = vld [vmem:[%s0 + $0x78] sm:$0xff]
  %v28 = vld [vmem:[%s1] sm:$0xf]
  %v29 = vld [vmem:[%s1 + $0x4] sm:$0xf]
  %v30 = vld [vmem:[%s1 + $0x8] sm:$0xf]
  %v31 = vld [vmem:[%s1 + $0xc] sm:$0xf]
  %v32 = vld [vmem:[%s1 + $0x10] sm:$0xf]
  %v33 = vld [vmem:[%s1 + $0x14] sm:$0xf]
  %v34 = vld [vmem:[%s1 + $0x18] sm:$0xf]
  %v35 = vld [vmem:[%s1 + $0x1c] sm:$0xf]
  %v36 = vld [vmem:[%s1 + $0x20] sm:$0xf]
  %v37 = vld [vmem:[%s1 + $0x24] sm:$0xf]
  %v38 = vld [vmem:[%s1 + $0x28] sm:$0xf]
  %v39 = vld [vmem:[%s1 + $0x2c] sm:$0xf]
  %v40 = vld [vmem:[%s1 + $0x30] sm:$0xf]
  %v41 = vld [vmem:[%s1 + $0x34] sm:$0xf]
  %v42 = vld [vmem:[%s1 + $0x38] sm:$0xf]
  %v43 = vld [vmem:[%s1 + $0x3c] sm:$0xf]
  %v44 = vld [vmem:[%s1 + $0x40] sm:$0xf]
  %v45 = vld [vmem:[%s1 + $0x44] sm:$0xf]
  %v46 = vld [vmem:[%s1 + $0x48] sm:$0xf]
  %v47 = vld [vmem:[%s1 + $0x4c] sm:$0xf]
  %v48 = vld [vmem:[%s1 + $0x50] sm:$0xf]
  %v49 = vld [vmem:[%s1 + $0x54] sm:$0xf]
  %v50 = vld [vmem:[%s1 + $0x58] sm:$0xf]
  %v51 = vld [vmem:[%s1 + $0x5c] sm:$0xf]
  %v52 = vld [vmem:[%s1 + $0x60] sm:$0xf]
  %v53 = vld [vmem:[%s1 + $0x64] sm:$0xf]
  %v54 = vld [vmem:[%s1 + $0x68] sm:$0xf]
  %v55 = vld [vmem:[%s1 + $0x6c] sm:$0xf]
  %v56 = vld [vmem:[%s1 + $0x70] sm:$0xf]
  %v57 = vld [vmem:[%s1 + $0x74] sm:$0xf]
  %v58 = vld [vmem:[%s1 + $0x78] sm:$0xf]
  %v59 = vld [vmem:[%s1 + $0x7c] sm:$0xf]
  %v60 = vld [vmem:[%s1 + $0x80] sm:$0xf]
  %v61 = vld [vmem:[%s1 + $0x84] sm:$0xf]
  %v62 = vld [vmem:[%s1 + $0x88] sm:$0xf]
  %v63 = vld [vmem:[%s1 + $0x8c] sm:$0xf]
  %v64 = vld [vmem:[%s1 + $0x90] sm:$0xf]
  %v65 = vld [vmem:[%s1 + $0x94] sm:$0xf]
  %v66 = vld [vmem:[%s1 + $0x98] sm:$0xf]
  %v67 = vld [vmem:[%s1 + $0x9c] sm:$0xf]
  %v68 = vld [vmem:[%s1 + $0xa0] sm:$0xf]
  %v69 = vld [vmem:[%s1 + $0xa4] sm:$0xf]
  %v70 = vld [vmem:[%s1 + $0xa8] sm:$0xf]
  %v71 = vld [vmem:[%s1 + $0xac] sm:$0xf]
  %v72 = vld [vmem:[%s1 + $0xb0] sm:$0xf]
  %v73 = vld [vmem:[%s1 + $0xb4] sm:$0xf]
  %v74 = vld [vmem:[%s1 + $0xb8] sm:$0xf]
  %v75 = vld [vmem:[%s1 + $0xbc] sm:$0xf]
  %v76 = vld [vmem:[%s1 + $0xc0] sm:$0xf]
  %v77 = vld [vmem:[%s1 + $0xc4] sm:$0xf]
  %v78 = vld [vmem:[%s1 + $0xc8] sm:$0xf]
  %v79 = vld [vmem:[%s1 + $0xcc] sm:$0xf]
  %v80 = vld [vmem:[%s1 + $0xd0] sm:$0xf]
  %v81 = vld [vmem:[%s1 + $0xd4] sm:$0xf]
  %v82 = vld [vmem:[%s1 + $0xd8] sm:$0xf]
  %v83 = vld [vmem:[%s1 + $0xdc] sm:$0xf]
  %v84 = vld [vmem:[%s1 + $0xe0] sm:$0xf]
  %v85 = vld [vmem:[%s1 + $0xe4] sm:$0xf]
  %v86 = vld [vmem:[%s1 + $0xe8] sm:$0xf]
  %v87 = vld [vmem:[%s1 + $0xec] sm:$0xf]
  %v88 = vld [vmem:[%s1 + $0xf0] sm:$0xf]
  %v89 = vld [vmem:[%s1 + $0xf4] sm:$0xf]
  %v90 = vld [vmem:[%s1 + $0xf8] sm:$0xf]
  %v91 = vld [vmem:[%s1 + $0xfc] sm:$0xf]
  %v108 = vunpack.c.l.b16 %v12
  %v109 = vunpack.c.h.b16 %v12
  %v110 = vunpack.c.l.b16 %v13
  %v111 = vunpack.c.h.b16 %v13
  %v112 = vunpack.c.l.b16 %v14
  %v113 = vunpack.c.h.b16 %v14
  %v114 = vunpack.c.l.b16 %v15
  %v115 = vunpack.c.h.b16 %v15
  %v116 = vunpack.c.l.b16 %v16
  %v117 = vunpack.c.h.b16 %v16
  %v118 = vunpack.c.l.b16 %v17
  %v119 = vunpack.c.h.b16 %v17
  %v120 = vunpack.c.l.b16 %v18
  %v121 = vunpack.c.h.b16 %v18
  %v122 = vunpack.c.l.b16 %v19
  %v123 = vunpack.c.h.b16 %v19
  %v124 = vunpack.c.l.b16 %v20
  %v125 = vunpack.c.h.b16 %v20
  %v126 = vunpack.c.l.b16 %v21
  %v127 = vunpack.c.h.b16 %v21
  %v128 = vunpack.c.l.b16 %v22
  %v129 = vunpack.c.h.b16 %v22
  %v130 = vunpack.c.l.b16 %v23
  %v131 = vunpack.c.h.b16 %v23
  %v132 = vunpack.c.l.b16 %v24
  %v133 = vunpack.c.h.b16 %v24
  %v134 = vunpack.c.l.b16 %v25
  %v135 = vunpack.c.h.b16 %v25
  %v136 = vunpack.c.l.b16 %v26
  %v137 = vunpack.c.h.b16 %v26
  %v138 = vunpack.c.l.b16 %v27
  %v139 = vunpack.c.h.b16 %v27
  %v140 = vpack.c.b16 %v112, %v108
  %v141 = vpack.c.b16 %v113, %v109
  %v142 = vpack.c.b16 %v114, %v110
  %v143 = vpack.c.b16 %v115, %v111
  %v144 = vpack.c.b16 %v120, %v116
  %v145 = vpack.c.b16 %v121, %v117
  %v146 = vpack.c.b16 %v122, %v118
  %v147 = vpack.c.b16 %v123, %v119
  %v148 = vpack.c.b16 %v128, %v124
  %v149 = vpack.c.b16 %v129, %v125
  %v150 = vpack.c.b16 %v130, %v126
  %v151 = vpack.c.b16 %v131, %v127
  %v152 = vpack.c.b16 %v136, %v132
  %v153 = vpack.c.b16 %v137, %v133
  %v154 = vpack.c.b16 %v138, %v134
  %v155 = vpack.c.b16 %v139, %v135
  %v236 = vunpack.c.l.b16 %v28
  %v237 = vunpack.c.l.b16 %v29
  %v238 = vunpack.c.l.b16 %v30
  %v239 = vunpack.c.l.b16 %v31
  %v240 = vunpack.c.l.b16 %v32
  %v241 = vunpack.c.l.b16 %v33
  %v242 = vunpack.c.l.b16 %v34
  %v243 = vunpack.c.l.b16 %v35
  %v244 = vunpack.c.l.b16 %v36
  %v245 = vunpack.c.l.b16 %v37
  %v246 = vunpack.c.l.b16 %v38
  %v247 = vunpack.c.l.b16 %v39
  %v248 = vunpack.c.l.b16 %v40
  %v249 = vunpack.c.l.b16 %v41
  %v250 = vunpack.c.l.b16 %v42
  %v251 = vunpack.c.l.b16 %v43
  %v252 = vunpack.c.l.b16 %v44
  %v253 = vunpack.c.l.b16 %v45
  %v254 = vunpack.c.l.b16 %v46
  %v255 = vunpack.c.l.b16 %v47
  %v256 = vunpack.c.l.b16 %v48
  %v257 = vunpack.c.l.b16 %v49
  %v258 = vunpack.c.l.b16 %v50
  %v259 = vunpack.c.l.b16 %v51
  %v260 = vunpack.c.l.b16 %v52
  %v261 = vunpack.c.l.b16 %v53
  %v262 = vunpack.c.l.b16 %v54
  %v263 = vunpack.c.l.b16 %v55
  %v264 = vunpack.c.l.b16 %v56
  %v265 = vunpack.c.l.b16 %v57
  %v266 = vunpack.c.l.b16 %v58
  %v267 = vunpack.c.l.b16 %v59
  %v268 = vunpack.c.l.b16 %v60
  %v269 = vunpack.c.l.b16 %v61
  %v270 = vunpack.c.l.b16 %v62
  %v271 = vunpack.c.l.b16 %v63
  %v272 = vunpack.c.l.b16 %v64
  %v273 = vunpack.c.l.b16 %v65
  %v274 = vunpack.c.l.b16 %v66
  %v275 = vunpack.c.l.b16 %v67
  %v276 = vunpack.c.l.b16 %v68
  %v277 = vunpack.c.l.b16 %v69
  %v278 = vunpack.c.l.b16 %v70
  %v279 = vunpack.c.l.b16 %v71
  %v280 = vunpack.c.l.b16 %v72
  %v281 = vunpack.c.l.b16 %v73
  %v282 = vunpack.c.l.b16 %v74
  %v283 = vunpack.c.l.b16 %v75
  %v284 = vunpack.c.l.b16 %v76
  %v285 = vunpack.c.l.b16 %v77
  %v286 = vunpack.c.l.b16 %v78
  %v287 = vunpack.c.l.b16 %v79
  %v288 = vunpack.c.l.b16 %v80
  %v289 = vunpack.c.l.b16 %v81
  %v290 = vunpack.c.l.b16 %v82
  %v291 = vunpack.c.l.b16 %v83
  %v292 = vunpack.c.l.b16 %v84
  %v293 = vunpack.c.l.b16 %v85
  %v294 = vunpack.c.l.b16 %v86
  %v295 = vunpack.c.l.b16 %v87
  %v296 = vunpack.c.l.b16 %v88
  %v297 = vunpack.c.l.b16 %v89
  %v298 = vunpack.c.l.b16 %v90
  %v299 = vunpack.c.l.b16 %v91
  %v300 = vpack.c.b16 %v237, %v236
  %v301 = vpack.c.b16 %v239, %v238
  %v302 = vpack.c.b16 %v241, %v240
  %v303 = vpack.c.b16 %v243, %v242
  %v304 = vpack.c.b16 %v245, %v244
  %v305 = vpack.c.b16 %v247, %v246
  %v306 = vpack.c.b16 %v249, %v248
  %v307 = vpack.c.b16 %v251, %v250
  %v308 = vpack.c.b16 %v253, %v252
  %v309 = vpack.c.b16 %v255, %v254
  %v310 = vpack.c.b16 %v257, %v256
  %v311 = vpack.c.b16 %v259, %v258
  %v312 = vpack.c.b16 %v261, %v260
  %v313 = vpack.c.b16 %v263, %v262
  %v314 = vpack.c.b16 %v265, %v264
  %v315 = vpack.c.b16 %v267, %v266
  %v316 = vpack.c.b16 %v269, %v268
  %v317 = vpack.c.b16 %v271, %v270
  %v318 = vpack.c.b16 %v273, %v272
  %v319 = vpack.c.b16 %v275, %v274
  %v320 = vpack.c.b16 %v277, %v276
  %v321 = vpack.c.b16 %v279, %v278
  %v322 = vpack.c.b16 %v281, %v280
  %v323 = vpack.c.b16 %v283, %v282
  %v324 = vpack.c.b16 %v285, %v284
  %v325 = vpack.c.b16 %v287, %v286
  %v326 = vpack.c.b16 %v289, %v288
  %v327 = vpack.c.b16 %v291, %v290
  %v328 = vpack.c.b16 %v293, %v292
  %v329 = vpack.c.b16 %v295, %v294
  %v330 = vpack.c.b16 %v297, %v296
  %v331 = vpack.c.b16 %v299, %v298
  %364 = vmatprep.subr.bf16.mxu0 0
  %365 = vmatpush1.bf16.msra.mxu0 %v307
  %366 = vmatprep.subr.bf16.mxu0 0
  %367 = vmatpush1.bf16.msra.mxu0 %v306
  %368 = vmatprep.subr.bf16.mxu0 0
  %369 = vmatpush1.bf16.msra.mxu0 %v305
  %370 = vmatprep.subr.bf16.mxu0 0
  %371 = vmatpush1.bf16.msra.mxu0 %v304
  %372 = vmatprep.subr.bf16.mxu0 0
  %373 = vmatpush1.bf16.msra.mxu0 %v303
  %374 = vmatprep.subr.bf16.mxu0 0
  %375 = vmatpush1.bf16.msra.mxu0 %v302
  %376 = vmatprep.subr.bf16.mxu0 0
  %377 = vmatpush1.bf16.msra.mxu0 %v301
  %378 = vmatprep.subr.bf16.mxu0 0
  %379 = vmatpush1.bf16.msra.mxu0 %v300
  %380 = vmatprep.subr.bf16.mxu0 0
  %381 = vmatpush2.bf16.msra.mxu0 %v315
  %382 = vmatprep.subr.bf16.mxu0 0
  %383 = vmatpush2.bf16.msra.mxu0 %v314
  %384 = vmatprep.subr.bf16.mxu0 0
  %385 = vmatpush2.bf16.msra.mxu0 %v313
  %386 = vmatprep.subr.bf16.mxu0 0
  %387 = vmatpush2.bf16.msra.mxu0 %v312
  %388 = vmatprep.subr.bf16.mxu0 0
  %389 = vmatpush2.bf16.msra.mxu0 %v311
  %390 = vmatprep.subr.bf16.mxu0 0
  %391 = vmatpush2.bf16.msra.mxu0 %v310
  %392 = vmatprep.subr.bf16.mxu0 0
  %393 = vmatpush2.bf16.msra.mxu0 %v309
  %394 = vmatprep.subr.bf16.mxu0 0
  %395 = vmatpush2.bf16.msra.mxu0 %v308
  %396 = vmatprep.mubr.bf16.mxu0 %v141
  %397 = vmatmul.mubr.bf16.gmra.mxu0 %v140
  %v398 = vpop.f32.mrf.mxu0
  %v399 = vadd.f32 0.0, %v398
  %v400 = vpop.f32.mrf.mxu0
  %v401 = vpop.f32.mrf.mxu0
  %v402 = vadd.f32 0.0, %v401
  %v403 = vpop.f32.mrf.mxu0
  %404 = vmatprep.mubr.bf16.mxu0 %v145
  %405 = vmatmul.mubr.bf16.gmra.mxu0 %v144
  %v406 = vpop.f32.mrf.mxu0
  %v407 = vadd.f32 0.0, %v406
  %v408 = vpop.f32.mrf.mxu0
  %v409 = vpop.f32.mrf.mxu0
  %v410 = vadd.f32 0.0, %v409
  %v411 = vpop.f32.mrf.mxu0
  %412 = vmatprep.mubr.bf16.mxu0 %v149
  %413 = vmatmul.mubr.bf16.gmra.mxu0 %v148
  %v414 = vpop.f32.mrf.mxu0
  %v415 = vadd.f32 0.0, %v414
  %v416 = vpop.f32.mrf.mxu0
  %v417 = vpop.f32.mrf.mxu0
  %v418 = vadd.f32 0.0, %v417
  %v419 = vpop.f32.mrf.mxu0
  %420 = vmatprep.mubr.bf16.mxu0 %v153
  %421 = vmatmul.mubr.bf16.gmra.mxu0 %v152
  %v422 = vpop.f32.mrf.mxu0
  %v423 = vadd.f32 0.0, %v422
  %v424 = vpop.f32.mrf.mxu0
  %v425 = vpop.f32.mrf.mxu0
  %v426 = vadd.f32 0.0, %v425
  %v427 = vpop.f32.mrf.mxu0
  %428 = vdwg.mxu0
  %429 = vmatprep.subr.bf16.mxu0 0
  %430 = vmatpush1.bf16.msra.mxu0 %v323
  %431 = vmatprep.subr.bf16.mxu0 0
  %432 = vmatpush1.bf16.msra.mxu0 %v322
  %433 = vmatprep.subr.bf16.mxu0 0
  %434 = vmatpush1.bf16.msra.mxu0 %v321
  %435 = vmatprep.subr.bf16.mxu0 0
  %436 = vmatpush1.bf16.msra.mxu0 %v320
  %437 = vmatprep.subr.bf16.mxu0 0
  %438 = vmatpush1.bf16.msra.mxu0 %v319
  %439 = vmatprep.subr.bf16.mxu0 0
  %440 = vmatpush1.bf16.msra.mxu0 %v318
  %441 = vmatprep.subr.bf16.mxu0 0
  %442 = vmatpush1.bf16.msra.mxu0 %v317
  %443 = vmatprep.subr.bf16.mxu0 0
  %444 = vmatpush1.bf16.msra.mxu0 %v316
  %445 = vmatprep.subr.bf16.mxu0 0
  %446 = vmatpush2.bf16.msra.mxu0 %v331
  %447 = vmatprep.subr.bf16.mxu0 0
  %448 = vmatpush2.bf16.msra.mxu0 %v330
  %449 = vmatprep.subr.bf16.mxu0 0
  %450 = vmatpush2.bf16.msra.mxu0 %v329
  %451 = vmatprep.subr.bf16.mxu0 0
  %452 = vmatpush2.bf16.msra.mxu0 %v328
  %453 = vmatprep.subr.bf16.mxu0 0
  %454 = vmatpush2.bf16.msra.mxu0 %v327
  %455 = vmatprep.subr.bf16.mxu0 0
  %456 = vmatpush2.bf16.msra.mxu0 %v326
  %457 = vmatprep.subr.bf16.mxu0 0
  %458 = vmatpush2.bf16.msra.mxu0 %v325
  %459 = vmatprep.subr.bf16.mxu0 0
  %460 = vmatpush2.bf16.msra.mxu0 %v324
  %461 = vmatprep.mubr.bf16.mxu0 %v143
  %462 = vmatmul.mubr.bf16.gmra.mxu0 %v142
  %v463 = vpop.f32.mrf.mxu0
  %v464 = vadd.f32 %v399, %v463
  %v465 = vpop.f32.mrf.mxu0
  %v466 = vpop.f32.mrf.mxu0
  %v467 = vadd.f32 %v402, %v466
  %v468 = vpop.f32.mrf.mxu0
  %469 = vmatprep.mubr.bf16.mxu0 %v147
  %470 = vmatmul.mubr.bf16.gmra.mxu0 %v146
  %v471 = vpop.f32.mrf.mxu0
  %v472 = vadd.f32 %v407, %v471
  %v473 = vpop.f32.mrf.mxu0
  %v474 = vpop.f32.mrf.mxu0
  %v475 = vadd.f32 %v410, %v474
  %v476 = vpop.f32.mrf.mxu0
  %477 = vmatprep.mubr.bf16.mxu0 %v151
  %478 = vmatmul.mubr.bf16.gmra.mxu0 %v150
  %v479 = vpop.f32.mrf.mxu0
  %v480 = vadd.f32 %v415, %v479
  %v481 = vpop.f32.mrf.mxu0
  %v482 = vpop.f32.mrf.mxu0
  %v483 = vadd.f32 %v418, %v482
  %v484 = vpop.f32.mrf.mxu0
  %485 = vmatprep.mubr.bf16.mxu0 %v155
  %486 = vmatmul.mubr.bf16.gmra.mxu0 %v154
  %v487 = vpop.f32.mrf.mxu0
  %v488 = vadd.f32 %v423, %v487
  %v489 = vpop.f32.mrf.mxu0
  %v490 = vpop.f32.mrf.mxu0
  %v491 = vadd.f32 %v426, %v490
  %v492 = vpop.f32.mrf.mxu0
  %493 = vdwg.mxu0
  %v494 = vpack.c.bf16 %v467, %v464
  %v495 = vpack.c.bf16 %v475, %v472
  %v496 = vpack.c.bf16 %v483, %v480
  %v497 = vpack.c.bf16 %v491, %v488
  %v502 = vunpack.c.l.b16 %v494
  %v503 = vunpack.c.h.b16 %v494
  %v504 = vunpack.c.l.b16 %v495
  %v505 = vunpack.c.h.b16 %v495
  %v506 = vunpack.c.l.b16 %v496
  %v507 = vunpack.c.h.b16 %v496
  %v508 = vunpack.c.l.b16 %v497
  %v509 = vunpack.c.h.b16 %v497
  %v510 = vpack.c.b16 %v502, %v502
  %v511 = vpack.c.b16 %v503, %v503
  %v512 = vpack.c.b16 %v504, %v504
  %v513 = vpack.c.b16 %v505, %v505
  %v514 = vpack.c.b16 %v506, %v506
  %v515 = vpack.c.b16 %v507, %v507
  %v516 = vpack.c.b16 %v508, %v508
  %v517 = vpack.c.b16 %v509, %v509
  %vm526 = vcmask 257024
  %527 = vst.msk [vmem:[%s2] sm:$0xf] %vm526, %v510
  %528 = vst.msk [vmem:[%s2 + $0x4] sm:$0xf] %vm526, %v511
  %529 = vst.msk [vmem:[%s2 + $0x8] sm:$0xf] %vm526, %v512
  %530 = vst.msk [vmem:[%s2 + $0xc] sm:$0xf] %vm526, %v513
  %531 = vst.msk [vmem:[%s2 + $0x10] sm:$0xf] %vm526, %v514
  %532 = vst.msk [vmem:[%s2 + $0x14] sm:$0xf] %vm526, %v515
  %533 = vst.msk [vmem:[%s2 + $0x18] sm:$0xf] %vm526, %v516
  %534 = vst.msk [vmem:[%s2 + $0x1c] sm:$0xf] %vm526, %v517
  // Predicated region
  $region10: #{forward.10} parent=0 // pred_check
    _
  $region11: #{forward.10} parent=0 // pred_check_branch
    %536 = sbr.rel (0) target = $region13
  $region12: #{forward.10} parent=0 // pred_region
    _
  $region13: #{forward.10} parent=0 // pred_fallthru
    _
  // Predicated region
  $region14: #{forward.10} parent=0 // pred_check
    _
  $region15: #{forward.10} parent=0 // pred_check_branch
    %538 = sbr.rel (0) target = $region17
  $region16: #{forward.10} parent=0 // pred_region
    _
  $region17: #{forward.10} parent=0 // pred_fallthru
    _

// kernel: forward.11
$region0: #{forward.11}
  #allocation0 [shape = 'u32[]', space=smem, size = 0x4, offset = 0x4, fixed_abs, tag = 'smem constant byte address 0x4 - core index']
  #allocation1 [shape = 'u32[144,128]{1,0:T(1,128)}', space=vmem, size = 0x12000, scoped, tag = 'internal scratch']
  %s0 = inlined_call_operand.vmem [shape: bf16[128,64], index: 0, kind: input, shape index: {}]
  %s1 = inlined_call_operand.vmem [shape: bf16[64,32], index: 1, kind: input, shape index: {}]
  %s2 = inlined_call_operand.vmem [shape: f32[128,1], index: 2, kind: input, shape index: {}]
  %s3 = inlined_call_operand.vmem [shape: bf16[128,32], index: 3, kind: output, shape index: {}]
  %s4 = sld [smem:[#allocation0]]
  $region22: #{forward.11} parent=0
    _
  %s6 = ssub.s32 1, %s4
  %s7 = scalar_select 0, %s6, %s4
  // Predicated region
  $region2: #{forward.11} parent=0 // pred_check
    _
  $region3: #{forward.11} parent=0 // pred_check_branch
    %9 = sbr.rel (0) target = $region5
  $region4: #{forward.11} parent=0 // pred_region
    _
  $region5: #{forward.11} parent=0 // pred_fallthru
    _
  // Predicated region
  $region6: #{forward.11} parent=0 // pred_check
    _
  $region7: #{forward.11} parent=0 // pred_check_branch
    %11 = sbr.rel (0) target = $region9
  $region8: #{forward.11} parent=0 // pred_region
    _
  $region9: #{forward.11} parent=0 // pred_fallthru
    _
  // Predicated region
  $region10: #{forward.11} parent=0 // pred_check
    _
  $region11: #{forward.11} parent=0 // pred_check_branch
    %13 = sbr.rel (0) target = $region13
  $region12: #{forward.11} parent=0 // pred_region
    _
  $region13: #{forward.11} parent=0 // pred_fallthru
    _
  %v15 = vld [vmem:[%s0] sm:$0xf]
  %v16 = vld [vmem:[%s0 + $0x4] sm:$0xf]
  %v17 = vld [vmem:[%s0 + $0x8] sm:$0xf]
  %v18 = vld [vmem:[%s0 + $0xc] sm:$0xf]
  %v19 = vld [vmem:[%s0 + $0x10] sm:$0xf]
  %v20 = vld [vmem:[%s0 + $0x14] sm:$0xf]
  %v21 = vld [vmem:[%s0 + $0x18] sm:$0xf]
  %v22 = vld [vmem:[%s0 + $0x1c] sm:$0xf]
  %v23 = vld [vmem:[%s0 + $0x20] sm:$0xf]
  %v24 = vld [vmem:[%s0 + $0x24] sm:$0xf]
  %v25 = vld [vmem:[%s0 + $0x28] sm:$0xf]
  %v26 = vld [vmem:[%s0 + $0x2c] sm:$0xf]
  %v27 = vld [vmem:[%s0 + $0x30] sm:$0xf]
  %v28 = vld [vmem:[%s0 + $0x34] sm:$0xf]
  %v29 = vld [vmem:[%s0 + $0x38] sm:$0xf]
  %v30 = vld [vmem:[%s0 + $0x3c] sm:$0xf]
  %v31 = vld [vmem:[%s1] sm:$0xf]
  %v32 = vld [vmem:[%s1 + $0x4] sm:$0xf]
  %v33 = vld [vmem:[%s1 + $0x8] sm:$0xf]
  %v34 = vld [vmem:[%s1 + $0xc] sm:$0xf]
  %v35 = vld [vmem:[%s1 + $0x10] sm:$0xf]
  %v36 = vld [vmem:[%s1 + $0x14] sm:$0xf]
  %v37 = vld [vmem:[%s1 + $0x18] sm:$0xf]
  %v38 = vld [vmem:[%s1 + $0x1c] sm:$0xf]
  %v39 = vld [vmem:[%s2] sm:$0xff]
  %v40 = vld [vmem:[%s2 + $0x8] sm:$0xff]
  %v41 = vld [vmem:[%s2 + $0x10] sm:$0xff]
  %v42 = vld [vmem:[%s2 + $0x18] sm:$0xff]
  %v43 = vld [vmem:[%s2 + $0x20] sm:$0xff]
  %v44 = vld [vmem:[%s2 + $0x28] sm:$0xff]
  %v45 = vld [vmem:[%s2 + $0x30] sm:$0xff]
  %v46 = vld [vmem:[%s2 + $0x38] sm:$0xff]
  %v47 = vld [vmem:[%s2 + $0x40] sm:$0xff]
  %v48 = vld [vmem:[%s2 + $0x48] sm:$0xff]
  %v49 = vld [vmem:[%s2 + $0x50] sm:$0xff]
  %v50 = vld [vmem:[%s2 + $0x58] sm:$0xff]
  %v51 = vld [vmem:[%s2 + $0x60] sm:$0xff]
  %v52 = vld [vmem:[%s2 + $0x68] sm:$0xff]
  %v53 = vld [vmem:[%s2 + $0x70] sm:$0xff]
  %v54 = vld [vmem:[%s2 + $0x78] sm:$0xff]
  %56 = vset.pattern.permute.xlu0 0
  %57 = vperm.xlu0 %56, %v39
  %v58 = vpop.permute.xlu0 %57
  %61 = vset.pattern.permute.xlu0 0
  %62 = vperm.xlu0 %61, %v40
  %v63 = vpop.permute.xlu0 %62
  %66 = vset.pattern.permute.xlu0 0
  %67 = vperm.xlu0 %66, %v41
  %v68 = vpop.permute.xlu0 %67
  %71 = vset.pattern.permute.xlu0 0
  %72 = vperm.xlu0 %71, %v42
  %v73 = vpop.permute.xlu0 %72
  %76 = vset.pattern.permute.xlu0 0
  %77 = vperm.xlu0 %76, %v43
  %v78 = vpop.permute.xlu0 %77
  %81 = vset.pattern.permute.xlu0 0
  %82 = vperm.xlu0 %81, %v44
  %v83 = vpop.permute.xlu0 %82
  %86 = vset.pattern.permute.xlu0 0
  %87 = vperm.xlu0 %86, %v45
  %v88 = vpop.permute.xlu0 %87
  %91 = vset.pattern.permute.xlu0 0
  %92 = vperm.xlu0 %91, %v46
  %v93 = vpop.permute.xlu0 %92
  %96 = vset.pattern.permute.xlu0 0
  %97 = vperm.xlu0 %96, %v47
  %v98 = vpop.permute.xlu0 %97
  %101 = vset.pattern.permute.xlu0 0
  %102 = vperm.xlu0 %101, %v48
  %v103 = vpop.permute.xlu0 %102
  %106 = vset.pattern.permute.xlu0 0
  %107 = vperm.xlu0 %106, %v49
  %v108 = vpop.permute.xlu0 %107
  %111 = vset.pattern.permute.xlu0 0
  %112 = vperm.xlu0 %111, %v50
  %v113 = vpop.permute.xlu0 %112
  %116 = vset.pattern.permute.xlu0 0
  %117 = vperm.xlu0 %116, %v51
  %v118 = vpop.permute.xlu0 %117
  %121 = vset.pattern.permute.xlu0 0
  %122 = vperm.xlu0 %121, %v52
  %v123 = vpop.permute.xlu0 %122
  %126 = vset.pattern.permute.xlu0 0
  %127 = vperm.xlu0 %126, %v53
  %v128 = vpop.permute.xlu0 %127
  %131 = vset.pattern.permute.xlu0 0
  %132 = vperm.xlu0 %131, %v54
  %v133 = vpop.permute.xlu0 %132
  %v151 = vunpack.c.l.b16 %v15
  %v152 = vunpack.c.l.b16 %v16
  %v153 = vunpack.c.l.b16 %v17
  %v154 = vunpack.c.l.b16 %v18
  %v155 = vunpack.c.l.b16 %v19
  %v156 = vunpack.c.l.b16 %v20
  %v157 = vunpack.c.l.b16 %v21
  %v158 = vunpack.c.l.b16 %v22
  %v159 = vunpack.c.l.b16 %v23
  %v160 = vunpack.c.l.b16 %v24
  %v161 = vunpack.c.l.b16 %v25
  %v162 = vunpack.c.l.b16 %v26
  %v163 = vunpack.c.l.b16 %v27
  %v164 = vunpack.c.l.b16 %v28
  %v165 = vunpack.c.l.b16 %v29
  %v166 = vunpack.c.l.b16 %v30
  %v167 = vpack.c.b16 %v152, %v151
  %v168 = vpack.c.b16 %v154, %v153
  %v169 = vpack.c.b16 %v156, %v155
  %v170 = vpack.c.b16 %v158, %v157
  %v171 = vpack.c.b16 %v160, %v159
  %v172 = vpack.c.b16 %v162, %v161
  %v173 = vpack.c.b16 %v164, %v163
  %v174 = vpack.c.b16 %v166, %v165
  %v183 = vunpack.c.l.b16 %v31
  %v184 = vunpack.c.l.b16 %v32
  %v185 = vunpack.c.l.b16 %v33
  %v186 = vunpack.c.l.b16 %v34
  %v187 = vunpack.c.l.b16 %v35
  %v188 = vunpack.c.l.b16 %v36
  %v189 = vunpack.c.l.b16 %v37
  %v190 = vunpack.c.l.b16 %v38
  %v191 = vpack.c.b16 %v184, %v183
  %v192 = vpack.c.b16 %v186, %v185
  %v193 = vpack.c.b16 %v188, %v187
  %v194 = vpack.c.b16 %v190, %v189
  %vm199 = vcmask 523264
  %v201 = vsel %vm199, %v167, 0
  %v204 = vsel %vm199, %v168, 0
  %v207 = vsel %vm199, %v169, 0
  %v210 = vsel %vm199, %v170, 0
  %v213 = vsel %vm199, %v171, 0
  %v216 = vsel %vm199, %v172, 0
  %v219 = vsel %vm199, %v173, 0
  %v222 = vsel %vm199, %v174, 0
  %224 = vmatprep.subr.bf16.mxu0 0
  %225 = vmatpush1.bf16.msra.mxu0 0
  %226 = vmatprep.subr.bf16.mxu0 0
  %227 = vmatpush1.bf16.msra.mxu0 0
  %228 = vmatprep.subr.bf16.mxu0 0
  %229 = vmatpush1.bf16.msra.mxu0 0
  %230 = vmatprep.subr.bf16.mxu0 0
  %231 = vmatpush1.bf16.msra.mxu0 0
  %232 = vmatprep.subr.bf16.mxu0 0
  %233 = vmatpush1.bf16.msra.mxu0 %v194
  %234 = vmatprep.subr.bf16.mxu0 0
  %235 = vmatpush1.bf16.msra.mxu0 %v193
  %236 = vmatprep.subr.bf16.mxu0 0
  %237 = vmatpush1.bf16.msra.mxu0 %v192
  %238 = vmatprep.subr.bf16.mxu0 0
  %239 = vmatpush1.bf16.msra.mxu0 %v191
  %240 = vmatprep.subr.bf16.mxu0 0
  %241 = vmatpush2.bf16.msra.mxu0 0
  %242 = vmatprep.subr.bf16.mxu0 0
  %243 = vmatpush2.bf16.msra.mxu0 0
  %244 = vmatprep.subr.bf16.mxu0 0
  %245 = vmatpush2.bf16.msra.mxu0 0
  %246 = vmatprep.subr.bf16.mxu0 0
  %247 = vmatpush2.bf16.msra.mxu0 0
  %248 = vmatprep.subr.bf16.mxu0 0
  %249 = vmatpush2.bf16.msra.mxu0 0
  %250 = vmatprep.subr.bf16.mxu0 0
  %251 = vmatpush2.bf16.msra.mxu0 0
  %252 = vmatprep.subr.bf16.mxu0 0
  %253 = vmatpush2.bf16.msra.mxu0 0
  %254 = vmatprep.subr.bf16.mxu0 0
  %255 = vmatpush2.bf16.msra.mxu0 0
  %256 = vmatprep.mubr.bf16.mxu0 0
  %257 = vmatmul.mubr.bf16.gmra.mxu0 %v201
  %v258 = vpop.f32.mrf.mxu0
  %v259 = vadd.f32 %v58, %v258
  %v260 = vpop.f32.mrf.mxu0
  %v261 = vpop.f32.mrf.mxu0
  %v262 = vadd.f32 %v63, %v261
  %v263 = vpop.f32.mrf.mxu0
  %264 = vmatprep.mubr.bf16.mxu0 0
  %265 = vmatmul.mubr.bf16.gmra.mxu0 %v204
  %v266 = vpop.f32.mrf.mxu0
  %v267 = vadd.f32 %v68, %v266
  %v268 = vpop.f32.mrf.mxu0
  %v269 = vpop.f32.mrf.mxu0
  %v270 = vadd.f32 %v73, %v269
  %v271 = vpop.f32.mrf.mxu0
  %272 = vmatprep.mubr.bf16.mxu0 0
  %273 = vmatmul.mubr.bf16.gmra.mxu0 %v207
  %v274 = vpop.f32.mrf.mxu0
  %v275 = vadd.f32 %v78, %v274
  %v276 = vpop.f32.mrf.mxu0
  %v277 = vpop.f32.mrf.mxu0
  %v278 = vadd.f32 %v83, %v277
  %v279 = vpop.f32.mrf.mxu0
  %280 = vmatprep.mubr.bf16.mxu0 0
  %281 = vmatmul.mubr.bf16.gmra.mxu0 %v210
  %v282 = vpop.f32.mrf.mxu0
  %v283 = vadd.f32 %v88, %v282
  %v284 = vpop.f32.mrf.mxu0
  %v285 = vpop.f32.mrf.mxu0
  %v286 = vadd.f32 %v93, %v285
  %v287 = vpop.f32.mrf.mxu0
  %288 = vmatprep.mubr.bf16.mxu0 0
  %289 = vmatmul.mubr.bf16.gmra.mxu0 %v213
  %v290 = vpop.f32.mrf.mxu0
  %v291 = vadd.f32 %v98, %v290
  %v292 = vpop.f32.mrf.mxu0
  %v293 = vpop.f32.mrf.mxu0
  %v294 = vadd.f32 %v103, %v293
  %v295 = vpop.f32.mrf.mxu0
  %296 = vmatprep.mubr.bf16.mxu0 0
  %297 = vmatmul.mubr.bf16.gmra.mxu0 %v216
  %v298 = vpop.f32.mrf.mxu0
  %v299 = vadd.f32 %v108, %v298
  %v300 = vpop.f32.mrf.mxu0
  %v301 = vpop.f32.mrf.mxu0
  %v302 = vadd.f32 %v113, %v301
  %v303 = vpop.f32.mrf.mxu0
  %304 = vmatprep.mubr.bf16.mxu0 0
  %305 = vmatmul.mubr.bf16.gmra.mxu0 %v219
  %v306 = vpop.f32.mrf.mxu0
  %v307 = vadd.f32 %v118, %v306
  %v308 = vpop.f32.mrf.mxu0
  %v309 = vpop.f32.mrf.mxu0
  %v310 = vadd.f32 %v123, %v309
  %v311 = vpop.f32.mrf.mxu0
  %312 = vmatprep.mubr.bf16.mxu0 0
  %313 = vmatmul.mubr.bf16.gmra.mxu0 %v222
  %v314 = vpop.f32.mrf.mxu0
  %v315 = vadd.f32 %v128, %v314
  %v316 = vpop.f32.mrf.mxu0
  %v317 = vpop.f32.mrf.mxu0
  %v318 = vadd.f32 %v133, %v317
  %v319 = vpop.f32.mrf.mxu0
  %320 = vdwg.mxu0
  %v321 = vpack.c.bf16 %v262, %v259
  %v322 = vpack.c.bf16 %v270, %v267
  %v323 = vpack.c.bf16 %v278, %v275
  %v324 = vpack.c.bf16 %v286, %v283
  %v325 = vpack.c.bf16 %v294, %v291
  %v326 = vpack.c.bf16 %v302, %v299
  %v327 = vpack.c.bf16 %v310, %v307
  %v328 = vpack.c.bf16 %v318, %v315
  %v337 = vunpack.c.l.b16 %v321
  %v338 = vunpack.c.h.b16 %v321
  %v339 = vunpack.c.l.b16 %v322
  %v340 = vunpack.c.h.b16 %v322
  %v341 = vunpack.c.l.b16 %v323
  %v342 = vunpack.c.h.b16 %v323
  %v343 = vunpack.c.l.b16 %v324
  %v344 = vunpack.c.h.b16 %v324
  %v345 = vunpack.c.l.b16 %v325
  %v346 = vunpack.c.h.b16 %v325
  %v347 = vunpack.c.l.b16 %v326
  %v348 = vunpack.c.h.b16 %v326
  %v349 = vunpack.c.l.b16 %v327
  %v350 = vunpack.c.h.b16 %v327
  %v351 = vunpack.c.l.b16 %v328
  %v352 = vunpack.c.h.b16 %v328
  %v353 = vpack.c.b16 %v337, %v337
  %v354 = vpack.c.b16 %v338, %v338
  %v355 = vpack.c.b16 %v339, %v339
  %v356 = vpack.c.b16 %v340, %v340
  %v357 = vpack.c.b16 %v341, %v341
  %v358 = vpack.c.b16 %v342, %v342
  %v359 = vpack.c.b16 %v343, %v343
  %v360 = vpack.c.b16 %v344, %v344
  %v361 = vpack.c.b16 %v345, %v345
  %v362 = vpack.c.b16 %v346, %v346
  %v363 = vpack.c.b16 %v347, %v347
  %v364 = vpack.c.b16 %v348, %v348
  %v365 = vpack.c.b16 %v349, %v349
  %v366 = vpack.c.b16 %v350, %v350
  %v367 = vpack.c.b16 %v351, %v351
  %v368 = vpack.c.b16 %v352, %v352
  %vm385 = vcmask 257024
  %386 = vst.msk [vmem:[%s3] sm:$0xf] %vm385, %v353
  %387 = vst.msk [vmem:[%s3 + $0x4] sm:$0xf] %vm385, %v354
  %388 = vst.msk [vmem:[%s3 + $0x8] sm:$0xf] %vm385, %v355
  %389 = vst.msk [vmem:[%s3 + $0xc] sm:$0xf] %vm385, %v356
  %390 = vst.msk [vmem:[%s3 + $0x10] sm:$0xf] %vm385, %v357
  %391 = vst.msk [vmem:[%s3 + $0x14] sm:$0xf] %vm385, %v358
  %392 = vst.msk [vmem:[%s3 + $0x18] sm:$0xf] %vm385, %v359
  %393 = vst.msk [vmem:[%s3 + $0x1c] sm:$0xf] %vm385, %v360
  %394 = vst.msk [vmem:[%s3 + $0x20] sm:$0xf] %vm385, %v361
  %395 = vst.msk [vmem:[%s3 + $0x24] sm:$0xf] %vm385, %v362
  %396 = vst.msk [vmem:[%s3 + $0x28] sm:$0xf] %vm385, %v363
  %397 = vst.msk [vmem:[%s3 + $0x2c] sm:$0xf] %vm385, %v364
  %398 = vst.msk [vmem:[%s3 + $0x30] sm:$0xf] %vm385, %v365
  %399 = vst.msk [vmem:[%s3 + $0x34] sm:$0xf] %vm385, %v366
  %400 = vst.msk [vmem:[%s3 + $0x38] sm:$0xf] %vm385, %v367
  %401 = vst.msk [vmem:[%s3 + $0x3c] sm:$0xf] %vm385, %v368
  // Predicated region
  $region14: #{forward.11} parent=0 // pred_check
    _
  $region15: #{forward.11} parent=0 // pred_check_branch
    %403 = sbr.rel (0) target = $region17
  $region16: #{forward.11} parent=0 // pred_region
    _
  $region17: #{forward.11} parent=0 // pred_fallthru
    _
  // Predicated region
  $region18: #{forward.11} parent=0 // pred_check
    _
  $region19: #{forward.11} parent=0 // pred_check_branch
    %405 = sbr.rel (0) target = $region21
  $region20: #{forward.11} parent=0 // pred_region
    _
  $region21: #{forward.11} parent=0 // pred_fallthru
    _

// kernel: forward.12
$region0: #{forward.12}
  #allocation0 [shape = 'u32[]', space=smem, size = 0x4, offset = 0x4, fixed_abs, tag = 'smem constant byte address 0x4 - core index']
  #allocation1 [shape = 'u32[144,128]{1,0:T(1,128)}', space=vmem, size = 0x12000, scoped, tag = 'internal scratch']
  %s0 = inlined_call_operand.vmem [shape: bf16[32,32], index: 0, kind: input, shape index: {}]
  %s1 = inlined_call_operand.vmem [shape: bf16[32,128], index: 1, kind: input, shape index: {}]
  %s2 = inlined_call_operand.vmem [shape: bf16[32,32], index: 2, kind: input, shape index: {}]
  %s3 = inlined_call_operand.vmem [shape: bf16[32,128], index: 3, kind: input, shape index: {}]
  %s4 = inlined_call_operand.vmem [shape: bf16[32,128], index: 4, kind: output, shape index: {}]
  %s5 = sld [smem:[#allocation0]]
  $region26: #{forward.12} parent=0
    _
  %s7 = ssub.s32 1, %s5
  %s8 = scalar_select 0, %s7, %s5
  // Predicated region
  $region2: #{forward.12} parent=0 // pred_check
    _
  $region3: #{forward.12} parent=0 // pred_check_branch
    %10 = sbr.rel (0) target = $region5
  $region4: #{forward.12} parent=0 // pred_region
    _
  $region5: #{forward.12} parent=0 // pred_fallthru
    _
  // Predicated region
  $region6: #{forward.12} parent=0 // pred_check
    _
  $region7: #{forward.12} parent=0 // pred_check_branch
    %12 = sbr.rel (0) target = $region9
  $region8: #{forward.12} parent=0 // pred_region
    _
  $region9: #{forward.12} parent=0 // pred_fallthru
    _
  // Predicated region
  $region10: #{forward.12} parent=0 // pred_check
    _
  $region11: #{forward.12} parent=0 // pred_check_branch
    %14 = sbr.rel (0) target = $region13
  $region12: #{forward.12} parent=0 // pred_region
    _
  $region13: #{forward.12} parent=0 // pred_fallthru
    _
  // Predicated region
  $region14: #{forward.12} parent=0 // pred_check
    _
  $region15: #{forward.12} parent=0 // pred_check_branch
    %16 = sbr.rel (0) target = $region17
  $region16: #{forward.12} parent=0 // pred_region
    _
  $region17: #{forward.12} parent=0 // pred_fallthru
    _
  %v18 = vld [vmem:[%s0] sm:$0xf]
  %v19 = vld [vmem:[%s0 + $0x4] sm:$0xf]
  %v20 = vld [vmem:[%s0 + $0x8] sm:$0xf]
  %v21 = vld [vmem:[%s0 + $0xc] sm:$0xf]
  %v22 = vld [vmem:[%s1] sm:$0xf]
  %v23 = vld [vmem:[%s1 + $0x4] sm:$0xf]
  %v24 = vld [vmem:[%s1 + $0x8] sm:$0xf]
  %v25 = vld [vmem:[%s1 + $0xc] sm:$0xf]
  %v26 = vld [vmem:[%s2] sm:$0xf]
  %v27 = vld [vmem:[%s2 + $0x4] sm:$0xf]
  %v28 = vld [vmem:[%s2 + $0x8] sm:$0xf]
  %v29 = vld [vmem:[%s2 + $0xc] sm:$0xf]
  %v30 = vld [vmem:[%s3] sm:$0xf]
  %v31 = vld [vmem:[%s3 + $0x4] sm:$0xf]
  %v32 = vld [vmem:[%s3 + $0x8] sm:$0xf]
  %v33 = vld [vmem:[%s3 + $0xc] sm:$0xf]
  %v38 = vunpack.c.l.b16 %v26
  %v39 = vunpack.c.l.b16 %v27
  %v40 = vunpack.c.l.b16 %v28
  %v41 = vunpack.c.l.b16 %v29
  %v42 = vpack.c.b16 %v39, %v38
  %v43 = vpack.c.b16 %v41, %v40
  %v48 = vunpack.c.l.b16 %v30
  %v49 = vunpack.c.l.b16 %v31
  %v50 = vunpack.c.l.b16 %v32
  %v51 = vunpack.c.l.b16 %v33
  %v52 = vpack.c.b16 %v49, %v48
  %v53 = vpack.c.b16 %v51, %v50
  %vm56 = vcmask 261120
  %v58 = vsel %vm56, %v42, 0
  %v61 = vsel %vm56, %v43, 0
  %63 = vmatprep.subr.bf16.mxu0 0
  %64 = vmatpush1.bf16.msra.mxu0 0
  %65 = vmatprep.subr.bf16.mxu0 0
  %66 = vmatpush1.bf16.msra.mxu0 0
  %67 = vmatprep.subr.bf16.mxu0 0
  %68 = vmatpush1.bf16.msra.mxu0 0
  %69 = vmatprep.subr.bf16.mxu0 0
  %70 = vmatpush1.bf16.msra.mxu0 0
  %71 = vmatprep.subr.bf16.mxu0 0
  %72 = vmatpush1.bf16.msra.mxu0 0
  %73 = vmatprep.subr.bf16.mxu0 0
  %74 = vmatpush1.bf16.msra.mxu0 0
  %75 = vmatprep.subr.bf16.mxu0 0
  %76 = vmatpush1.bf16.msra.mxu0 %v53
  %77 = vmatprep.subr.bf16.mxu0 0
  %78 = vmatpush1.bf16.msra.mxu0 %v52
  %79 = vmatprep.subr.bf16.mxu0 0
  %80 = vmatpush2.bf16.msra.mxu0 0
  %81 = vmatprep.subr.bf16.mxu0 0
  %82 = vmatpush2.bf16.msra.mxu0 0
  %83 = vmatprep.subr.bf16.mxu0 0
  %84 = vmatpush2.bf16.msra.mxu0 0
  %85 = vmatprep.subr.bf16.mxu0 0
  %86 = vmatpush2.bf16.msra.mxu0 0
  %87 = vmatprep.subr.bf16.mxu0 0
  %88 = vmatpush2.bf16.msra.mxu0 0
  %89 = vmatprep.subr.bf16.mxu0 0
  %90 = vmatpush2.bf16.msra.mxu0 0
  %91 = vmatprep.subr.bf16.mxu0 0
  %92 = vmatpush2.bf16.msra.mxu0 0
  %93 = vmatprep.subr.bf16.mxu0 0
  %94 = vmatpush2.bf16.msra.mxu0 0
  %95 = vmatprep.mubr.bf16.mxu0 0
  %96 = vmatmul.mubr.bf16.gmra.mxu0 %v58
  %v97 = vpop.f32.mrf.mxu0
  %v98 = vadd.f32 0.0, %v97
  %v99 = vpop.f32.mrf.mxu0
  %v100 = vpop.f32.mrf.mxu0
  %v101 = vadd.f32 0.0, %v100
  %v102 = vpop.f32.mrf.mxu0
  %103 = vmatprep.mubr.bf16.mxu0 0
  %104 = vmatmul.mubr.bf16.gmra.mxu0 %v61
  %v105 = vpop.f32.mrf.mxu0
  %v106 = vadd.f32 0.0, %v105
  %v107 = vpop.f32.mrf.mxu0
  %v108 = vpop.f32.mrf.mxu0
  %v109 = vadd.f32 0.0, %v108
  %v110 = vpop.f32.mrf.mxu0
  %111 = vdwg.mxu0
  %v116 = vunpack.c.l.b16 %v18
  %v117 = vunpack.c.l.b16 %v19
  %v118 = vunpack.c.l.b16 %v20
  %v119 = vunpack.c.l.b16 %v21
  %v120 = vpack.c.b16 %v117, %v116
  %v121 = vpack.c.b16 %v119, %v118
  %v126 = vunpack.c.l.b16 %v22
  %v127 = vunpack.c.l.b16 %v23
  %v128 = vunpack.c.l.b16 %v24
  %v129 = vunpack.c.l.b16 %v25
  %v130 = vpack.c.b16 %v127, %v126
  %v131 = vpack.c.b16 %v129, %v128
  %v135 = vsel %vm56, %v120, 0
  %v138 = vsel %vm56, %v121, 0
  %140 = vmatprep.subr.bf16.mxu0 0
  %141 = vmatpush1.bf16.msra.mxu0 0
  %142 = vmatprep.subr.bf16.mxu0 0
  %143 = vmatpush1.bf16.msra.mxu0 0
  %144 = vmatprep.subr.bf16.mxu0 0
  %145 = vmatpush1.bf16.msra.mxu0 0
  %146 = vmatprep.subr.bf16.mxu0 0
  %147 = vmatpush1.bf16.msra.mxu0 0
  %148 = vmatprep.subr.bf16.mxu0 0
  %149 = vmatpush1.bf16.msra.mxu0 0
  %150 = vmatprep.subr.bf16.mxu0 0
  %151 = vmatpush1.bf16.msra.mxu0 0
  %152 = vmatprep.subr.bf16.mxu0 0
  %153 = vmatpush1.bf16.msra.mxu0 %v131
  %154 = vmatprep.subr.bf16.mxu0 0
  %155 = vmatpush1.bf16.msra.mxu0 %v130
  %156 = vmatprep.subr.bf16.mxu0 0
  %157 = vmatpush2.bf16.msra.mxu0 0
  %158 = vmatprep.subr.bf16.mxu0 0
  %159 = vmatpush2.bf16.msra.mxu0 0
  %160 = vmatprep.subr.bf16.mxu0 0
  %161 = vmatpush2.bf16.msra.mxu0 0
  %162 = vmatprep.subr.bf16.mxu0 0
  %163 = vmatpush2.bf16.msra.mxu0 0
  %164 = vmatprep.subr.bf16.mxu0 0
  %165 = vmatpush2.bf16.msra.mxu0 0
  %166 = vmatprep.subr.bf16.mxu0 0
  %167 = vmatpush2.bf16.msra.mxu0 0
  %168 = vmatprep.subr.bf16.mxu0 0
  %169 = vmatpush2.bf16.msra.mxu0 0
  %170 = vmatprep.subr.bf16.mxu0 0
  %171 = vmatpush2.bf16.msra.mxu0 0
  %172 = vmatprep.mubr.bf16.mxu0 0
  %173 = vmatmul.mubr.bf16.gmra.mxu0 %v135
  %v174 = vpop.f32.mrf.mxu0
  %v175 = vadd.f32 %v98, %v174
  %v176 = vpop.f32.mrf.mxu0
  %v177 = vpop.f32.mrf.mxu0
  %v178 = vadd.f32 %v101, %v177
  %v179 = vpop.f32.mrf.mxu0
  %180 = vmatprep.mubr.bf16.mxu0 0
  %181 = vmatmul.mubr.bf16.gmra.mxu0 %v138
  %v182 = vpop.f32.mrf.mxu0
  %v183 = vadd.f32 %v106, %v182
  %v184 = vpop.f32.mrf.mxu0
  %v185 = vpop.f32.mrf.mxu0
  %v186 = vadd.f32 %v109, %v185
  %v187 = vpop.f32.mrf.mxu0
  %188 = vdwg.mxu0
  %v189 = vpack.c.bf16 %v178, %v175
  %v190 = vpack.c.bf16 %v186, %v183
  %v193 = vunpack.c.l.b16 %v189
  %v194 = vunpack.c.h.b16 %v189
  %v195 = vunpack.c.l.b16 %v190
  %v196 = vunpack.c.h.b16 %v190
  %v197 = vpack.c.b16 %v193, %v193
  %v198 = vpack.c.b16 %v194, %v194
  %v199 = vpack.c.b16 %v195, %v195
  %v200 = vpack.c.b16 %v196, %v196
  %205 = vst [vmem:[%s4] sm:$0xf] %v197
  %206 = vst [vmem:[%s4 + $0x4] sm:$0xf] %v198
  %207 = vst [vmem:[%s4 + $0x8] sm:$0xf] %v199
  %208 = vst [vmem:[%s4 + $0xc] sm:$0xf] %v200
  // Predicated region
  $region18: #{forward.12} parent=0 // pred_check
    _
  $region19: #{forward.12} parent=0 // pred_check_branch
    %210 = sbr.rel (0) target = $region21
  $region20: #{forward.12} parent=0 // pred_region
    _
  $region21: #{forward.12} parent=0 // pred_fallthru
    _
  // Predicated region
  $region22: #{forward.12} parent=0 // pred_check
    _
  $region23: #{forward.12} parent=0 // pred_check_branch
    %212 = sbr.rel (0) target = $region25
  $region24: #{forward.12} parent=0 // pred_region
    _
  $region25: #{forward.12} parent=0 // pred_fallthru
    _

// kernel: forward.13
$region0: #{forward.13}
  #allocation0 [shape = 'u32[]', space=smem, size = 0x4, offset = 0x4, fixed_abs, tag = 'smem constant byte address 0x4 - core index']
  #allocation1 [shape = 'u32[144,128]{1,0:T(1,128)}', space=vmem, size = 0x12000, scoped, tag = 'internal scratch']
  %s0 = inlined_call_operand.vmem [shape: bf16[64,32], index: 0, kind: input, shape index: {}]
  %s1 = inlined_call_operand.vmem [shape: bf16[32,128], index: 1, kind: input, shape index: {}]
  %s2 = inlined_call_operand.vmem [shape: f32[64,1], index: 2, kind: input, shape index: {}]
  %s3 = inlined_call_operand.vmem [shape: bf16[64,128], index: 3, kind: output, shape index: {}]
  %s4 = sld [smem:[#allocation0]]
  $region22: #{forward.13} parent=0
    _
  %s6 = ssub.s32 1, %s4
  %s7 = scalar_select 0, %s6, %s4
  // Predicated region
  $region2: #{forward.13} parent=0 // pred_check
    _
  $region3: #{forward.13} parent=0 // pred_check_branch
    %9 = sbr.rel (0) target = $region5
  $region4: #{forward.13} parent=0 // pred_region
    _
  $region5: #{forward.13} parent=0 // pred_fallthru
    _
  // Predicated region
  $region6: #{forward.13} parent=0 // pred_check
    _
  $region7: #{forward.13} parent=0 // pred_check_branch
    %11 = sbr.rel (0) target = $region9
  $region8: #{forward.13} parent=0 // pred_region
    _
  $region9: #{forward.13} parent=0 // pred_fallthru
    _
  // Predicated region
  $region10: #{forward.13} parent=0 // pred_check
    _
  $region11: #{forward.13} parent=0 // pred_check_branch
    %13 = sbr.rel (0) target = $region13
  $region12: #{forward.13} parent=0 // pred_region
    _
  $region13: #{forward.13} parent=0 // pred_fallthru
    _
  %v15 = vld [vmem:[%s0] sm:$0xf]
  %v16 = vld [vmem:[%s0 + $0x4] sm:$0xf]
  %v17 = vld [vmem:[%s0 + $0x8] sm:$0xf]
  %v18 = vld [vmem:[%s0 + $0xc] sm:$0xf]
  %v19 = vld [vmem:[%s0 + $0x10] sm:$0xf]
  %v20 = vld [vmem:[%s0 + $0x14] sm:$0xf]
  %v21 = vld [vmem:[%s0 + $0x18] sm:$0xf]
  %v22 = vld [vmem:[%s0 + $0x1c] sm:$0xf]
  %v23 = vld [vmem:[%s1] sm:$0xf]
  %v24 = vld [vmem:[%s1 + $0x4] sm:$0xf]
  %v25 = vld [vmem:[%s1 + $0x8] sm:$0xf]
  %v26 = vld [vmem:[%s1 + $0xc] sm:$0xf]
  %v27 = vld [vmem:[%s2] sm:$0xff]
  %v28 = vld [vmem:[%s2 + $0x8] sm:$0xff]
  %v29 = vld [vmem:[%s2 + $0x10] sm:$0xff]
  %v30 = vld [vmem:[%s2 + $0x18] sm:$0xff]
  %v31 = vld [vmem:[%s2 + $0x20] sm:$0xff]
  %v32 = vld [vmem:[%s2 + $0x28] sm:$0xff]
  %v33 = vld [vmem:[%s2 + $0x30] sm:$0xff]
  %v34 = vld [vmem:[%s2 + $0x38] sm:$0xff]
  %36 = vset.pattern.permute.xlu0 0
  %37 = vperm.xlu0 %36, %v27
  %v38 = vpop.permute.xlu0 %37
  %41 = vset.pattern.permute.xlu0 0
  %42 = vperm.xlu0 %41, %v28
  %v43 = vpop.permute.xlu0 %42
  %46 = vset.pattern.permute.xlu0 0
  %47 = vperm.xlu0 %46, %v29
  %v48 = vpop.permute.xlu0 %47
  %51 = vset.pattern.permute.xlu0 0
  %52 = vperm.xlu0 %51, %v30
  %v53 = vpop.permute.xlu0 %52
  %56 = vset.pattern.permute.xlu0 0
  %57 = vperm.xlu0 %56, %v31
  %v58 = vpop.permute.xlu0 %57
  %61 = vset.pattern.permute.xlu0 0
  %62 = vperm.xlu0 %61, %v32
  %v63 = vpop.permute.xlu0 %62
  %66 = vset.pattern.permute.xlu0 0
  %67 = vperm.xlu0 %66, %v33
  %v68 = vpop.permute.xlu0 %67
  %71 = vset.pattern.permute.xlu0 0
  %72 = vperm.xlu0 %71, %v34
  %v73 = vpop.permute.xlu0 %72
  %v83 = vunpack.c.l.b16 %v15
  %v84 = vunpack.c.l.b16 %v16
  %v85 = vunpack.c.l.b16 %v17
  %v86 = vunpack.c.l.b16 %v18
  %v87 = vunpack.c.l.b16 %v19
  %v88 = vunpack.c.l.b16 %v20
  %v89 = vunpack.c.l.b16 %v21
  %v90 = vunpack.c.l.b16 %v22
  %v91 = vpack.c.b16 %v84, %v83
  %v92 = vpack.c.b16 %v86, %v85
  %v93 = vpack.c.b16 %v88, %v87
  %v94 = vpack.c.b16 %v90, %v89
  %v99 = vunpack.c.l.b16 %v23
  %v100 = vunpack.c.l.b16 %v24
  %v101 = vunpack.c.l.b16 %v25
  %v102 = vunpack.c.l.b16 %v26
  %v103 = vpack.c.b16 %v100, %v99
  %v104 = vpack.c.b16 %v102, %v101
  %vm107 = vcmask 261120
  %v109 = vsel %vm107, %v91, 0
  %v112 = vsel %vm107, %v92, 0
  %v115 = vsel %vm107, %v93, 0
  %v118 = vsel %vm107, %v94, 0
  %120 = vmatprep.subr.bf16.mxu0 0
  %121 = vmatpush1.bf16.msra.mxu0 0
  %122 = vmatprep.subr.bf16.mxu0 0
  %123 = vmatpush1.bf16.msra.mxu0 0
  %124 = vmatprep.subr.bf16.mxu0 0
  %125 = vmatpush1.bf16.msra.mxu0 0
  %126 = vmatprep.subr.bf16.mxu0 0
  %127 = vmatpush1.bf16.msra.mxu0 0
  %128 = vmatprep.subr.bf16.mxu0 0
  %129 = vmatpush1.bf16.msra.mxu0 0
  %130 = vmatprep.subr.bf16.mxu0 0
  %131 = vmatpush1.bf16.msra.mxu0 0
  %132 = vmatprep.subr.bf16.mxu0 0
  %133 = vmatpush1.bf16.msra.mxu0 %v104
  %134 = vmatprep.subr.bf16.mxu0 0
  %135 = vmatpush1.bf16.msra.mxu0 %v103
  %136 = vmatprep.subr.bf16.mxu0 0
  %137 = vmatpush2.bf16.msra.mxu0 0
  %138 = vmatprep.subr.bf16.mxu0 0
  %139 = vmatpush2.bf16.msra.mxu0 0
  %140 = vmatprep.subr.bf16.mxu0 0
  %141 = vmatpush2.bf16.msra.mxu0 0
  %142 = vmatprep.subr.bf16.mxu0 0
  %143 = vmatpush2.bf16.msra.mxu0 0
  %144 = vmatprep.subr.bf16.mxu0 0
  %145 = vmatpush2.bf16.msra.mxu0 0
  %146 = vmatprep.subr.bf16.mxu0 0
  %147 = vmatpush2.bf16.msra.mxu0 0
  %148 = vmatprep.subr.bf16.mxu0 0
  %149 = vmatpush2.bf16.msra.mxu0 0
  %150 = vmatprep.subr.bf16.mxu0 0
  %151 = vmatpush2.bf16.msra.mxu0 0
  %152 = vmatprep.mubr.bf16.mxu0 0
  %153 = vmatmul.mubr.bf16.gmra.mxu0 %v109
  %v154 = vpop.f32.mrf.mxu0
  %v155 = vadd.f32 %v38, %v154
  %v156 = vpop.f32.mrf.mxu0
  %v157 = vpop.f32.mrf.mxu0
  %v158 = vadd.f32 %v43, %v157
  %v159 = vpop.f32.mrf.mxu0
  %160 = vmatprep.mubr.bf16.mxu0 0
  %161 = vmatmul.mubr.bf16.gmra.mxu0 %v112
  %v162 = vpop.f32.mrf.mxu0
  %v163 = vadd.f32 %v48, %v162
  %v164 = vpop.f32.mrf.mxu0
  %v165 = vpop.f32.mrf.mxu0
  %v166 = vadd.f32 %v53, %v165
  %v167 = vpop.f32.mrf.mxu0
  %168 = vmatprep.mubr.bf16.mxu0 0
  %169 = vmatmul.mubr.bf16.gmra.mxu0 %v115
  %v170 = vpop.f32.mrf.mxu0
  %v171 = vadd.f32 %v58, %v170
  %v172 = vpop.f32.mrf.mxu0
  %v173 = vpop.f32.mrf.mxu0
  %v174 = vadd.f32 %v63, %v173
  %v175 = vpop.f32.mrf.mxu0
  %176 = vmatprep.mubr.bf16.mxu0 0
  %177 = vmatmul.mubr.bf16.gmra.mxu0 %v118
  %v178 = vpop.f32.mrf.mxu0
  %v179 = vadd.f32 %v68, %v178
  %v180 = vpop.f32.mrf.mxu0
  %v181 = vpop.f32.mrf.mxu0
  %v182 = vadd.f32 %v73, %v181
  %v183 = vpop.f32.mrf.mxu0
  %184 = vdwg.mxu0
  %v185 = vpack.c.bf16 %v158, %v155
  %v186 = vpack.c.bf16 %v166, %v163
  %v187 = vpack.c.bf16 %v174, %v171
  %v188 = vpack.c.bf16 %v182, %v179
  %v193 = vunpack.c.l.b16 %v185
  %v194 = vunpack.c.h.b16 %v185
  %v195 = vunpack.c.l.b16 %v186
  %v196 = vunpack.c.h.b16 %v186
  %v197 = vunpack.c.l.b16 %v187
  %v198 = vunpack.c.h.b16 %v187
  %v199 = vunpack.c.l.b16 %v188
  %v200 = vunpack.c.h.b16 %v188
  %v201 = vpack.c.b16 %v193, %v193
  %v202 = vpack.c.b16 %v194, %v194
  %v203 = vpack.c.b16 %v195, %v195
  %v204 = vpack.c.b16 %v196, %v196
  %v205 = vpack.c.b16 %v197, %v197
  %v206 = vpack.c.b16 %v198, %v198
  %v207 = vpack.c.b16 %v199, %v199
  %v208 = vpack.c.b16 %v200, %v200
  %217 = vst [vmem:[%s3] sm:$0xf] %v201
  %218 = vst [vmem:[%s3 + $0x4] sm:$0xf] %v202
  %219 = vst [vmem:[%s3 + $0x8] sm:$0xf] %v203
  %220 = vst [vmem:[%s3 + $0xc] sm:$0xf] %v204
  %221 = vst [vmem:[%s3 + $0x10] sm:$0xf] %v205
  %222 = vst [vmem:[%s3 + $0x14] sm:$0xf] %v206
  %223 = vst [vmem:[%s3 + $0x18] sm:$0xf] %v207
  %224 = vst [vmem:[%s3 + $0x1c] sm:$0xf] %v208
  // Predicated region
  $region14: #{forward.13} parent=0 // pred_check
    _
  $region15: #{forward.13} parent=0 // pred_check_branch
    %226 = sbr.rel (0) target = $region17
  $region16: #{forward.13} parent=0 // pred_region
    _
  $region17: #{forward.13} parent=0 // pred_fallthru
    _
  // Predicated region
  $region18: #{forward.13} parent=0 // pred_check
    _
  $region19: #{forward.13} parent=0 // pred_check_branch
    %228 = sbr.rel (0) target = $region21
  $region20: #{forward.13} parent=0 // pred_region
    _
  $region21: #{forward.13} parent=0 // pred_fallthru
    _

// kernel: forward.14
$region0: #{forward.14}
  #allocation0 [shape = 'u32[]', space=smem, size = 0x4, offset = 0x4, fixed_abs, tag = 'smem constant byte address 0x4 - core index']
  #allocation1 [shape = 'u32[144,128]{1,0:T(1,128)}', space=vmem, size = 0x12000, scoped, tag = 'internal scratch']
  %s0 = inlined_call_operand.vmem [shape: bf16[16,16], index: 0, kind: input, shape index: {}]
  %s1 = inlined_call_operand.vmem [shape: bf16[16,512], index: 1, kind: input, shape index: {}]
  %s2 = inlined_call_operand.vmem [shape: bf16[16,16], index: 2, kind: input, shape index: {}]
  %s3 = inlined_call_operand.vmem [shape: bf16[16,512], index: 3, kind: input, shape index: {}]
  %s4 = inlined_call_operand.vmem [shape: bf16[16,512], index: 4, kind: output, shape index: {}]
  %s5 = sld [smem:[#allocation0]]
  $region159: #{forward.14} parent=0
    _
  %s7 = ssub.s32 1, %s5
  %s8 = scalar_select 0, %s7, %s5
  $region1: #{forward.14} parent=0
    #allocation2 [shape = 'u8[16384]{0}', space=vmem, size = 0x4000, scoped, tag = 'input window, operand 1']
    #allocation3 [shape = 'u8[16384]{0}', space=vmem, size = 0x4000, scoped, tag = 'input window, operand 3']
    #allocation4 [shape = 'u8[16384]{0}', space=vmem, size = 0x4000, scoped, tag = 'output window, operand 0']
    loop: start=0, step=1, limit=4
    $region2: #{forward.14} parent=1 // loop_pre_header
      _
    $region3: #{forward.14} parent=1 // loop_header
      %s10 = sphi 0, %s14
      %p11 = scmp.ge.s32.totalorder %s10, 4
      %s18 = sphi 0, %s18
      %s20 = sphi 0, %s18
      %s21 = sphi 0, %s20
      %s35 = sphi 0, %s21
      %s41 = sphi 0, %s43
      %s44 = sphi 0, %s41
      %s45 = sphi 0, %s44
      %s61 = sphi 0, %s45
      %s65 = sphi 0, %s65
      %s67 = sphi 0, %s65
      %s68 = sphi 0, %s67
      %s82 = sphi 0, %s68
      %s88 = sphi 0, %s90
      %s91 = sphi 0, %s88
      %s92 = sphi 0, %s91
      %s108 = sphi 0, %s92
      %s114 = sphi 0, %s116
      %s117 = sphi 0, %s114
      %s118 = sphi 0, %s117
      %s134 = sphi 0, %s118
    $region4: #{forward.14} parent=1 // loop_header_branch
      %13 = sbr.rel (%p11) target = $region8
    $region5: #{forward.14} parent=1 // loop_body
      %s15 = ssub.s32 %s10, 1
      %s16 = ssub.s32 %s10, 2
      %s17 = sadd.s32 %s10, 1
      %s19 = sadd.s32 %s18, 1
      %p22 = scmp.eq.s32.totalorder %s10, 1
      %p23 = scmp.ne.s32.totalorder %s18, %s20
      %p24 = scmp.eq.s32.totalorder %s10, 0
      %p25 = por %p23, %p24
      %p26 = scmp.ne.s32.totalorder %s18, %s20
      %p27 = scmp.eq.s32.totalorder %s15, 1
      %p28 = por %p26, %p27
      %p29 = scmp.ne.s32.totalorder %s20, %s21
      %p30 = scmp.eq.s32.totalorder %s15, 0
      %p31 = por %p29, %p30
      %p32 = scmp.ne.s32.totalorder %s20, %s21
      %p33 = scmp.eq.s32.totalorder %s16, 1
      %p34 = por %p32, %p33
      %p36 = scmp.ne.s32.totalorder %s21, %s35
      %p37 = scmp.eq.s32.totalorder %s16, 0
      %p38 = por %p36, %p37
      %s39 = ssub.s32 %s10, %s17
      %p40 = scmp.eq.s32.totalorder %s39, 0
      %s42 = sadd.s32 %s41, 1
      %s43 = scalar_select %p40, %s41, %s42
      %p46 = pneg %p40
      %p47 = scmp.eq.s32.totalorder %s10, 1
      %p48 = por %p46, %p47
      %p49 = scmp.ne.s32.totalorder %s41, %s44
      %p50 = scmp.eq.s32.totalorder %s10, 0
      %p51 = por %p49, %p50
      %p52 = scmp.ne.s32.totalorder %s41, %s44
      %p53 = scmp.eq.s32.totalorder %s15, 1
      %p54 = por %p52, %p53
      %p55 = scmp.ne.s32.totalorder %s44, %s45
      %p56 = scmp.eq.s32.totalorder %s15, 0
      %p57 = por %p55, %p56
      %p58 = scmp.ne.s32.totalorder %s44, %s45
      %p59 = scmp.eq.s32.totalorder %s16, 1
      %p60 = por %p58, %p59
      %p62 = scmp.ne.s32.totalorder %s45, %s61
      %p63 = scmp.eq.s32.totalorder %s16, 0
      %p64 = por %p62, %p63
      %s66 = sadd.s32 %s65, 1
      %p69 = scmp.eq.s32.totalorder %s10, 1
      %p70 = scmp.ne.s32.totalorder %s65, %s67
      %p71 = scmp.eq.s32.totalorder %s10, 0
      %p72 = por %p70, %p71
      %p73 = scmp.ne.s32.totalorder %s65, %s67
      %p74 = scmp.eq.s32.totalorder %s15, 1
      %p75 = por %p73, %p74
      %p76 = scmp.ne.s32.totalorder %s67, %s68
      %p77 = scmp.eq.s32.totalorder %s15, 0
      %p78 = por %p76, %p77
      %p79 = scmp.ne.s32.totalorder %s67, %s68
      %p80 = scmp.eq.s32.totalorder %s16, 1
      %p81 = por %p79, %p80
      %p83 = scmp.ne.s32.totalorder %s68, %s82
      %p84 = scmp.eq.s32.totalorder %s16, 0
      %p85 = por %p83, %p84
      %s86 = ssub.s32 %s10, %s17
      %p87 = scmp.eq.s32.totalorder %s86, 0
      %s89 = sadd.s32 %s88, 1
      %s90 = scalar_select %p87, %s88, %s89
      %p93 = pneg %p87
      %p94 = scmp.eq.s32.totalorder %s10, 1
      %p95 = por %p93, %p94
      %p96 = scmp.ne.s32.totalorder %s88, %s91
      %p97 = scmp.eq.s32.totalorder %s10, 0
      %p98 = por %p96, %p97
      %p99 = scmp.ne.s32.totalorder %s88, %s91
      %p100 = scmp.eq.s32.totalorder %s15, 1
      %p101 = por %p99, %p100
      %p102 = scmp.ne.s32.totalorder %s91, %s92
      %p103 = scmp.eq.s32.totalorder %s15, 0
      %p104 = por %p102, %p103
      %p105 = scmp.ne.s32.totalorder %s91, %s92
      %p106 = scmp.eq.s32.totalorder %s16, 1
      %p107 = por %p105, %p106
      %p109 = scmp.ne.s32.totalorder %s92, %s108
      %p110 = scmp.eq.s32.totalorder %s16, 0
      %p111 = por %p109, %p110
      %s112 = ssub.s32 %s10, %s17
      %p113 = scmp.eq.s32.totalorder %s112, 0
      %s115 = sadd.s32 %s114, 1
      %s116 = scalar_select %p113, %s114, %s115
      %p119 = pneg %p113
      %p120 = scmp.eq.s32.totalorder %s10, 1
      %p121 = por %p119, %p120
      %p122 = scmp.ne.s32.totalorder %s114, %s117
      %p123 = scmp.eq.s32.totalorder %s10, 0
      %p124 = por %p122, %p123
      %p125 = scmp.ne.s32.totalorder %s114, %s117
      %p126 = scmp.eq.s32.totalorder %s15, 1
      %p127 = por %p125, %p126
      %p128 = scmp.ne.s32.totalorder %s117, %s118
      %p129 = scmp.eq.s32.totalorder %s15, 0
      %p130 = por %p128, %p129
      %p131 = scmp.ne.s32.totalorder %s117, %s118
      %p132 = scmp.eq.s32.totalorder %s16, 1
      %p133 = por %p131, %p132
      %p135 = scmp.ne.s32.totalorder %s118, %s134
      %p136 = scmp.eq.s32.totalorder %s16, 0
      %p137 = por %p135, %p136
      %p138 = scmp.le.s32.totalorder 1, %s10
      %p139 = scmp.lt.s32.totalorder %s10, 3
      %p140 = pnand %p138, %p139
      %p141 = pneg %p140
      // Predicated region
      $region9: #{forward.14} parent=5 // pred_check
        _
      $region10: #{forward.14} parent=5 // pred_check_branch
        %143 = sbr.rel (%p140) target = $region12
      $region11: #{forward.14} parent=5 // pred_region
        %s144 = ssub.s32 %s10, 1
        // Predicated region
        $region13: #{forward.14} parent=11 // pred_check
          %p145 = pneg %p31
        $region14: #{forward.14} parent=11 // pred_check_branch
          %147 = sbr.rel (%p145) target = $region16
        $region15: #{forward.14} parent=11 // pred_region
          _
        $region16: #{forward.14} parent=11 // pred_fallthru
          _
        // Predicated region
        $region17: #{forward.14} parent=11 // pred_check
          %p148 = pneg %p78
        $region18: #{forward.14} parent=11 // pred_check_branch
          %150 = sbr.rel (%p148) target = $region20
        $region19: #{forward.14} parent=11 // pred_region
          _
        $region20: #{forward.14} parent=11 // pred_fallthru
          _
      $region12: #{forward.14} parent=5 // pred_fallthru
        _
      %p151 = scmp.lt.s32.totalorder %s10, 2
      // Predicated region
      $region21: #{forward.14} parent=5 // pred_check
        %p152 = pneg %p151
      $region22: #{forward.14} parent=5 // pred_check_branch
        %154 = sbr.rel (%p152) target = $region24
      $region23: #{forward.14} parent=5 // pred_region
        // Predicated region
        $region25: #{forward.14} parent=23 // pred_check
          %p155 = pneg %p51
        $region26: #{forward.14} parent=23 // pred_check_branch
          %157 = sbr.rel (%p155) target = $region28
        $region27: #{forward.14} parent=23 // pred_region
          %s158 = sand.u32 %s41, 1
          %s159 = sand.u32 %s41, 1
          %s160 = smul.addr %s159, 16
          %s161 = scalar_lea.vmem [#allocation2], %s160
          %s162 = smul.u32 2, %s10
          %s163 = smul.addr %s162, 4
          %s164 = scalar_lea.vmem %s1, %s163
          // Predicated region
          $region29: #{forward.14} parent=27 // pred_check
            _
          $region30: #{forward.14} parent=27 // pred_check_branch
            %166 = sbr.rel (0) target = $region32
          $region31: #{forward.14} parent=27 // pred_region
            // Predicated region
            $region33: #{forward.14} parent=31 // pred_check
              _
            $region34: #{forward.14} parent=31 // pred_check_branch
              %168 = sbr.rel (0) target = $region36
            $region35: #{forward.14} parent=31 // pred_region
              // Predicated region
              $region48: #{forward.14} parent=35 // pred_check
                _
              $region49: #{forward.14} parent=35 // pred_check_branch
                %186 = sbr.rel (0) target = $region51
              $region50: #{forward.14} parent=35 // pred_region
                loop: start=0, step=1, limit=1
                $region52: #{forward.14} parent=50 // loop_pre_header
                  _
                $region53: #{forward.14} parent=50 // loop_header
                  %s188 = sphi 0, %s192
                  %p189 = scmp.ge.s32.totalorder %s188, 1
                  %s193 = sphi %s164, %s164
                  %s194 = sphi %s161, %s161
                $region54: #{forward.14} parent=50 // loop_header_branch
                  %191 = sbr.rel (%p189) target = $region58
                $region55: #{forward.14} parent=50 // loop_body
                  %v195 = vld [vmem:[%s193] sm:$0xff]
                  %196 = vst [vmem:[%s194] sm:$0xff] %v195
                  %v197 = vld [vmem:[%s193 + $0x10] sm:$0xff]
                  %198 = vst [vmem:[%s194 + $0x8] sm:$0xff] %v197
                $region56: #{forward.14} parent=50 // loop_footer
                  %s192 = sadd.s32 1, %s188
                $region57: #{forward.14} parent=50 // loop_footer_branch
                  %187 = sbr.rel target = $region53
                $region58: #{forward.14} parent=50 // loop_exit
                  _
              $region51: #{forward.14} parent=35 // pred_fallthru
                _
              // Predicated region
              $region59: #{forward.14} parent=35 // pred_check
                _
              $region60: #{forward.14} parent=35 // pred_check_branch
                %200 = sbr.rel target = $region62
              $region61: #{forward.14} parent=35 // pred_region
                _
              $region62: #{forward.14} parent=35 // pred_fallthru
                _
            $region36: #{forward.14} parent=31 // pred_fallthru
              _
            // Predicated region
            $region37: #{forward.14} parent=31 // pred_check
              _
            $region38: #{forward.14} parent=31 // pred_check_branch
              %170 = sbr.rel target = $region40
            $region39: #{forward.14} parent=31 // pred_region
              %s172 = ssub.s32 256, 1
              loop: start=0, step=1, limit=1
              $region41: #{forward.14} parent=39 // loop_pre_header
                _
              $region42: #{forward.14} parent=39 // loop_header
                %s174 = sphi 0, %s178
                %p175 = scmp.ge.s32.totalorder %s174, 1
                %s179 = sphi %s164, %s164
                %s180 = sphi %s161, %s161
              $region43: #{forward.14} parent=39 // loop_header_branch
                %177 = sbr.rel (%p175) target = $region47
              $region44: #{forward.14} parent=39 // loop_body
                %v181 = vld [vmem:[%s179] sm:%s172]
                %182 = vst [vmem:[%s180] sm:%s172] %v181
                %v183 = vld [vmem:[%s179 + $0x10] sm:%s172]
                %184 = vst [vmem:[%s180 + $0x8] sm:%s172] %v183
              $region45: #{forward.14} parent=39 // loop_footer
                %s178 = sadd.s32 1, %s174
              $region46: #{forward.14} parent=39 // loop_footer_branch
                %173 = sbr.rel target = $region42
              $region47: #{forward.14} parent=39 // loop_exit
                _
            $region40: #{forward.14} parent=31 // pred_fallthru
              _
          $region32: #{forward.14} parent=27 // pred_fallthru
            _
          %201 = vnop
        $region28: #{forward.14} parent=23 // pred_fallthru
          _
        // Predicated region
        $region63: #{forward.14} parent=23 // pred_check
          %p202 = pneg %p98
        $region64: #{forward.14} parent=23 // pred_check_branch
          %204 = sbr.rel (%p202) target = $region66
        $region65: #{forward.14} parent=23 // pred_region
          %s205 = sand.u32 %s88, 1
          %s206 = sand.u32 %s88, 1
          %s207 = smul.addr %s206, 16
          %s208 = scalar_lea.vmem [#allocation3], %s207
          %s209 = smul.u32 2, %s10
          %s210 = smul.addr %s209, 4
          %s211 = scalar_lea.vmem %s3, %s210
          // Predicated region
          $region67: #{forward.14} parent=65 // pred_check
            _
          $region68: #{forward.14} parent=65 // pred_check_branch
            %213 = sbr.rel (0) target = $region70
          $region69: #{forward.14} parent=65 // pred_region
            // Predicated region
            $region71: #{forward.14} parent=69 // pred_check
              _
            $region72: #{forward.14} parent=69 // pred_check_branch
              %215 = sbr.rel (0) target = $region74
            $region73: #{forward.14} parent=69 // pred_region
              // Predicated region
              $region86: #{forward.14} parent=73 // pred_check
                _
              $region87: #{forward.14} parent=73 // pred_check_branch
                %233 = sbr.rel (0) target = $region89
              $region88: #{forward.14} parent=73 // pred_region
                loop: start=0, step=1, limit=1
                $region90: #{forward.14} parent=88 // loop_pre_header
                  _
                $region91: #{forward.14} parent=88 // loop_header
                  %s235 = sphi 0, %s239
                  %p236 = scmp.ge.s32.totalorder %s235, 1
                  %s240 = sphi %s211, %s211
                  %s241 = sphi %s208, %s208
                $region92: #{forward.14} parent=88 // loop_header_branch
                  %238 = sbr.rel (%p236) target = $region96
                $region93: #{forward.14} parent=88 // loop_body
                  %v242 = vld [vmem:[%s240] sm:$0xff]
                  %243 = vst [vmem:[%s241] sm:$0xff] %v242
                  %v244 = vld [vmem:[%s240 + $0x10] sm:$0xff]
                  %245 = vst [vmem:[%s241 + $0x8] sm:$0xff] %v244
                $region94: #{forward.14} parent=88 // loop_footer
                  %s239 = sadd.s32 1, %s235
                $region95: #{forward.14} parent=88 // loop_footer_branch
                  %234 = sbr.rel target = $region91
                $region96: #{forward.14} parent=88 // loop_exit
                  _
              $region89: #{forward.14} parent=73 // pred_fallthru
                _
              // Predicated region
              $region97: #{forward.14} parent=73 // pred_check
                _
              $region98: #{forward.14} parent=73 // pred_check_branch
                %247 = sbr.rel target = $region100
              $region99: #{forward.14} parent=73 // pred_region
                _
              $region100: #{forward.14} parent=73 // pred_fallthru
                _
            $region74: #{forward.14} parent=69 // pred_fallthru
              _
            // Predicated region
            $region75: #{forward.14} parent=69 // pred_check
              _
            $region76: #{forward.14} parent=69 // pred_check_branch
              %217 = sbr.rel target = $region78
            $region77: #{forward.14} parent=69 // pred_region
              %s219 = ssub.s32 256, 1
              loop: start=0, step=1, limit=1
              $region79: #{forward.14} parent=77 // loop_pre_header
                _
              $region80: #{forward.14} parent=77 // loop_header
                %s221 = sphi 0, %s225
                %p222 = scmp.ge.s32.totalorder %s221, 1
                %s226 = sphi %s211, %s211
                %s227 = sphi %s208, %s208
              $region81: #{forward.14} parent=77 // loop_header_branch
                %224 = sbr.rel (%p222) target = $region85
              $region82: #{forward.14} parent=77 // loop_body
                %v228 = vld [vmem:[%s226] sm:%s219]
                %229 = vst [vmem:[%s227] sm:%s219] %v228
                %v230 = vld [vmem:[%s226 + $0x10] sm:%s219]
                %231 = vst [vmem:[%s227 + $0x8] sm:%s219] %v230
              $region83: #{forward.14} parent=77 // loop_footer
                %s225 = sadd.s32 1, %s221
              $region84: #{forward.14} parent=77 // loop_footer_branch
                %220 = sbr.rel target = $region80
              $region85: #{forward.14} parent=77 // loop_exit
                _
            $region78: #{forward.14} parent=69 // pred_fallthru
              _
          $region70: #{forward.14} parent=65 // pred_fallthru
            _
          %248 = vnop
        $region66: #{forward.14} parent=23 // pred_fallthru
          _
      $region24: #{forward.14} parent=5 // pred_fallthru
        _
      %p249 = scmp.le.s32.totalorder 1, %s10
      %p250 = scmp.lt.s32.totalorder %s10, 3
      %p251 = pnand %p249, %p250
      %p252 = pneg %p251
      // Predicated region
      $region101: #{forward.14} parent=5 // pred_check
        _
      $region102: #{forward.14} parent=5 // pred_check_branch
        %254 = sbr.rel (%p251) target = $region104
      $region103: #{forward.14} parent=5 // pred_region
        %s255 = ssub.s32 %s10, 1
        %s256 = sand.u32 %s44, 1
        %s257 = sand.u32 %s44, 1
        %s258 = smul.addr %s257, 16
        %s259 = scalar_lea.vmem [#allocation2], %s258
        // Predicated region
        $region105: #{forward.14} parent=103 // pred_check
          %p260 = pneg %p57
        $region106: #{forward.14} parent=103 // pred_check_branch
          %262 = sbr.rel (%p260) target = $region108
        $region107: #{forward.14} parent=103 // pred_region
          _
        $region108: #{forward.14} parent=103 // pred_fallthru
          _
        %s263 = sand.u32 %s91, 1
        %s264 = sand.u32 %s91, 1
        %s265 = smul.addr %s264, 16
        %s266 = scalar_lea.vmem [#allocation3], %s265
        // Predicated region
        $region109: #{forward.14} parent=103 // pred_check
          %p267 = pneg %p104
        $region110: #{forward.14} parent=103 // pred_check_branch
          %269 = sbr.rel (%p267) target = $region112
        $region111: #{forward.14} parent=103 // pred_region
          _
        $region112: #{forward.14} parent=103 // pred_fallthru
          _
        %p270 = pneg %p31
        %p271 = pneg %p28
        %s272 = sand.u32 %s44, 1
        %s273 = sand.u32 %s44, 1
        %s274 = smul.addr %s273, 16
        %s275 = scalar_lea.vmem [#allocation2], %s274
        %p276 = pneg %p57
        %p277 = pneg %p54
        %p278 = pneg %p78
        %p279 = pneg %p75
        %s280 = sand.u32 %s91, 1
        %s281 = sand.u32 %s91, 1
        %s282 = smul.addr %s281, 16
        %s283 = scalar_lea.vmem [#allocation3], %s282
        %p284 = pneg %p104
        %p285 = pneg %p101
        %p286 = pneg %p130
        %p287 = pneg %p127
        %s288 = sand.u32 %s117, 1
        %s289 = sand.u32 %s117, 1
        %s290 = smul.addr %s289, 16
        %s291 = scalar_lea.vmem [#allocation4], %s290
        %s292 = smul.u32 2, %s15
        %s293 = smul.u32 2, %s15
        %s294 = smul.u32 2, %s15
        %v296 = vld [vmem:[%s0] sm:$0xf]
        %v297 = vld [vmem:[%s0 + $0x4] sm:$0xf]
        %v298 = vld [vmem:[%s259] sm:$0xff]
        %v299 = vld [vmem:[%s259 + $0x8] sm:$0xff]
        %v300 = vld [vmem:[%s2] sm:$0xf]
        %v301 = vld [vmem:[%s2 + $0x4] sm:$0xf]
        %v302 = vld [vmem:[%s266] sm:$0xff]
        %v303 = vld [vmem:[%s266 + $0x8] sm:$0xff]
        %v306 = vunpack.c.l.b16 %v300
        %v307 = vunpack.c.l.b16 %v301
        %v308 = vpack.c.b16 %v307, %v306
        %v311 = vunpack.c.l.b16 %v302
        %v312 = vunpack.c.h.b16 %v302
        %v313 = vunpack.c.l.b16 %v303
        %v314 = vunpack.c.h.b16 %v303
        %v315 = vpack.c.b16 %v313, %v311
        %v316 = vpack.c.b16 %v314, %v312
        %vm319 = vcmask 130048
        %v321 = vsel %vm319, %v308, 0
        %323 = vmatprep.subr.bf16.mxu0 0
        %324 = vmatpush1.bf16.msra.mxu0 0
        %325 = vmatprep.subr.bf16.mxu0 0
        %326 = vmatpush1.bf16.msra.mxu0 0
        %327 = vmatprep.subr.bf16.mxu0 0
        %328 = vmatpush1.bf16.msra.mxu0 0
        %329 = vmatprep.subr.bf16.mxu0 0
        %330 = vmatpush1.bf16.msra.mxu0 0
        %331 = vmatprep.subr.bf16.mxu0 0
        %332 = vmatpush1.bf16.msra.mxu0 0
        %333 = vmatprep.subr.bf16.mxu0 0
        %334 = vmatpush1.bf16.msra.mxu0 0
        %335 = vmatprep.subr.bf16.mxu0 0
        %336 = vmatpush1.bf16.msra.mxu0 0
        %337 = vmatprep.subr.bf16.mxu0 %v316
        %338 = vmatpush1.bf16.msra.mxu0 %v315
        %339 = vmatprep.subr.bf16.mxu0 0
        %340 = vmatpush2.bf16.msra.mxu0 0
        %341 = vmatprep.subr.bf16.mxu0 0
        %342 = vmatpush2.bf16.msra.mxu0 0
        %343 = vmatprep.subr.bf16.mxu0 0
        %344 = vmatpush2.bf16.msra.mxu0 0
        %345 = vmatprep.subr.bf16.mxu0 0
        %346 = vmatpush2.bf16.msra.mxu0 0
        %347 = vmatprep.subr.bf16.mxu0 0
        %348 = vmatpush2.bf16.msra.mxu0 0
        %349 = vmatprep.subr.bf16.mxu0 0
        %350 = vmatpush2.bf16.msra.mxu0 0
        %351 = vmatprep.subr.bf16.mxu0 0
        %352 = vmatpush2.bf16.msra.mxu0 0
        %353 = vmatprep.subr.bf16.mxu0 0
        %354 = vmatpush2.bf16.msra.mxu0 0
        %355 = vmatprep.mubr.bf16.mxu0 0
        %356 = vmatmul.mubr.bf16.gmra.mxu0 %v321
        %v357 = vpop.f32.mrf.mxu0
        %v358 = vadd.f32 0.0, %v357
        %v359 = vpop.f32.mrf.mxu0
        %v360 = vadd.f32 0.0, %v359
        %v361 = vpop.f32.mrf.mxu0
        %v362 = vadd.f32 0.0, %v361
        %v363 = vpop.f32.mrf.mxu0
        %v364 = vadd.f32 0.0, %v363
        %365 = vdwg.mxu0
        %v368 = vunpack.c.l.b16 %v296
        %v369 = vunpack.c.l.b16 %v297
        %v370 = vpack.c.b16 %v369, %v368
        %v373 = vunpack.c.l.b16 %v298
        %v374 = vunpack.c.h.b16 %v298
        %v375 = vunpack.c.l.b16 %v299
        %v376 = vunpack.c.h.b16 %v299
        %v377 = vpack.c.b16 %v375, %v373
        %v378 = vpack.c.b16 %v376, %v374
        %v382 = vsel %vm319, %v370, 0
        %384 = vmatprep.subr.bf16.mxu0 0
        %385 = vmatpush1.bf16.msra.mxu0 0
        %386 = vmatprep.subr.bf16.mxu0 0
        %387 = vmatpush1.bf16.msra.mxu0 0
        %388 = vmatprep.subr.bf16.mxu0 0
        %389 = vmatpush1.bf16.msra.mxu0 0
        %390 = vmatprep.subr.bf16.mxu0 0
        %391 = vmatpush1.bf16.msra.mxu0 0
        %392 = vmatprep.subr.bf16.mxu0 0
        %393 = vmatpush1.bf16.msra.mxu0 0
        %394 = vmatprep.subr.bf16.mxu0 0
        %395 = vmatpush1.bf16.msra.mxu0 0
        %396 = vmatprep.subr.bf16.mxu0 0
        %397 = vmatpush1.bf16.msra.mxu0 0
        %398 = vmatprep.subr.bf16.mxu0 %v378
        %399 = vmatpush1.bf16.msra.mxu0 %v377
        %400 = vmatprep.subr.bf16.mxu0 0
        %401 = vmatpush2.bf16.msra.mxu0 0
        %402 = vmatprep.subr.bf16.mxu0 0
        %403 = vmatpush2.bf16.msra.mxu0 0
        %404 = vmatprep.subr.bf16.mxu0 0
        %405 = vmatpush2.bf16.msra.mxu0 0
        %406 = vmatprep.subr.bf16.mxu0 0
        %407 = vmatpush2.bf16.msra.mxu0 0
        %408 = vmatprep.subr.bf16.mxu0 0
        %409 = vmatpush2.bf16.msra.mxu0 0
        %410 = vmatprep.subr.bf16.mxu0 0
        %411 = vmatpush2.bf16.msra.mxu0 0
        %412 = vmatprep.subr.bf16.mxu0 0
        %413 = vmatpush2.bf16.msra.mxu0 0
        %414 = vmatprep.subr.bf16.mxu0 0
        %415 = vmatpush2.bf16.msra.mxu0 0
        %416 = vmatprep.mubr.bf16.mxu0 0
        %417 = vmatmul.mubr.bf16.gmra.mxu0 %v382
        %v418 = vpop.f32.mrf.mxu0
        %v419 = vadd.f32 %v358, %v418
        %v420 = vpop.f32.mrf.mxu0
        %v421 = vadd.f32 %v360, %v420
        %v422 = vpop.f32.mrf.mxu0
        %v423 = vadd.f32 %v362, %v422
        %v424 = vpop.f32.mrf.mxu0
        %v425 = vadd.f32 %v364, %v424
        %426 = vdwg.mxu0
        %v427 = vpack.c.bf16 %v423, %v419
        %v428 = vpack.c.bf16 %v425, %v421
        %v431 = vunpack.c.l.b16 %v427
        %v432 = vunpack.c.l.b16 %v428
        %v433 = vunpack.c.h.b16 %v427
        %v434 = vunpack.c.h.b16 %v428
        %v435 = vpack.c.b16 %v432, %v431
        %v436 = vpack.c.b16 %v434, %v433
        %439 = vst [vmem:[%s291] sm:$0xff] %v435
        %440 = vst [vmem:[%s291 + $0x8] sm:$0xff] %v436
        %s441 = sand.u32 %s117, 1
        %s442 = sand.u32 %s117, 1
        %s443 = smul.addr %s442, 16
        %s444 = scalar_lea.vmem [#allocation4], %s443
        // Predicated region
        $region113: #{forward.14} parent=103 // pred_check
          %p445 = pneg %p127
        $region114: #{forward.14} parent=103 // pred_check_branch
          %447 = sbr.rel (%p445) target = $region116
        $region115: #{forward.14} parent=103 // pred_region
          %s448 = smul.u32 2, %s15
          %s449 = smul.addr %s448, 4
          %s450 = scalar_lea.vmem %s4, %s449
          // Predicated region
          $region117: #{forward.14} parent=115 // pred_check
            _
          $region118: #{forward.14} parent=115 // pred_check_branch
            %452 = sbr.rel (0) target = $region120
          $region119: #{forward.14} parent=115 // pred_region
            // Predicated region
            $region121: #{forward.14} parent=119 // pred_check
              _
            $region122: #{forward.14} parent=119 // pred_check_branch
              %454 = sbr.rel (0) target = $region124
            $region123: #{forward.14} parent=119 // pred_region
              // Predicated region
              $region136: #{forward.14} parent=123 // pred_check
                _
              $region137: #{forward.14} parent=123 // pred_check_branch
                %472 = sbr.rel (0) target = $region139
              $region138: #{forward.14} parent=123 // pred_region
                loop: start=0, step=1, limit=1
                $region140: #{forward.14} parent=138 // loop_pre_header
                  _
                $region141: #{forward.14} parent=138 // loop_header
                  %s474 = sphi 0, %s478
                  %p475 = scmp.ge.s32.totalorder %s474, 1
                  %s479 = sphi %s444, %s444
                  %s480 = sphi %s450, %s450
                $region142: #{forward.14} parent=138 // loop_header_branch
                  %477 = sbr.rel (%p475) target = $region146
                $region143: #{forward.14} parent=138 // loop_body
                  %v481 = vld [vmem:[%s479] sm:$0xff]
                  %482 = vst [vmem:[%s480] sm:$0xff] %v481
                  %v483 = vld [vmem:[%s479 + $0x8] sm:$0xff]
                  %484 = vst [vmem:[%s480 + $0x10] sm:$0xff] %v483
                $region144: #{forward.14} parent=138 // loop_footer
                  %s478 = sadd.s32 1, %s474
                $region145: #{forward.14} parent=138 // loop_footer_branch
                  %473 = sbr.rel target = $region141
                $region146: #{forward.14} parent=138 // loop_exit
                  _
              $region139: #{forward.14} parent=123 // pred_fallthru
                _
              // Predicated region
              $region147: #{forward.14} parent=123 // pred_check
                _
              $region148: #{forward.14} parent=123 // pred_check_branch
                %486 = sbr.rel target = $region150
              $region149: #{forward.14} parent=123 // pred_region
                _
              $region150: #{forward.14} parent=123 // pred_fallthru
                _
            $region124: #{forward.14} parent=119 // pred_fallthru
              _
            // Predicated region
            $region125: #{forward.14} parent=119 // pred_check
              _
            $region126: #{forward.14} parent=119 // pred_check_branch
              %456 = sbr.rel target = $region128
            $region127: #{forward.14} parent=119 // pred_region
              %s458 = ssub.s32 256, 1
              loop: start=0, step=1, limit=1
              $region129: #{forward.14} parent=127 // loop_pre_header
                _
              $region130: #{forward.14} parent=127 // loop_header
                %s460 = sphi 0, %s464
                %p461 = scmp.ge.s32.totalorder %s460, 1
                %s465 = sphi %s444, %s444
                %s466 = sphi %s450, %s450
              $region131: #{forward.14} parent=127 // loop_header_branch
                %463 = sbr.rel (%p461) target = $region135
              $region132: #{forward.14} parent=127 // loop_body
                %v467 = vld [vmem:[%s465] sm:%s458]
                %468 = vst [vmem:[%s466] sm:%s458] %v467
                %v469 = vld [vmem:[%s465 + $0x8] sm:%s458]
                %470 = vst [vmem:[%s466 + $0x10] sm:%s458] %v469
              $region133: #{forward.14} parent=127 // loop_footer
                %s464 = sadd.s32 1, %s460
              $region134: #{forward.14} parent=127 // loop_footer_branch
                %459 = sbr.rel target = $region130
              $region135: #{forward.14} parent=127 // loop_exit
                _
            $region128: #{forward.14} parent=119 // pred_fallthru
              _
          $region120: #{forward.14} parent=115 // pred_fallthru
            _
          %487 = vnop
        $region116: #{forward.14} parent=103 // pred_fallthru
          _
      $region104: #{forward.14} parent=5 // pred_fallthru
        _
      %p488 = scmp.le.s32.totalorder 2, %s10
      // Predicated region
      $region151: #{forward.14} parent=5 // pred_check
        %p489 = pneg %p488
      $region152: #{forward.14} parent=5 // pred_check_branch
        %491 = sbr.rel (%p489) target = $region154
      $region153: #{forward.14} parent=5 // pred_region
        %s492 = ssub.s32 %s10, 2
        // Predicated region
        $region155: #{forward.14} parent=153 // pred_check
          %p493 = pneg %p133
        $region156: #{forward.14} parent=153 // pred_check_branch
          %495 = sbr.rel (%p493) target = $region158
        $region157: #{forward.14} parent=153 // pred_region
          %s496 = sand.u32 %s118, 1
          %s497 = sand.u32 %s118, 1
          %s498 = smul.addr %s497, 16
          %s499 = scalar_lea.vmem [#allocation4], %s498
        $region158: #{forward.14} parent=153 // pred_fallthru
          _
      $region154: #{forward.14} parent=5 // pred_fallthru
        _
    $region6: #{forward.14} parent=1 // loop_footer
      %s14 = sadd.s32 1, %s10
    $region7: #{forward.14} parent=1 // loop_footer_branch
      %9 = sbr.rel target = $region3
    $region8: #{forward.14} parent=1 // loop_exit
      _

// kernel: forward.15
$region0: #{forward.15}
  #allocation0 [shape = 'u32[]', space=smem, size = 0x4, offset = 0x4, fixed_abs, tag = 'smem constant byte address 0x4 - core index']
  #allocation1 [shape = 'u32[144,128]{1,0:T(1,128)}', space=vmem, size = 0x12000, scoped, tag = 'internal scratch']
  %s0 = inlined_call_operand.vmem [shape: bf16[8,144], index: 0, kind: input, shape index: {}]
  %s1 = inlined_call_operand.vmem [shape: bf16[144,512], index: 1, kind: input, shape index: {}]
  %s2 = inlined_call_operand.vmem [shape: f32[8,1], index: 2, kind: input, shape index: {}]
  %s3 = inlined_call_operand.vmem [shape: f32[3,512], index: 3, kind: output, shape index: {}]
  %s4 = sld [smem:[#allocation0]]
  $region83: #{forward.15} parent=0
    _
  %s6 = ssub.s32 1, %s4
  %s7 = scalar_select 0, %s6, %s4
  $region1: #{forward.15} parent=0
    #allocation2 [shape = 'u8[147456]{0}', space=vmem, size = 0x24000, scoped, tag = 'input window, operand 1']
    loop: start=0, step=1, limit=4
    $region2: #{forward.15} parent=1 // loop_pre_header
      _
    $region3: #{forward.15} parent=1 // loop_header
      %s9 = sphi 0, %s13
      %p10 = scmp.ge.s32.totalorder %s9, 4
      %s17 = sphi 0, %s17
      %s19 = sphi 0, %s17
      %s20 = sphi 0, %s19
      %s34 = sphi 0, %s20
      %s40 = sphi 0, %s42
      %s43 = sphi 0, %s40
      %s44 = sphi 0, %s43
      %s60 = sphi 0, %s44
      %s64 = sphi 0, %s64
      %s66 = sphi 0, %s64
      %s67 = sphi 0, %s66
      %s81 = sphi 0, %s67
      %s87 = sphi 0, %s89
      %s90 = sphi 0, %s87
      %s91 = sphi 0, %s90
      %s107 = sphi 0, %s91
    $region4: #{forward.15} parent=1 // loop_header_branch
      %12 = sbr.rel (%p10) target = $region8
    $region5: #{forward.15} parent=1 // loop_body
      %s14 = ssub.s32 %s9, 1
      %s15 = ssub.s32 %s9, 2
      %s16 = sadd.s32 %s9, 1
      %s18 = sadd.s32 %s17, 1
      %p21 = scmp.eq.s32.totalorder %s9, 1
      %p22 = scmp.ne.s32.totalorder %s17, %s19
      %p23 = scmp.eq.s32.totalorder %s9, 0
      %p24 = por %p22, %p23
      %p25 = scmp.ne.s32.totalorder %s17, %s19
      %p26 = scmp.eq.s32.totalorder %s14, 1
      %p27 = por %p25, %p26
      %p28 = scmp.ne.s32.totalorder %s19, %s20
      %p29 = scmp.eq.s32.totalorder %s14, 0
      %p30 = por %p28, %p29
      %p31 = scmp.ne.s32.totalorder %s19, %s20
      %p32 = scmp.eq.s32.totalorder %s15, 1
      %p33 = por %p31, %p32
      %p35 = scmp.ne.s32.totalorder %s20, %s34
      %p36 = scmp.eq.s32.totalorder %s15, 0
      %p37 = por %p35, %p36
      %s38 = ssub.s32 %s9, %s16
      %p39 = scmp.eq.s32.totalorder %s38, 0
      %s41 = sadd.s32 %s40, 1
      %s42 = scalar_select %p39, %s40, %s41
      %p45 = pneg %p39
      %p46 = scmp.eq.s32.totalorder %s9, 1
      %p47 = por %p45, %p46
      %p48 = scmp.ne.s32.totalorder %s40, %s43
      %p49 = scmp.eq.s32.totalorder %s9, 0
      %p50 = por %p48, %p49
      %p51 = scmp.ne.s32.totalorder %s40, %s43
      %p52 = scmp.eq.s32.totalorder %s14, 1
      %p53 = por %p51, %p52
      %p54 = scmp.ne.s32.totalorder %s43, %s44
      %p55 = scmp.eq.s32.totalorder %s14, 0
      %p56 = por %p54, %p55
      %p57 = scmp.ne.s32.totalorder %s43, %s44
      %p58 = scmp.eq.s32.totalorder %s15, 1
      %p59 = por %p57, %p58
      %p61 = scmp.ne.s32.totalorder %s44, %s60
      %p62 = scmp.eq.s32.totalorder %s15, 0
      %p63 = por %p61, %p62
      %s65 = sadd.s32 %s64, 1
      %p68 = scmp.eq.s32.totalorder %s9, 1
      %p69 = scmp.ne.s32.totalorder %s64, %s66
      %p70 = scmp.eq.s32.totalorder %s9, 0
      %p71 = por %p69, %p70
      %p72 = scmp.ne.s32.totalorder %s64, %s66
      %p73 = scmp.eq.s32.totalorder %s14, 1
      %p74 = por %p72, %p73
      %p75 = scmp.ne.s32.totalorder %s66, %s67
      %p76 = scmp.eq.s32.totalorder %s14, 0
      %p77 = por %p75, %p76
      %p78 = scmp.ne.s32.totalorder %s66, %s67
      %p79 = scmp.eq.s32.totalorder %s15, 1
      %p80 = por %p78, %p79
      %p82 = scmp.ne.s32.totalorder %s67, %s81
      %p83 = scmp.eq.s32.totalorder %s15, 0
      %p84 = por %p82, %p83
      %s85 = ssub.s32 %s9, %s16
      %p86 = scmp.eq.s32.totalorder %s85, 0
      %s88 = sadd.s32 %s87, 1
      %s89 = scalar_select %p86, %s87, %s88
      %p92 = pneg %p86
      %p93 = scmp.eq.s32.totalorder %s9, 1
      %p94 = por %p92, %p93
      %p95 = scmp.ne.s32.totalorder %s87, %s90
      %p96 = scmp.eq.s32.totalorder %s9, 0
      %p97 = por %p95, %p96
      %p98 = scmp.ne.s32.totalorder %s87, %s90
      %p99 = scmp.eq.s32.totalorder %s14, 1
      %p100 = por %p98, %p99
      %p101 = scmp.ne.s32.totalorder %s90, %s91
      %p102 = scmp.eq.s32.totalorder %s14, 0
      %p103 = por %p101, %p102
      %p104 = scmp.ne.s32.totalorder %s90, %s91
      %p105 = scmp.eq.s32.totalorder %s15, 1
      %p106 = por %p104, %p105
      %p108 = scmp.ne.s32.totalorder %s91, %s107
      %p109 = scmp.eq.s32.totalorder %s15, 0
      %p110 = por %p108, %p109
      %p111 = scmp.le.s32.totalorder 1, %s9
      %p112 = scmp.lt.s32.totalorder %s9, 3
      %p113 = pnand %p111, %p112
      %p114 = pneg %p113
      // Predicated region
      $region9: #{forward.15} parent=5 // pred_check
        _
      $region10: #{forward.15} parent=5 // pred_check_branch
        %116 = sbr.rel (%p113) target = $region12
      $region11: #{forward.15} parent=5 // pred_region
        %s117 = ssub.s32 %s9, 1
        // Predicated region
        $region13: #{forward.15} parent=11 // pred_check
          %p118 = pneg %p30
        $region14: #{forward.15} parent=11 // pred_check_branch
          %120 = sbr.rel (%p118) target = $region16
        $region15: #{forward.15} parent=11 // pred_region
          _
        $region16: #{forward.15} parent=11 // pred_fallthru
          _
        // Predicated region
        $region17: #{forward.15} parent=11 // pred_check
          %p121 = pneg %p77
        $region18: #{forward.15} parent=11 // pred_check_branch
          %123 = sbr.rel (%p121) target = $region20
        $region19: #{forward.15} parent=11 // pred_region
          _
        $region20: #{forward.15} parent=11 // pred_fallthru
          _
      $region12: #{forward.15} parent=5 // pred_fallthru
        _
      %p124 = scmp.lt.s32.totalorder %s9, 2
      // Predicated region
      $region21: #{forward.15} parent=5 // pred_check
        %p125 = pneg %p124
      $region22: #{forward.15} parent=5 // pred_check_branch
        %127 = sbr.rel (%p125) target = $region24
      $region23: #{forward.15} parent=5 // pred_region
        // Predicated region
        $region25: #{forward.15} parent=23 // pred_check
          %p128 = pneg %p50
        $region26: #{forward.15} parent=23 // pred_check_branch
          %130 = sbr.rel (%p128) target = $region28
        $region27: #{forward.15} parent=23 // pred_region
          %s131 = sand.u32 %s40, 1
          %s132 = sand.u32 %s40, 1
          %s133 = smul.addr %s132, 144
          %s134 = scalar_lea.vmem [#allocation2], %s133
          %s135 = smul.u32 2, %s9
          %s136 = smul.addr %s135, 4
          %s137 = scalar_lea.vmem %s1, %s136
          // Predicated region
          $region29: #{forward.15} parent=27 // pred_check
            _
          $region30: #{forward.15} parent=27 // pred_check_branch
            %139 = sbr.rel (0) target = $region32
          $region31: #{forward.15} parent=27 // pred_region
            // Predicated region
            $region33: #{forward.15} parent=31 // pred_check
              _
            $region34: #{forward.15} parent=31 // pred_check_branch
              %141 = sbr.rel (0) target = $region36
            $region35: #{forward.15} parent=31 // pred_region
              // Predicated region
              $region48: #{forward.15} parent=35 // pred_check
                _
              $region49: #{forward.15} parent=35 // pred_check_branch
                %191 = sbr.rel (0) target = $region51
              $region50: #{forward.15} parent=35 // pred_region
                loop: start=0, step=1, limit=1
                $region52: #{forward.15} parent=50 // loop_pre_header
                  _
                $region53: #{forward.15} parent=50 // loop_header
                  %s193 = sphi 0, %s197
                  %p194 = scmp.ge.s32.totalorder %s193, 1
                  %s198 = sphi %s137, %s137
                  %s199 = sphi %s134, %s134
                $region54: #{forward.15} parent=50 // loop_header_branch
                  %196 = sbr.rel (%p194) target = $region58
                $region55: #{forward.15} parent=50 // loop_body
                  %v200 = vld [vmem:[%s198] sm:$0xff]
                  %201 = vst [vmem:[%s199] sm:$0xff] %v200
                  %v202 = vld [vmem:[%s198 + $0x10] sm:$0xff]
                  %203 = vst [vmem:[%s199 + $0x8] sm:$0xff] %v202
                  %v204 = vld [vmem:[%s198 + $0x20] sm:$0xff]
                  %205 = vst [vmem:[%s199 + $0x10] sm:$0xff] %v204
                  %v206 = vld [vmem:[%s198 + $0x30] sm:$0xff]
                  %207 = vst [vmem:[%s199 + $0x18] sm:$0xff] %v206
                  %v208 = vld [vmem:[%s198 + $0x40] sm:$0xff]
                  %209 = vst [vmem:[%s199 + $0x20] sm:$0xff] %v208
                  %v210 = vld [vmem:[%s198 + $0x50] sm:$0xff]
                  %211 = vst [vmem:[%s199 + $0x28] sm:$0xff] %v210
                  %v212 = vld [vmem:[%s198 + $0x60] sm:$0xff]
                  %213 = vst [vmem:[%s199 + $0x30] sm:$0xff] %v212
                  %v214 = vld [vmem:[%s198 + $0x70] sm:$0xff]
                  %215 = vst [vmem:[%s199 + $0x38] sm:$0xff] %v214
                  %v216 = vld [vmem:[%s198 + $0x80] sm:$0xff]
                  %217 = vst [vmem:[%s199 + $0x40] sm:$0xff] %v216
                  %v218 = vld [vmem:[%s198 + $0x90] sm:$0xff]
                  %219 = vst [vmem:[%s199 + $0x48] sm:$0xff] %v218
                  %v220 = vld [vmem:[%s198 + $0xa0] sm:$0xff]
                  %221 = vst [vmem:[%s199 + $0x50] sm:$0xff] %v220
                  %v222 = vld [vmem:[%s198 + $0xb0] sm:$0xff]
                  %223 = vst [vmem:[%s199 + $0x58] sm:$0xff] %v222
                  %v224 = vld [vmem:[%s198 + $0xc0] sm:$0xff]
                  %225 = vst [vmem:[%s199 + $0x60] sm:$0xff] %v224
                  %v226 = vld [vmem:[%s198 + $0xd0] sm:$0xff]
                  %227 = vst [vmem:[%s199 + $0x68] sm:$0xff] %v226
                  %v228 = vld [vmem:[%s198 + $0xe0] sm:$0xff]
                  %229 = vst [vmem:[%s199 + $0x70] sm:$0xff] %v228
                  %v230 = vld [vmem:[%s198 + $0xf0] sm:$0xff]
                  %231 = vst [vmem:[%s199 + $0x78] sm:$0xff] %v230
                  %v232 = vld [vmem:[%s198 + $0x100] sm:$0xff]
                  %233 = vst [vmem:[%s199 + $0x80] sm:$0xff] %v232
                  %v234 = vld [vmem:[%s198 + $0x110] sm:$0xff]
                  %235 = vst [vmem:[%s199 + $0x88] sm:$0xff] %v234
                $region56: #{forward.15} parent=50 // loop_footer
                  %s197 = sadd.s32 1, %s193
                $region57: #{forward.15} parent=50 // loop_footer_branch
                  %192 = sbr.rel target = $region53
                $region58: #{forward.15} parent=50 // loop_exit
                  _
              $region51: #{forward.15} parent=35 // pred_fallthru
                _
              // Predicated region
              $region59: #{forward.15} parent=35 // pred_check
                _
              $region60: #{forward.15} parent=35 // pred_check_branch
                %237 = sbr.rel target = $region62
              $region61: #{forward.15} parent=35 // pred_region
                _
              $region62: #{forward.15} parent=35 // pred_fallthru
                _
            $region36: #{forward.15} parent=31 // pred_fallthru
              _
            // Predicated region
            $region37: #{forward.15} parent=31 // pred_check
              _
            $region38: #{forward.15} parent=31 // pred_check_branch
              %143 = sbr.rel target = $region40
            $region39: #{forward.15} parent=31 // pred_region
              %s145 = ssub.s32 256, 1
              loop: start=0, step=1, limit=1
              $region41: #{forward.15} parent=39 // loop_pre_header
                _
              $region42: #{forward.15} parent=39 // loop_header
                %s147 = sphi 0, %s151
                %p148 = scmp.ge.s32.totalorder %s147, 1
                %s152 = sphi %s137, %s137
                %s153 = sphi %s134, %s134
              $region43: #{forward.15} parent=39 // loop_header_branch
                %150 = sbr.rel (%p148) target = $region47
              $region44: #{forward.15} parent=39 // loop_body
                %v154 = vld [vmem:[%s152] sm:%s145]
                %155 = vst [vmem:[%s153] sm:%s145] %v154
                %v156 = vld [vmem:[%s152 + $0x10] sm:%s145]
                %157 = vst [vmem:[%s153 + $0x8] sm:%s145] %v156
                %v158 = vld [vmem:[%s152 + $0x20] sm:%s145]
                %159 = vst [vmem:[%s153 + $0x10] sm:%s145] %v158
                %v160 = vld [vmem:[%s152 + $0x30] sm:%s145]
                %161 = vst [vmem:[%s153 + $0x18] sm:%s145] %v160
                %v162 = vld [vmem:[%s152 + $0x40] sm:%s145]
                %163 = vst [vmem:[%s153 + $0x20] sm:%s145] %v162
                %v164 = vld [vmem:[%s152 + $0x50] sm:%s145]
                %165 = vst [vmem:[%s153 + $0x28] sm:%s145] %v164
                %v166 = vld [vmem:[%s152 + $0x60] sm:%s145]
                %167 = vst [vmem:[%s153 + $0x30] sm:%s145] %v166
                %v168 = vld [vmem:[%s152 + $0x70] sm:%s145]
                %169 = vst [vmem:[%s153 + $0x38] sm:%s145] %v168
                %v170 = vld [vmem:[%s152 + $0x80] sm:%s145]
                %171 = vst [vmem:[%s153 + $0x40] sm:%s145] %v170
                %v172 = vld [vmem:[%s152 + $0x90] sm:%s145]
                %173 = vst [vmem:[%s153 + $0x48] sm:%s145] %v172
                %v174 = vld [vmem:[%s152 + $0xa0] sm:%s145]
                %175 = vst [vmem:[%s153 + $0x50] sm:%s145] %v174
                %v176 = vld [vmem:[%s152 + $0xb0] sm:%s145]
                %177 = vst [vmem:[%s153 + $0x58] sm:%s145] %v176
                %v178 = vld [vmem:[%s152 + $0xc0] sm:%s145]
                %179 = vst [vmem:[%s153 + $0x60] sm:%s145] %v178
                %v180 = vld [vmem:[%s152 + $0xd0] sm:%s145]
                %181 = vst [vmem:[%s153 + $0x68] sm:%s145] %v180
                %v182 = vld [vmem:[%s152 + $0xe0] sm:%s145]
                %183 = vst [vmem:[%s153 + $0x70] sm:%s145] %v182
                %v184 = vld [vmem:[%s152 + $0xf0] sm:%s145]
                %185 = vst [vmem:[%s153 + $0x78] sm:%s145] %v184
                %v186 = vld [vmem:[%s152 + $0x100] sm:%s145]
                %187 = vst [vmem:[%s153 + $0x80] sm:%s145] %v186
                %v188 = vld [vmem:[%s152 + $0x110] sm:%s145]
                %189 = vst [vmem:[%s153 + $0x88] sm:%s145] %v188
              $region45: #{forward.15} parent=39 // loop_footer
                %s151 = sadd.s32 1, %s147
              $region46: #{forward.15} parent=39 // loop_footer_branch
                %146 = sbr.rel target = $region42
              $region47: #{forward.15} parent=39 // loop_exit
                _
            $region40: #{forward.15} parent=31 // pred_fallthru
              _
          $region32: #{forward.15} parent=27 // pred_fallthru
            _
          %238 = vnop
        $region28: #{forward.15} parent=23 // pred_fallthru
          _
      $region24: #{forward.15} parent=5 // pred_fallthru
        _
      %p239 = scmp.le.s32.totalorder 1, %s9
      %p240 = scmp.lt.s32.totalorder %s9, 3
      %p241 = pnand %p239, %p240
      %p242 = pneg %p241
      // Predicated region
      $region63: #{forward.15} parent=5 // pred_check
        _
      $region64: #{forward.15} parent=5 // pred_check_branch
        %244 = sbr.rel (%p241) target = $region66
      $region65: #{forward.15} parent=5 // pred_region
        %s245 = ssub.s32 %s9, 1
        %s246 = sand.u32 %s43, 1
        %s247 = sand.u32 %s43, 1
        %s248 = smul.addr %s247, 144
        %s249 = scalar_lea.vmem [#allocation2], %s248
        // Predicated region
        $region67: #{forward.15} parent=65 // pred_check
          %p250 = pneg %p56
        $region68: #{forward.15} parent=65 // pred_check_branch
          %252 = sbr.rel (%p250) target = $region70
        $region69: #{forward.15} parent=65 // pred_region
          _
        $region70: #{forward.15} parent=65 // pred_fallthru
          _
        %p253 = pneg %p30
        %p254 = pneg %p27
        %s255 = sand.u32 %s43, 1
        %s256 = sand.u32 %s43, 1
        %s257 = smul.addr %s256, 144
        %s258 = scalar_lea.vmem [#allocation2], %s257
        %p259 = pneg %p56
        %p260 = pneg %p53
        %p261 = pneg %p77
        %p262 = pneg %p74
        %p263 = pneg %p103
        %p264 = pneg %p100
        %s265 = smul.u32 2, %s14
        %p266 = scmp.lt.s32.totalorder %s265, 3
        %s267 = scalar_select %p266, %s265, 3
        %s268 = smul.addr %s267, 4
        %s269 = scalar_lea.vmem %s3, %s268
        %s270 = smul.u32 2, %s14
        %s271 = smul.u32 2, %s14
        %p272 = scmp.lt.s32.totalorder %s271, 3
        %s273 = scalar_select %p272, %s271, 3
        %s274 = smul.addr %s273, 4
        %s275 = scalar_lea.vmem %s3, %s274
        %s276 = smul.u32 2, %s14
        %v278 = vld [vmem:[%s0] sm:$0xff]
        %v279 = vld [vmem:[%s249] sm:$0xff]
        %v280 = vld [vmem:[%s249 + $0x8] sm:$0xff]
        %v281 = vld [vmem:[%s249 + $0x10] sm:$0xff]
        %v282 = vld [vmem:[%s249 + $0x18] sm:$0xff]
        %v283 = vld [vmem:[%s249 + $0x20] sm:$0xff]
        %v284 = vld [vmem:[%s249 + $0x28] sm:$0xff]
        %v285 = vld [vmem:[%s249 + $0x30] sm:$0xff]
        %v286 = vld [vmem:[%s249 + $0x38] sm:$0xff]
        %v287 = vld [vmem:[%s249 + $0x40] sm:$0xff]
        %v288 = vld [vmem:[%s249 + $0x48] sm:$0xff]
        %v289 = vld [vmem:[%s249 + $0x50] sm:$0xff]
        %v290 = vld [vmem:[%s249 + $0x58] sm:$0xff]
        %v291 = vld [vmem:[%s249 + $0x60] sm:$0xff]
        %v292 = vld [vmem:[%s249 + $0x68] sm:$0xff]
        %v293 = vld [vmem:[%s249 + $0x70] sm:$0xff]
        %v294 = vld [vmem:[%s249 + $0x78] sm:$0xff]
        %v295 = vld [vmem:[%s249 + $0x80] sm:$0xff]
        %v296 = vld [vmem:[%s249 + $0x88] sm:$0xff]
        %v297 = vld [vmem:[%s2] sm:$0xff]
        %299 = vset.pattern.permute.xlu0 0
        %300 = vperm.xlu0 %299, %v297
        %v301 = vpop.permute.xlu0 %300
        %v304 = vunpack.c.l.b16 %v278
        %v305 = vunpack.c.h.b16 %v278
        %v306 = vpack.c.b16 %v304, %v304
        %v307 = vpack.c.b16 %v305, %v305
        %v327 = vunpack.c.l.b16 %v279
        %v328 = vunpack.c.h.b16 %v279
        %v329 = vunpack.c.l.b16 %v280
        %v330 = vunpack.c.h.b16 %v280
        %v331 = vunpack.c.l.b16 %v281
        %v332 = vunpack.c.h.b16 %v281
        %v333 = vunpack.c.l.b16 %v282
        %v334 = vunpack.c.h.b16 %v282
        %v335 = vunpack.c.l.b16 %v283
        %v336 = vunpack.c.h.b16 %v283
        %v337 = vunpack.c.l.b16 %v284
        %v338 = vunpack.c.h.b16 %v284
        %v339 = vunpack.c.l.b16 %v285
        %v340 = vunpack.c.h.b16 %v285
        %v341 = vunpack.c.l.b16 %v286
        %v342 = vunpack.c.h.b16 %v286
        %v343 = vunpack.c.l.b16 %v287
        %v344 = vunpack.c.h.b16 %v287
        %v345 = vunpack.c.l.b16 %v288
        %v346 = vunpack.c.h.b16 %v288
        %v347 = vunpack.c.l.b16 %v289
        %v348 = vunpack.c.h.b16 %v289
        %v349 = vunpack.c.l.b16 %v290
        %v350 = vunpack.c.h.b16 %v290
        %v351 = vunpack.c.l.b16 %v291
        %v352 = vunpack.c.h.b16 %v291
        %v353 = vunpack.c.l.b16 %v292
        %v354 = vunpack.c.h.b16 %v292
        %v355 = vunpack.c.l.b16 %v293
        %v356 = vunpack.c.h.b16 %v293
        %v357 = vunpack.c.l.b16 %v294
        %v358 = vunpack.c.h.b16 %v294
        %v359 = vunpack.c.l.b16 %v295
        %v360 = vunpack.c.h.b16 %v295
        %v361 = vunpack.c.l.b16 %v296
        %v362 = vunpack.c.h.b16 %v296
        %v363 = vpack.c.b16 %v329, %v327
        %v364 = vpack.c.b16 %v330, %v328
        %v365 = vpack.c.b16 %v333, %v331
        %v366 = vpack.c.b16 %v334, %v332
        %v367 = vpack.c.b16 %v337, %v335
        %v368 = vpack.c.b16 %v338, %v336
        %v369 = vpack.c.b16 %v341, %v339
        %v370 = vpack.c.b16 %v342, %v340
        %v371 = vpack.c.b16 %v345, %v343
        %v372 = vpack.c.b16 %v346, %v344
        %v373 = vpack.c.b16 %v349, %v347
        %v374 = vpack.c.b16 %v350, %v348
        %v375 = vpack.c.b16 %v353, %v351
        %v376 = vpack.c.b16 %v354, %v352
        %v377 = vpack.c.b16 %v357, %v355
        %v378 = vpack.c.b16 %v358, %v356
        %v379 = vpack.c.b16 %v361, %v359
        %v380 = vpack.c.b16 %v362, %v360
        %vm399 = vcmask 130048
        %v401 = vsel %vm399, %v307, 0
        %403 = vmatprep.subr.bf16.mxu0 %v378
        %404 = vmatpush1.bf16.msra.mxu0 %v377
        %405 = vmatprep.subr.bf16.mxu0 %v376
        %406 = vmatpush1.bf16.msra.mxu0 %v375
        %407 = vmatprep.subr.bf16.mxu0 %v374
        %408 = vmatpush1.bf16.msra.mxu0 %v373
        %409 = vmatprep.subr.bf16.mxu0 %v372
        %410 = vmatpush1.bf16.msra.mxu0 %v371
        %411 = vmatprep.subr.bf16.mxu0 %v370
        %412 = vmatpush1.bf16.msra.mxu0 %v369
        %413 = vmatprep.subr.bf16.mxu0 %v368
        %414 = vmatpush1.bf16.msra.mxu0 %v367
        %415 = vmatprep.subr.bf16.mxu0 %v366
        %416 = vmatpush1.bf16.msra.mxu0 %v365
        %417 = vmatprep.subr.bf16.mxu0 %v364
        %418 = vmatpush1.bf16.msra.mxu0 %v363
        %419 = vmatprep.subr.bf16.mxu0 0
        %420 = vmatpush2.bf16.msra.mxu0 0
        %421 = vmatprep.subr.bf16.mxu0 0
        %422 = vmatpush2.bf16.msra.mxu0 0
        %423 = vmatprep.subr.bf16.mxu0 0
        %424 = vmatpush2.bf16.msra.mxu0 0
        %425 = vmatprep.subr.bf16.mxu0 0
        %426 = vmatpush2.bf16.msra.mxu0 0
        %427 = vmatprep.subr.bf16.mxu0 0
        %428 = vmatpush2.bf16.msra.mxu0 0
        %429 = vmatprep.subr.bf16.mxu0 0
        %430 = vmatpush2.bf16.msra.mxu0 0
        %431 = vmatprep.subr.bf16.mxu0 0
        %432 = vmatpush2.bf16.msra.mxu0 0
        %433 = vmatprep.subr.bf16.mxu0 %v380
        %434 = vmatpush2.bf16.msra.mxu0 %v379
        %435 = vmatprep.mubr.bf16.mxu0 %v401
        %436 = vmatmul.mubr.bf16.gmra.mxu0 %v306
        %v437 = vpop.f32.mrf.mxu0
        %v438 = vadd.f32 %v301, %v437
        %v439 = vpop.f32.mrf.mxu0
        %v440 = vadd.f32 %v301, %v439
        %v441 = vpop.f32.mrf.mxu0
        %v442 = vpop.f32.mrf.mxu0
        %443 = vdwg.mxu0
        %v446 = vrot.slane %v438, 5
        %v447 = vrot.slane %v440, 5
        %v450 = vmul.f32 %v438, %v446
        %v451 = vmul.f32 %v440, %v447
        %v452 = vrot.slane %v438, 3
        %v453 = vrot.slane %v440, 3
        %v456 = vmul.f32 %v438, %v452
        %v457 = vmul.f32 %v440, %v453
        %v460 = vrot.slane %v456, 1
        %v461 = vrot.slane %v457, 1
        %v464 = vadd.f32 %v450, %v460
        %v465 = vadd.f32 %v451, %v461
        %v468 = vrot.slane %v450, 2
        %v469 = vrot.slane %v451, 2
        %v472 = vadd.f32 %v464, %v468
        %v473 = vadd.f32 %v465, %v469
        %v474 = vrot.slane %v456, 3
        %v475 = vrot.slane %v457, 3
        %v478 = vsub.f32 %v472, %v474
        %v479 = vsub.f32 %v473, %v475
        %v482 = vcombine.low %v478, %v479
        %v484 = vunpack.c.l.s4 1966171168
        %v485 = vunpack.c.0.s8 %v484
        %v486 = vlaneseq
        %v487 = vshrl.u32 %v486, 7
        %v488 = vsub.s32 %v485, %v487
        %v489 = vrot.slane %v482, %v488
        %v491 = vunpack.c.l.s4 1966171168
        %v492 = vunpack.c.0.s8 %v491
        %v493 = vlaneseq
        %v494 = vshrl.u32 %v493, 7
        %v495 = vsub.s32 %v492, %v494
        %v496 = vrot.slane %v489, %v495
        %v498 = vlaneseq
        %vm499 = vcmp.ge.s32.totalorder %v498, 0
        %vm500 = vcmp.lt.s32.totalorder %v498, 256
        %vm501 = vmand %vm499, %vm500
        %502 = vst.msk [vmem:[%s275] ss:$4 sm:$0x3] %vm501, %v496
        %v503 = vrot.slane %v438, 6
        %v504 = vrot.slane %v440, 6
        %v507 = vmul.f32 %v438, %v503
        %v508 = vmul.f32 %v440, %v504
        %v511 = vrot.slane %v507, 1
        %v512 = vrot.slane %v508, 1
        %v515 = vsub.f32 %v507, %v511
        %v516 = vsub.f32 %v508, %v512
        %v517 = vrot.slane %v438, 2
        %v518 = vrot.slane %v440, 2
        %v521 = vmul.f32 %v438, %v517
        %v522 = vmul.f32 %v440, %v518
        %v525 = vrot.slane %v521, 2
        %v526 = vrot.slane %v522, 2
        %v529 = vadd.f32 %v515, %v525
        %v530 = vadd.f32 %v516, %v526
        %v531 = vrot.slane %v521, 3
        %v532 = vrot.slane %v522, 3
        %v535 = vadd.f32 %v529, %v531
        %v536 = vadd.f32 %v530, %v532
        %v539 = vcombine.low %v535, %v536
        %v541 = vunpack.c.l.s4 1966171168
        %v542 = vunpack.c.0.s8 %v541
        %v543 = vlaneseq
        %v544 = vshrl.u32 %v543, 7
        %v545 = vsub.s32 %v542, %v544
        %v546 = vrot.slane %v539, %v545
        %v548 = vunpack.c.l.s4 1966171168
        %v549 = vunpack.c.0.s8 %v548
        %v550 = vlaneseq
        %v551 = vshrl.u32 %v550, 7
        %v552 = vsub.s32 %v549, %v551
        %v553 = vrot.slane %v546, %v552
        %s555 = scalar_lea.vmem %s275, 1
        %556 = vst.msk [vmem:[%s555] ss:$4 sm:$0x3] %vm501, %v553
        %v557 = vrot.slane %v438, 7
        %v558 = vrot.slane %v440, 7
        %v561 = vmul.f32 %v438, %v557
        %v562 = vmul.f32 %v440, %v558
        %v563 = vrot.slane %v450, 1
        %v564 = vrot.slane %v451, 1
        %v567 = vadd.f32 %v561, %v563
        %v568 = vadd.f32 %v562, %v564
        %v569 = vrot.slane %v456, 2
        %v570 = vrot.slane %v457, 2
        %v573 = vsub.f32 %v567, %v569
        %v574 = vsub.f32 %v568, %v570
        %v575 = vrot.slane %v438, 1
        %v576 = vrot.slane %v440, 1
        %v579 = vmul.f32 %v438, %v575
        %v580 = vmul.f32 %v440, %v576
        %v583 = vrot.slane %v579, 3
        %v584 = vrot.slane %v580, 3
        %v587 = vadd.f32 %v573, %v583
        %v588 = vadd.f32 %v574, %v584
        %v591 = vcombine.low %v587, %v588
        %v593 = vunpack.c.l.s4 1966171168
        %v594 = vunpack.c.0.s8 %v593
        %v595 = vlaneseq
        %v596 = vshrl.u32 %v595, 7
        %v597 = vsub.s32 %v594, %v596
        %v598 = vrot.slane %v591, %v597
        %v600 = vunpack.c.l.s4 1966171168
        %v601 = vunpack.c.0.s8 %v600
        %v602 = vlaneseq
        %v603 = vshrl.u32 %v602, 7
        %v604 = vsub.s32 %v601, %v603
        %v605 = vrot.slane %v598, %v604
        %s607 = scalar_lea.vmem %s275, 2
        %608 = vst.msk [vmem:[%s607] ss:$4 sm:$0x3] %vm501, %v605
        %s609 = smul.u32 2, %s14
        %p610 = scmp.lt.s32.totalorder %s609, 3
        %s611 = scalar_select %p610, %s609, 3
        %s612 = smul.addr %s611, 4
        %s613 = scalar_lea.vmem %s3, %s612
        // Predicated region
        $region71: #{forward.15} parent=65 // pred_check
          %p614 = pneg %p100
        $region72: #{forward.15} parent=65 // pred_check_branch
          %616 = sbr.rel (%p614) target = $region74
        $region73: #{forward.15} parent=65 // pred_region
          %s617 = smul.u32 2, %s14
        $region74: #{forward.15} parent=65 // pred_fallthru
          _
      $region66: #{forward.15} parent=5 // pred_fallthru
        _
      %p618 = scmp.le.s32.totalorder 2, %s9
      // Predicated region
      $region75: #{forward.15} parent=5 // pred_check
        %p619 = pneg %p618
      $region76: #{forward.15} parent=5 // pred_check_branch
        %621 = sbr.rel (%p619) target = $region78
      $region77: #{forward.15} parent=5 // pred_region
        %s622 = ssub.s32 %s9, 2
        // Predicated region
        $region79: #{forward.15} parent=77 // pred_check
          %p623 = pneg %p106
        $region80: #{forward.15} parent=77 // pred_check_branch
          %625 = sbr.rel (%p623) target = $region82
        $region81: #{forward.15} parent=77 // pred_region
          %s626 = smul.u32 2, %s15
          %p627 = scmp.lt.s32.totalorder %s626, 3
          %s628 = scalar_select %p627, %s626, 3
          %s629 = smul.addr %s628, 4
          %s630 = scalar_lea.vmem %s3, %s629
        $region82: #{forward.15} parent=77 // pred_fallthru
          _
      $region78: #{forward.15} parent=5 // pred_fallthru
        _
    $region6: #{forward.15} parent=1 // loop_footer
      %s13 = sadd.s32 1, %s9
    $region7: #{forward.15} parent=1 // loop_footer_branch
      %8 = sbr.rel target = $region3
    $region8: #{forward.15} parent=1 // loop_exit
      _

</llo_original>
